<compile_context>
chip_gen: v7x
topology: tpu7x:2x2x1
jax: 0.10.0
libtpu: 0.0.40
codegen_flags: <defaults>
</compile_context>

<pallas_src>
import math

import jax
import jax.numpy as jnp
from jax.experimental import pallas as pl
from jax.experimental.pallas import tpu as pltpu

HIDDEN_SIZE = 768          # hardcoded in the PyTorch module
LN_EPS = 1e-12
INV_SQRT2 = 1.0 / math.sqrt(2.0)


def _head_transform_kernel(x_ref, w_ref, b_ref, gamma_ref, beta_ref, o_ref):
    w = w_ref[...]
    # Cast activations to the weight dtype inside the kernel (the VPU cast hides under the
    # DMA / MXU time); this is a no-op on the f32 path.
    x = x_ref[...].astype(w.dtype)

    # dense: [tm, D_in] @ [D_in, D_out] on the MXU, f32 accumulation
    h = jnp.dot(x, w, preferred_element_type=jnp.float32)
    h = h + b_ref[...]                                     # [1, D_out] broadcasts over rows

    # exact (erf-based) GELU, matching the PyTorch reference.
    # TODO(synk): a bf16 GELU (v6e/v7x) or tanh-GELU (on the EUP) would shorten the
    # VALU-bound epilogue, but both perturb exact-erf parity / v5e behaviour, so the f32
    # erf form is kept.
    h = h * 0.5 * (1.0 + jax.lax.erf(h * INV_SQRT2))

    # LayerNorm over the hidden axis (f32, eps=1e-12); rsqrt runs on the EUP slot.
    mean = jnp.mean(h, axis=-1, keepdims=True)
    hc = h - mean
    var = jnp.mean(hc * hc, axis=-1, keepdims=True)
    h = hc * jax.lax.rsqrt(var + LN_EPS)
    h = h * gamma_ref[...] + beta_ref[...]                 # [1, D_out] affine

    o_ref[...] = h.astype(o_ref.dtype)


def _round_up(x, m):
    return (x + m - 1) // m * m


def bert_prediction_head_transform(x, w, b, gamma, beta, *, tm=1024,
                                   use_bf16_matmul=True, out_dtype=None,
                                   vmem_limit_bytes=None):
    """x: [..., D_in]; w: [D_in, D_out]; b/gamma/beta: [D_out]. Returns [..., D_out]."""
    orig_shape = x.shape
    d_in = orig_shape[-1]
    d_out = w.shape[1]
    out_dtype = x.dtype if out_dtype is None else out_dtype

    x2 = x.reshape(-1, d_in)
    n_rows = x2.shape[0]

    # Row tile: multiple of 8 (sublane), clamped to the work size. Keep >= 2 grid steps
    # whenever there is more than one 8-row tile so the "parallel" grid axis can be sharded
    # across both TensorCores on v7x.
    max_tile_rows = _round_up(n_rows, 8)
    if n_rows > 8:
        max_tile_rows = min(max_tile_rows, _round_up(pl.cdiv(n_rows, 2), 8))
    tm_eff = max(8, min(_round_up(tm, 8), max_tile_rows))
    grid = pl.cdiv(n_rows, tm_eff)

    # bf16 MXU operands by default (f32 accumulation). Only the small, resident weight is
    # cast in the wrapper; x streams in its original dtype and is cast in-kernel.
    w_in = w.astype(jnp.bfloat16) if use_bf16_matmul else w
    # bias / LN params kept f32 so the whole epilogue runs in f32 (safe on v5e too).
    b2 = b.reshape(1, d_out).astype(jnp.float32)
    g2 = gamma.reshape(1, d_out).astype(jnp.float32)
    be2 = beta.reshape(1, d_out).astype(jnp.float32)

    if vmem_limit_bytes is None:
        x_tile = tm_eff * d_in * x2.dtype.itemsize
        o_tile = tm_eff * d_out * jnp.dtype(out_dtype).itemsize
        f32_tile = tm_eff * d_out * 4
        w_bytes = d_in * d_out * w_in.dtype.itemsize
        # double-buffered x/out tiles + resident params + headroom for the f32 epilogue
        # temporaries the LN reductions force the compiler to materialize; capped to stay
        # inside v7x's 64 MiB physical VMEM.
        vmem_limit_bytes = min(
            2 * x_tile + 2 * o_tile + 2 * w_bytes + 4 * f32_tile + (4 << 20),
            56 << 20)

    flops = 2 * n_rows * d_in * d_out + 10 * n_rows * d_out
    transcendentals = n_rows * d_out + n_rows                      # erf + rsqrt
    bytes_accessed = (n_rows * d_in * x2.dtype.itemsize
                      + d_in * d_out * w_in.dtype.itemsize
                      + 3 * d_out * 4
                      + n_rows * d_out * jnp.dtype(out_dtype).itemsize)

    def _call(single_buffer_resident):
        resident_mode = {}
        if single_buffer_resident:
            # constant index_map -> fetched once, never re-fetched; single-buffering reclaims
            # the second copy of the weight/params with zero cost.
            resident_mode = dict(pipeline_mode=pl.Buffered(1))
        in_specs = [
            pl.BlockSpec((tm_eff, d_in), lambda i: (i, 0)),                      # x row tile
            pl.BlockSpec((d_in, d_out), lambda i: (0, 0), **resident_mode),      # weight
            pl.BlockSpec((1, d_out), lambda i: (0, 0), **resident_mode),         # bias
            pl.BlockSpec((1, d_out), lambda i: (0, 0), **resident_mode),         # gamma
            pl.BlockSpec((1, d_out), lambda i: (0, 0), **resident_mode),         # beta
        ]
        return pl.pallas_call(
            _head_transform_kernel,
            out_shape=jax.ShapeDtypeStruct((n_rows, d_out), out_dtype),
            grid_spec=pltpu.PrefetchScalarGridSpec(
                num_scalar_prefetch=0,
                grid=(grid,),
                in_specs=in_specs,
                out_specs=pl.BlockSpec((tm_eff, d_out), lambda i: (i, 0)),
            ),
            compiler_params=pltpu.CompilerParams(
                dimension_semantics=("parallel",),          # rows shard across TCs (megacore)
                vmem_limit_bytes=int(vmem_limit_bytes)),
            cost_estimate=pl.CostEstimate(flops=flops,
                                          transcendentals=transcendentals,
                                          bytes_accessed=bytes_accessed),
        )(x2, w_in, b2, g2, be2)

    try:
        out = _call(True)
    except Exception:
        # Fallback for jax builds where pipeline_mode=pl.Buffered(1) is not accepted on a
        # top-level pallas_call BlockSpec; costs only ~1-2 MiB of extra VMEM.
        out = _call(False)

    return out.reshape(orig_shape[:-1] + (d_out,))


def _reference(x, w, b, gamma, beta):
    h = jnp.dot(x, w, precision=jax.lax.Precision.HIGHEST) + b
    h = h * 0.5 * (1.0 + jax.lax.erf(h * INV_SQRT2))
    mu = h.mean(-1, keepdims=True)
    var = ((h - mu) ** 2).mean(-1, keepdims=True)
    return (h - mu) / jnp.sqrt(var + LN_EPS) * gamma + beta


if __name__ == "__main__":
    key = jax.random.PRNGKey(0)
    k_x, k_w, k_b, k_g, k_be, k_x2 = jax.random.split(key, 6)

    batch, seq = 2, 8
    input_size = HIDDEN_SIZE    # module default: input_size = hidden_size = 768

    x = jax.random.normal(k_x, (batch, seq, input_size), dtype=jnp.float32)
    w = jax.random.normal(k_w, (input_size, HIDDEN_SIZE), dtype=jnp.float32) * 0.02
    b = jax.random.normal(k_b, (HIDDEN_SIZE,), dtype=jnp.float32) * 0.02
    gamma = 1.0 + 0.01 * jax.random.normal(k_g, (HIDDEN_SIZE,), dtype=jnp.float32)
    beta = 0.01 * jax.random.normal(k_be, (HIDDEN_SIZE,), dtype=jnp.float32)

    ref = _reference(x, w, b, gamma, beta)

    # 1) default path: bf16 MXU operands, f32 accumulation + f32 epilogue (loose tolerance)
    out = bert_prediction_head_transform(x, w, b, gamma, beta)
    jax.block_until_ready(out)
    assert out.shape == ref.shape
    assert jnp.allclose(out, ref, atol=5e-2, rtol=5e-2), "bf16-matmul path mismatch vs reference"

    # 2) full-f32 path -> tight tolerance
    out_f32 = bert_prediction_head_transform(x, w, b, gamma, beta, use_bf16_matmul=False)
    jax.block_until_ready(out_f32)
    assert jnp.allclose(out_f32, ref, atol=1e-4, rtol=1e-4), "f32 path mismatch vs reference"

    # 3) non-divisible row count (3*5 = 15 rows) exercises the partial boundary block
    #    (cdiv grid, no jnp.pad copy)
    x_odd = jax.random.normal(k_x2, (3, 5, input_size), dtype=jnp.float32)
    out_odd = bert_prediction_head_transform(x_odd, w, b, gamma, beta, use_bf16_matmul=False)
    jax.block_until_ready(out_odd)
    ref_odd = _reference(x_odd, w, b, gamma, beta)
    assert jnp.allclose(out_odd, ref_odd, atol=1e-4, rtol=1e-4), "partial-block path mismatch"

    print("KERNEL_OK")
</pallas_src>

<mosaic_0001>
module attributes {stable_mosaic.version = 11 : i64} {
  func.func @_head_transform_kernel(%arg0: i32, %arg1: memref<8x768xf32, #tpu.memory_space<vmem>>, %arg2: memref<768x768xbf16, #tpu.memory_space<vmem>>, %arg3: memref<1x768xf32, #tpu.memory_space<vmem>>, %arg4: memref<1x768xf32, #tpu.memory_space<vmem>>, %arg5: memref<1x768xf32, #tpu.memory_space<vmem>>, %arg6: memref<8x768xf32, #tpu.memory_space<vmem>>) attributes {dimension_semantics = [#tpu.dimension_semantics<parallel>], iteration_bounds = array<i64: 2>, scalar_prefetch = 0 : i64, scratch_operands = 0 : i64, tpu.core_type = #tpu.core_type<tc>, window_params = [{transform_indices = @transform_0, window_bounds = array<i64: 8, 768>}, {pipeline_mode = #tpu.pipeline_mode<synchronous>, transform_indices = @transform_1, window_bounds = array<i64: 768, 768>}, {pipeline_mode = #tpu.pipeline_mode<synchronous>, transform_indices = @transform_2, window_bounds = array<i64: 1, 768>}, {pipeline_mode = #tpu.pipeline_mode<synchronous>, transform_indices = @transform_3, window_bounds = array<i64: 1, 768>}, {pipeline_mode = #tpu.pipeline_mode<synchronous>, transform_indices = @transform_4, window_bounds = array<i64: 1, 768>}, {transform_indices = @transform_5, window_bounds = array<i64: 8, 768>}]} {
    %c0 = arith.constant 0 : index
    %c0_0 = arith.constant 0 : index
    %0 = vector.load %arg2[%c0, %c0_0] : memref<768x768xbf16, #tpu.memory_space<vmem>>, vector<768x768xbf16>
    %c0_1 = arith.constant 0 : index
    %c0_2 = arith.constant 0 : index
    %1 = vector.load %arg1[%c0_1, %c0_2] : memref<8x768xf32, #tpu.memory_space<vmem>>, vector<8x768xf32>
    %2 = arith.truncf %1 : vector<8x768xf32> to vector<8x768xbf16>
    %cst = arith.constant dense<0.000000e+00> : vector<8x768xf32>
    %3 = tpu.matmul %2, %0, %cst {dimension_numbers = #tpu.dot_dimension_numbers<[1], [0], [0], [1], [0, 0, 1, 1], [], []>} : vector<8x768xbf16>, vector<768x768xbf16>, vector<8x768xf32> -> vector<8x768xf32>
    %c0_3 = arith.constant 0 : index
    %c0_4 = arith.constant 0 : index
    %4 = vector.load %arg3[%c0_3, %c0_4] : memref<1x768xf32, #tpu.memory_space<vmem>>, vector<1x768xf32>
    %5 = vector.broadcast %4 : vector<1x768xf32> to vector<8x768xf32>
    %6 = arith.addf %3, %5 : vector<8x768xf32>
    %cst_5 = arith.constant 5.000000e-01 : f32
    %7 = vector.broadcast %cst_5 : f32 to vector<8x768xf32>
    %8 = arith.mulf %6, %7 : vector<8x768xf32>
    %cst_6 = arith.constant 0.707106769 : f32
    %9 = vector.broadcast %cst_6 : f32 to vector<8x768xf32>
    %10 = arith.mulf %6, %9 : vector<8x768xf32>
    %11 = math.erf %10 : vector<8x768xf32>
    %cst_7 = arith.constant 1.000000e+00 : f32
    %12 = vector.broadcast %cst_7 : f32 to vector<8x768xf32>
    %13 = arith.addf %12, %11 : vector<8x768xf32>
    %14 = arith.mulf %8, %13 : vector<8x768xf32>
    %cst_8 = arith.constant dense<0.000000e+00> : vector<8xf32>
    %15 = vector.multi_reduction <add>, %14, %cst_8 [1] : vector<8x768xf32> to vector<8xf32>
    %16 = vector.shape_cast %15 : vector<8xf32> to vector<8x1xf32>
    %cst_9 = arith.constant 7.680000e+02 : f32
    %17 = vector.broadcast %cst_9 : f32 to vector<8x1xf32>
    %18 = arith.divf %16, %17 : vector<8x1xf32>
    %19 = vector.broadcast %18 : vector<8x1xf32> to vector<8x768xf32>
    %20 = arith.subf %14, %19 : vector<8x768xf32>
    %21 = arith.mulf %20, %20 : vector<8x768xf32>
    %cst_10 = arith.constant dense<0.000000e+00> : vector<8xf32>
    %22 = vector.multi_reduction <add>, %21, %cst_10 [1] : vector<8x768xf32> to vector<8xf32>
    %23 = vector.shape_cast %22 : vector<8xf32> to vector<8x1xf32>
    %cst_11 = arith.constant 7.680000e+02 : f32
    %24 = vector.broadcast %cst_11 : f32 to vector<8x1xf32>
    %25 = arith.divf %23, %24 : vector<8x1xf32>
    %cst_12 = arith.constant 9.99999996E-13 : f32
    %26 = vector.broadcast %cst_12 : f32 to vector<8x1xf32>
    %27 = arith.addf %25, %26 : vector<8x1xf32>
    %28 = math.rsqrt %27 : vector<8x1xf32>
    %29 = vector.broadcast %28 : vector<8x1xf32> to vector<8x768xf32>
    %30 = arith.mulf %20, %29 : vector<8x768xf32>
    %c0_13 = arith.constant 0 : index
    %c0_14 = arith.constant 0 : index
    %31 = vector.load %arg4[%c0_13, %c0_14] : memref<1x768xf32, #tpu.memory_space<vmem>>, vector<1x768xf32>
    %32 = vector.broadcast %31 : vector<1x768xf32> to vector<8x768xf32>
    %33 = arith.mulf %30, %32 : vector<8x768xf32>
    %c0_15 = arith.constant 0 : index
    %c0_16 = arith.constant 0 : index
    %34 = vector.load %arg5[%c0_15, %c0_16] : memref<1x768xf32, #tpu.memory_space<vmem>>, vector<1x768xf32>
    %35 = vector.broadcast %34 : vector<1x768xf32> to vector<8x768xf32>
    %36 = arith.addf %33, %35 : vector<8x768xf32>
    %c0_17 = arith.constant 0 : index
    %c0_18 = arith.constant 0 : index
    %37 = vector.load %arg6[%c0_17, %c0_18] : memref<8x768xf32, #tpu.memory_space<vmem>>, vector<8x768xf32>
    tpu.vector_store %arg6[%c0_17, %c0_18], %36 {strides = array<i32>} : memref<8x768xf32, #tpu.memory_space<vmem>>, vector<8x768xf32>,
    return
  }
  func.func @transform_0(%arg0: i32) -> (i32, i32) {
    %c0_i32 = arith.constant 0 : i32
    %c0_i32_0 = arith.constant 0 : i32
    return %arg0, %c0_i32 : i32, i32
  }
  func.func @transform_1(%arg0: i32) -> (i32, i32) {
    %c0_i32 = arith.constant 0 : i32
    %c0_i32_0 = arith.constant 0 : i32
    %c0_i32_1 = arith.constant 0 : i32
    return %c0_i32, %c0_i32_0 : i32, i32
  }
  func.func @transform_2(%arg0: i32) -> (i32, i32) {
    %c0_i32 = arith.constant 0 : i32
    %c0_i32_0 = arith.constant 0 : i32
    %c0_i32_1 = arith.constant 0 : i32
    return %c0_i32, %c0_i32_0 : i32, i32
  }
  func.func @transform_3(%arg0: i32) -> (i32, i32) {
    %c0_i32 = arith.constant 0 : i32
    %c0_i32_0 = arith.constant 0 : i32
    %c0_i32_1 = arith.constant 0 : i32
    return %c0_i32, %c0_i32_0 : i32, i32
  }
  func.func @transform_4(%arg0: i32) -> (i32, i32) {
    %c0_i32 = arith.constant 0 : i32
    %c0_i32_0 = arith.constant 0 : i32
    %c0_i32_1 = arith.constant 0 : i32
    return %c0_i32, %c0_i32_0 : i32, i32
  }
  func.func @transform_5(%arg0: i32) -> (i32, i32) {
    %c0_i32 = arith.constant 0 : i32
    %c0_i32_0 = arith.constant 0 : i32
    return %arg0, %c0_i32 : i32, i32
  }
}

module attributes {stable_mosaic.version = 11 : i64} {
  func.func @_head_transform_kernel(%arg0: i32, %arg1: memref<8x768xf32, #tpu.memory_space<vmem>>, %arg2: memref<768x768xbf16, #tpu.memory_space<vmem>>, %arg3: memref<1x768xf32, #tpu.memory_space<vmem>>, %arg4: memref<1x768xf32, #tpu.memory_space<vmem>>, %arg5: memref<1x768xf32, #tpu.memory_space<vmem>>, %arg6: memref<8x768xf32, #tpu.memory_space<vmem>>) attributes {dimension_semantics = [#tpu.dimension_semantics<parallel>], iteration_bounds = array<i64: 2>, scalar_prefetch = 0 : i64, scratch_operands = 0 : i64, tpu.core_type = #tpu.core_type<tc>, window_params = [{transform_indices = @transform_0, window_bounds = array<i64: 8, 768>}, {pipeline_mode = #tpu.pipeline_mode<synchronous>, transform_indices = @transform_1, window_bounds = array<i64: 768, 768>}, {pipeline_mode = #tpu.pipeline_mode<synchronous>, transform_indices = @transform_2, window_bounds = array<i64: 1, 768>}, {pipeline_mode = #tpu.pipeline_mode<synchronous>, transform_indices = @transform_3, window_bounds = array<i64: 1, 768>}, {pipeline_mode = #tpu.pipeline_mode<synchronous>, transform_indices = @transform_4, window_bounds = array<i64: 1, 768>}, {transform_indices = @transform_5, window_bounds = array<i64: 8, 768>}]} {
    %c0 = arith.constant 0 : index
    %c0_0 = arith.constant 0 : index
    %0 = vector.load %arg2[%c0, %c0_0] : memref<768x768xbf16, #tpu.memory_space<vmem>>, vector<768x768xbf16>
    %c0_1 = arith.constant 0 : index
    %c0_2 = arith.constant 0 : index
    %1 = vector.load %arg1[%c0_1, %c0_2] : memref<8x768xf32, #tpu.memory_space<vmem>>, vector<8x768xf32>
    %2 = arith.truncf %1 : vector<8x768xf32> to vector<8x768xbf16>
    %cst = arith.constant dense<0.000000e+00> : vector<8x768xf32>
    %3 = tpu.matmul %2, %0, %cst {dimension_numbers = #tpu.dot_dimension_numbers<[1], [0], [0], [1], [0, 0, 1, 1], [], []>} : vector<8x768xbf16>, vector<768x768xbf16>, vector<8x768xf32> -> vector<8x768xf32>
    %c0_3 = arith.constant 0 : index
    %c0_4 = arith.constant 0 : index
    %4 = vector.load %arg3[%c0_3, %c0_4] : memref<1x768xf32, #tpu.memory_space<vmem>>, vector<1x768xf32>
    %5 = vector.broadcast %4 : vector<1x768xf32> to vector<8x768xf32>
    %6 = arith.addf %3, %5 : vector<8x768xf32>
    %cst_5 = arith.constant 5.000000e-01 : f32
    %7 = vector.broadcast %cst_5 : f32 to vector<8x768xf32>
    %8 = arith.mulf %6, %7 : vector<8x768xf32>
    %cst_6 = arith.constant 0.707106769 : f32
    %9 = vector.broadcast %cst_6 : f32 to vector<8x768xf32>
    %10 = arith.mulf %6, %9 : vector<8x768xf32>
    %11 = math.erf %10 : vector<8x768xf32>
    %cst_7 = arith.constant 1.000000e+00 : f32
    %12 = vector.broadcast %cst_7 : f32 to vector<8x768xf32>
    %13 = arith.addf %12, %11 : vector<8x768xf32>
    %14 = arith.mulf %8, %13 : vector<8x768xf32>
    %cst_8 = arith.constant dense<0.000000e+00> : vector<8xf32>
    %15 = vector.multi_reduction <add>, %14, %cst_8 [1] : vector<8x768xf32> to vector<8xf32>
    %16 = vector.shape_cast %15 : vector<8xf32> to vector<8x1xf32>
    %cst_9 = arith.constant 7.680000e+02 : f32
    %17 = vector.broadcast %cst_9 : f32 to vector<8x1xf32>
    %18 = arith.divf %16, %17 : vector<8x1xf32>
    %19 = vector.broadcast %18 : vector<8x1xf32> to vector<8x768xf32>
    %20 = arith.subf %14, %19 : vector<8x768xf32>
    %21 = arith.mulf %20, %20 : vector<8x768xf32>
    %cst_10 = arith.constant dense<0.000000e+00> : vector<8xf32>
    %22 = vector.multi_reduction <add>, %21, %cst_10 [1] : vector<8x768xf32> to vector<8xf32>
    %23 = vector.shape_cast %22 : vector<8xf32> to vector<8x1xf32>
    %cst_11 = arith.constant 7.680000e+02 : f32
    %24 = vector.broadcast %cst_11 : f32 to vector<8x1xf32>
    %25 = arith.divf %23, %24 : vector<8x1xf32>
    %cst_12 = arith.constant 9.99999996E-13 : f32
    %26 = vector.broadcast %cst_12 : f32 to vector<8x1xf32>
    %27 = arith.addf %25, %26 : vector<8x1xf32>
    %28 = math.rsqrt %27 : vector<8x1xf32>
    %29 = vector.broadcast %28 : vector<8x1xf32> to vector<8x768xf32>
    %30 = arith.mulf %20, %29 : vector<8x768xf32>
    %c0_13 = arith.constant 0 : index
    %c0_14 = arith.constant 0 : index
    %31 = vector.load %arg4[%c0_13, %c0_14] : memref<1x768xf32, #tpu.memory_space<vmem>>, vector<1x768xf32>
    %32 = vector.broadcast %31 : vector<1x768xf32> to vector<8x768xf32>
    %33 = arith.mulf %30, %32 : vector<8x768xf32>
    %c0_15 = arith.constant 0 : index
    %c0_16 = arith.constant 0 : index
    %34 = vector.load %arg5[%c0_15, %c0_16] : memref<1x768xf32, #tpu.memory_space<vmem>>, vector<1x768xf32>
    %35 = vector.broadcast %34 : vector<1x768xf32> to vector<8x768xf32>
    %36 = arith.addf %33, %35 : vector<8x768xf32>
    %c0_17 = arith.constant 0 : index
    %c0_18 = arith.constant 0 : index
    %37 = vector.load %arg6[%c0_17, %c0_18] : memref<8x768xf32, #tpu.memory_space<vmem>>, vector<8x768xf32>
    tpu.vector_store %arg6[%c0_17, %c0_18], %36 {strides = array<i32>} : memref<8x768xf32, #tpu.memory_space<vmem>>, vector<8x768xf32>,
    return
  }
  func.func @transform_0(%arg0: i32) -> (i32, i32) {
    %c0_i32 = arith.constant 0 : i32
    %c0_i32_0 = arith.constant 0 : i32
    return %arg0, %c0_i32 : i32, i32
  }
  func.func @transform_1(%arg0: i32) -> (i32, i32) {
    %c0_i32 = arith.constant 0 : i32
    %c0_i32_0 = arith.constant 0 : i32
    %c0_i32_1 = arith.constant 0 : i32
    return %c0_i32, %c0_i32_0 : i32, i32
  }
  func.func @transform_2(%arg0: i32) -> (i32, i32) {
    %c0_i32 = arith.constant 0 : i32
    %c0_i32_0 = arith.constant 0 : i32
    %c0_i32_1 = arith.constant 0 : i32
    return %c0_i32, %c0_i32_0 : i32, i32
  }
  func.func @transform_3(%arg0: i32) -> (i32, i32) {
    %c0_i32 = arith.constant 0 : i32
    %c0_i32_0 = arith.constant 0 : i32
    %c0_i32_1 = arith.constant 0 : i32
    return %c0_i32, %c0_i32_0 : i32, i32
  }
  func.func @transform_4(%arg0: i32) -> (i32, i32) {
    %c0_i32 = arith.constant 0 : i32
    %c0_i32_0 = arith.constant 0 : i32
    %c0_i32_1 = arith.constant 0 : i32
    return %c0_i32, %c0_i32_0 : i32, i32
  }
  func.func @transform_5(%arg0: i32) -> (i32, i32) {
    %c0_i32 = arith.constant 0 : i32
    %c0_i32_0 = arith.constant 0 : i32
    return %arg0, %c0_i32 : i32, i32
  }
}

</mosaic_0001>

<llo_original>
// kernel: tpu_custom_call.1
$region0: #{tpu_custom_call.1}
  #allocation0 [shape = 'u32[]', space=smem, size = 0x4, offset = 0x4, fixed_abs, tag = 'smem constant byte address 0x4 - core index']
  #allocation1 [shape = 'u32[144,128]{1,0:T(1,128)}', space=vmem, size = 0x12000, scoped, tag = 'internal scratch']
  %s0 = inlined_call_operand.hbm [shape: f32[16,768], index: 0, kind: input, shape index: {}]
  %s1 = inlined_call_operand.hbm [shape: bf16[768,768], index: 1, kind: input, shape index: {}]
  %s2 = inlined_call_operand.hbm [shape: f32[1,768], index: 2, kind: input, shape index: {}]
  %s3 = inlined_call_operand.hbm [shape: f32[1,768], index: 3, kind: input, shape index: {}]
  %s4 = inlined_call_operand.hbm [shape: f32[1,768], index: 4, kind: input, shape index: {}]
  %s5 = inlined_call_operand.hbm [shape: f32[16,768], index: 5, kind: output, shape index: {}]
  %s6 = sld [smem:[#allocation0]]
  $region73: #{tpu_custom_call.1} parent=0
    _
  %s8 = ssub.s32 1, %s6
  %s9 = scalar_select 0, %s8, %s6
  $region1: #{tpu_custom_call.1} parent=0
    #allocation2 [shape = 'u8[49152]{0}', space=vmem, size = 0xc000, scoped, tag = 'input window, operand 0']
    #allocation3 [shape = 's32[2]{0}', space=sflag, size = 0x8, scoped, tag = 'scoped memory for tpu_custom_call.1']
    #allocation4 [shape = 's32[2]{0}', space=sflag, size = 0x8, scoped, tag = 'scoped memory for tpu_custom_call.1']
    #allocation5 [shape = 'u8[1179648]{0}', space=vmem, size = 0x120000, scoped, tag = 'input window, operand 1, single buffered']
    #allocation6 [shape = 's32[1]{0}', space=sflag, size = 0x4, scoped, tag = 'scoped memory for tpu_custom_call.1']
    #allocation7 [shape = 'u8[3072]{0}', space=vmem, size = 0xc00, scoped, tag = 'input window, operand 2, single buffered']
    #allocation8 [shape = 'u8[3072]{0}', space=vmem, size = 0xc00, scoped, tag = 'input window, operand 3, single buffered']
    #allocation9 [shape = 's32[1]{0}', space=sflag, size = 0x4, scoped, tag = 'scoped memory for tpu_custom_call.1']
    #allocation10 [shape = 'u8[3072]{0}', space=vmem, size = 0xc00, scoped, tag = 'input window, operand 4, single buffered']
    #allocation11 [shape = 'u8[49152]{0}', space=vmem, size = 0xc000, scoped, tag = 'output window, operand 0']
    %10 = vsyncpa [#allocation3], 0
    %s11 = scalar_lea.sflag [#allocation3], 1
    %12 = vsyncpa %s11, 0
    %13 = vsyncpa [#allocation6], 0
    %14 = vsyncpa [#allocation9], 0
    %15 = vsyncpa [#allocation4], 0
    %s16 = scalar_lea.sflag [#allocation4], 1
    %17 = vsyncpa %s16, 0
    loop: start=0, step=1, limit=4
    $region2: #{tpu_custom_call.1} parent=1 // loop_pre_header
      _
    $region3: #{tpu_custom_call.1} parent=1 // loop_header
      %s19 = sphi 0, %s23
      %p20 = scmp.ge.s32.totalorder %s19, 4
      %s29 = sphi 0, %s31
      %s32 = sphi 0, %s29
      %s33 = sphi 0, %s32
      %s49 = sphi 0, %s33
      %s53 = sphi 0, %s53
      %s55 = sphi 0, %s53
      %s56 = sphi 0, %s55
      %s70 = sphi 0, %s56
      %s74 = sphi 0, %s74
      %s76 = sphi 0, %s74
      %s77 = sphi 0, %s76
      %s91 = sphi 0, %s77
      %s95 = sphi 0, %s95
      %s97 = sphi 0, %s95
      %s98 = sphi 0, %s97
      %s112 = sphi 0, %s98
      %s116 = sphi 0, %s116
      %s118 = sphi 0, %s116
      %s119 = sphi 0, %s118
      %s133 = sphi 0, %s119
      %s139 = sphi 0, %s141
      %s142 = sphi 0, %s139
      %s143 = sphi 0, %s142
      %s159 = sphi 0, %s143
    $region4: #{tpu_custom_call.1} parent=1 // loop_header_branch
      %22 = sbr.rel (%p20) target = $region8
    $region5: #{tpu_custom_call.1} parent=1 // loop_body
      %s24 = ssub.s32 %s19, 1
      %s25 = ssub.s32 %s19, 2
      %s26 = sadd.s32 %s19, 1
      %s27 = ssub.s32 %s19, %s26
      %p28 = scmp.eq.s32.totalorder %s27, 0
      %s30 = sadd.s32 %s29, 1
      %s31 = scalar_select %p28, %s29, %s30
      %p34 = pneg %p28
      %p35 = scmp.eq.s32.totalorder %s19, 1
      %p36 = por %p34, %p35
      %p37 = scmp.ne.s32.totalorder %s29, %s32
      %p38 = scmp.eq.s32.totalorder %s19, 0
      %p39 = por %p37, %p38
      %p40 = scmp.ne.s32.totalorder %s29, %s32
      %p41 = scmp.eq.s32.totalorder %s24, 1
      %p42 = por %p40, %p41
      %p43 = scmp.ne.s32.totalorder %s32, %s33
      %p44 = scmp.eq.s32.totalorder %s24, 0
      %p45 = por %p43, %p44
      %p46 = scmp.ne.s32.totalorder %s32, %s33
      %p47 = scmp.eq.s32.totalorder %s25, 1
      %p48 = por %p46, %p47
      %p50 = scmp.ne.s32.totalorder %s33, %s49
      %p51 = scmp.eq.s32.totalorder %s25, 0
      %p52 = por %p50, %p51
      %s54 = sadd.s32 %s53, 1
      %p57 = scmp.eq.s32.totalorder %s19, 1
      %p58 = scmp.ne.s32.totalorder %s53, %s55
      %p59 = scmp.eq.s32.totalorder %s19, 0
      %p60 = por %p58, %p59
      %p61 = scmp.ne.s32.totalorder %s53, %s55
      %p62 = scmp.eq.s32.totalorder %s24, 1
      %p63 = por %p61, %p62
      %p64 = scmp.ne.s32.totalorder %s55, %s56
      %p65 = scmp.eq.s32.totalorder %s24, 0
      %p66 = por %p64, %p65
      %p67 = scmp.ne.s32.totalorder %s55, %s56
      %p68 = scmp.eq.s32.totalorder %s25, 1
      %p69 = por %p67, %p68
      %p71 = scmp.ne.s32.totalorder %s56, %s70
      %p72 = scmp.eq.s32.totalorder %s25, 0
      %p73 = por %p71, %p72
      %s75 = sadd.s32 %s74, 1
      %p78 = scmp.eq.s32.totalorder %s19, 1
      %p79 = scmp.ne.s32.totalorder %s74, %s76
      %p80 = scmp.eq.s32.totalorder %s19, 0
      %p81 = por %p79, %p80
      %p82 = scmp.ne.s32.totalorder %s74, %s76
      %p83 = scmp.eq.s32.totalorder %s24, 1
      %p84 = por %p82, %p83
      %p85 = scmp.ne.s32.totalorder %s76, %s77
      %p86 = scmp.eq.s32.totalorder %s24, 0
      %p87 = por %p85, %p86
      %p88 = scmp.ne.s32.totalorder %s76, %s77
      %p89 = scmp.eq.s32.totalorder %s25, 1
      %p90 = por %p88, %p89
      %p92 = scmp.ne.s32.totalorder %s77, %s91
      %p93 = scmp.eq.s32.totalorder %s25, 0
      %p94 = por %p92, %p93
      %s96 = sadd.s32 %s95, 1
      %p99 = scmp.eq.s32.totalorder %s19, 1
      %p100 = scmp.ne.s32.totalorder %s95, %s97
      %p101 = scmp.eq.s32.totalorder %s19, 0
      %p102 = por %p100, %p101
      %p103 = scmp.ne.s32.totalorder %s95, %s97
      %p104 = scmp.eq.s32.totalorder %s24, 1
      %p105 = por %p103, %p104
      %p106 = scmp.ne.s32.totalorder %s97, %s98
      %p107 = scmp.eq.s32.totalorder %s24, 0
      %p108 = por %p106, %p107
      %p109 = scmp.ne.s32.totalorder %s97, %s98
      %p110 = scmp.eq.s32.totalorder %s25, 1
      %p111 = por %p109, %p110
      %p113 = scmp.ne.s32.totalorder %s98, %s112
      %p114 = scmp.eq.s32.totalorder %s25, 0
      %p115 = por %p113, %p114
      %s117 = sadd.s32 %s116, 1
      %p120 = scmp.eq.s32.totalorder %s19, 1
      %p121 = scmp.ne.s32.totalorder %s116, %s118
      %p122 = scmp.eq.s32.totalorder %s19, 0
      %p123 = por %p121, %p122
      %p124 = scmp.ne.s32.totalorder %s116, %s118
      %p125 = scmp.eq.s32.totalorder %s24, 1
      %p126 = por %p124, %p125
      %p127 = scmp.ne.s32.totalorder %s118, %s119
      %p128 = scmp.eq.s32.totalorder %s24, 0
      %p129 = por %p127, %p128
      %p130 = scmp.ne.s32.totalorder %s118, %s119
      %p131 = scmp.eq.s32.totalorder %s25, 1
      %p132 = por %p130, %p131
      %p134 = scmp.ne.s32.totalorder %s119, %s133
      %p135 = scmp.eq.s32.totalorder %s25, 0
      %p136 = por %p134, %p135
      %s137 = ssub.s32 %s19, %s26
      %p138 = scmp.eq.s32.totalorder %s137, 0
      %s140 = sadd.s32 %s139, 1
      %s141 = scalar_select %p138, %s139, %s140
      %p144 = pneg %p138
      %p145 = scmp.eq.s32.totalorder %s19, 1
      %p146 = por %p144, %p145
      %p147 = scmp.ne.s32.totalorder %s139, %s142
      %p148 = scmp.eq.s32.totalorder %s19, 0
      %p149 = por %p147, %p148
      %p150 = scmp.ne.s32.totalorder %s139, %s142
      %p151 = scmp.eq.s32.totalorder %s24, 1
      %p152 = por %p150, %p151
      %p153 = scmp.ne.s32.totalorder %s142, %s143
      %p154 = scmp.eq.s32.totalorder %s24, 0
      %p155 = por %p153, %p154
      %p156 = scmp.ne.s32.totalorder %s142, %s143
      %p157 = scmp.eq.s32.totalorder %s25, 1
      %p158 = por %p156, %p157
      %p160 = scmp.ne.s32.totalorder %s143, %s159
      %p161 = scmp.eq.s32.totalorder %s25, 0
      %p162 = por %p160, %p161
      %p163 = scmp.le.s32.totalorder 1, %s19
      %p164 = scmp.lt.s32.totalorder %s19, 3
      %p165 = pnand %p163, %p164
      %p166 = pneg %p165
      // Predicated region
      $region9: #{tpu_custom_call.1} parent=5 // pred_check
        _
      $region10: #{tpu_custom_call.1} parent=5 // pred_check_branch
        %168 = sbr.rel (%p165) target = $region12
      $region11: #{tpu_custom_call.1} parent=5 // pred_region
        %s169 = ssub.s32 %s19, 1
        // Predicated region
        $region13: #{tpu_custom_call.1} parent=11 // pred_check
          %p170 = pneg %p66
        $region14: #{tpu_custom_call.1} parent=11 // pred_check_branch
          %172 = sbr.rel (%p170) target = $region16
        $region15: #{tpu_custom_call.1} parent=11 // pred_region
          %s174 = ssub.s32 36864, 36864
          %175 = vsyncadd [#allocation6], %s174
          %s176 = sshll.u32 [#allocation5], 4
          %s177 = int_to_ptr.vmem [resolvable:$true] %s176
          %182 = dma.hbm_to_vmem [thread:$0]  %s1, 36864, %s177, [#allocation6], 384, 384, 24
        $region16: #{tpu_custom_call.1} parent=11 // pred_fallthru
          _
        // Predicated region
        $region17: #{tpu_custom_call.1} parent=11 // pred_check
          %p183 = pneg %p87
        $region18: #{tpu_custom_call.1} parent=11 // pred_check_branch
          %185 = sbr.rel (%p183) target = $region20
        $region19: #{tpu_custom_call.1} parent=11 // pred_region
          %s187 = ssub.s32 96, 96
          %188 = vsyncadd [#allocation6], %s187
          %s190 = sshll.u32 [#allocation7], 4
          %s191 = int_to_ptr.vmem [resolvable:$true] %s190
          %193 = dma.hbm_to_vmem [thread:$0]  %s2, 96, %s191, [#allocation6]
        $region20: #{tpu_custom_call.1} parent=11 // pred_fallthru
          _
        // Predicated region
        $region21: #{tpu_custom_call.1} parent=11 // pred_check
          %p194 = pneg %p108
        $region22: #{tpu_custom_call.1} parent=11 // pred_check_branch
          %196 = sbr.rel (%p194) target = $region24
        $region23: #{tpu_custom_call.1} parent=11 // pred_region
          %s198 = ssub.s32 96, 96
          %199 = vsyncadd [#allocation9], %s198
          %s201 = sshll.u32 [#allocation8], 4
          %s202 = int_to_ptr.vmem [resolvable:$true] %s201
          %204 = dma.hbm_to_vmem [thread:$0]  %s3, 96, %s202, [#allocation9]
        $region24: #{tpu_custom_call.1} parent=11 // pred_fallthru
          _
        // Predicated region
        $region25: #{tpu_custom_call.1} parent=11 // pred_check
          %p205 = pneg %p129
        $region26: #{tpu_custom_call.1} parent=11 // pred_check_branch
          %207 = sbr.rel (%p205) target = $region28
        $region27: #{tpu_custom_call.1} parent=11 // pred_region
          %s209 = ssub.s32 96, 96
          %210 = vsyncadd [#allocation9], %s209
          %s212 = sshll.u32 [#allocation10], 4
          %s213 = int_to_ptr.vmem [resolvable:$true] %s212
          %215 = dma.hbm_to_vmem [thread:$0]  %s4, 96, %s213, [#allocation9]
        $region28: #{tpu_custom_call.1} parent=11 // pred_fallthru
          _
      $region12: #{tpu_custom_call.1} parent=5 // pred_fallthru
        _
      %p216 = scmp.lt.s32.totalorder %s19, 2
      // Predicated region
      $region29: #{tpu_custom_call.1} parent=5 // pred_check
        %p217 = pneg %p216
      $region30: #{tpu_custom_call.1} parent=5 // pred_check_branch
        %219 = sbr.rel (%p217) target = $region32
      $region31: #{tpu_custom_call.1} parent=5 // pred_region
        // Predicated region
        $region33: #{tpu_custom_call.1} parent=31 // pred_check
          %p220 = pneg %p39
        $region34: #{tpu_custom_call.1} parent=31 // pred_check_branch
          %222 = sbr.rel (%p220) target = $region36
        $region35: #{tpu_custom_call.1} parent=31 // pred_region
          %s223 = sand.u32 %s29, 1
          %s224 = scalar_lea.sflag [#allocation3], %s223
          %s225 = sand.u32 %s29, 1
          %s226 = smul.addr %s225, 48
          %s227 = scalar_lea.vmem [#allocation2], %s226
          %s229 = ssub.s32 768, 768
          %230 = vsyncadd %s224, %s229
          %s231 = smul.addr %s19, 6
          %s232 = smul.addr %s231, 128
          %s233 = scalar_lea.hbm %s0, %s232
          %s235 = sshll.u32 %s227, 4
          %s236 = int_to_ptr.vmem [resolvable:$true] %s235
          %238 = dma.hbm_to_vmem [thread:$0]  %s233, 768, %s236, %s224
        $region36: #{tpu_custom_call.1} parent=31 // pred_fallthru
          _
      $region32: #{tpu_custom_call.1} parent=5 // pred_fallthru
        _
      %p239 = scmp.le.s32.totalorder 1, %s19
      %p240 = scmp.lt.s32.totalorder %s19, 3
      %p241 = pnand %p239, %p240
      %p242 = pneg %p241
      // Predicated region
      $region37: #{tpu_custom_call.1} parent=5 // pred_check
        _
      $region38: #{tpu_custom_call.1} parent=5 // pred_check_branch
        %244 = sbr.rel (%p241) target = $region40
      $region39: #{tpu_custom_call.1} parent=5 // pred_region
        %s245 = ssub.s32 %s19, 1
        %s246 = sand.u32 %s32, 1
        %s247 = scalar_lea.sflag [#allocation3], %s246
        %s248 = sand.u32 %s32, 1
        %s249 = smul.addr %s248, 48
        %s250 = scalar_lea.vmem [#allocation2], %s249
        // Predicated region
        $region41: #{tpu_custom_call.1} parent=39 // pred_check
          %p251 = pneg %p45
        $region42: #{tpu_custom_call.1} parent=39 // pred_check_branch
          %253 = sbr.rel (%p251) target = $region44
        $region43: #{tpu_custom_call.1} parent=39 // pred_region
          %254 = dma.done %s247, 768
        $region44: #{tpu_custom_call.1} parent=39 // pred_fallthru
          _
        // Predicated region
        $region45: #{tpu_custom_call.1} parent=39 // pred_check
          %p255 = pneg %p66
        $region46: #{tpu_custom_call.1} parent=39 // pred_check_branch
          %257 = sbr.rel (%p255) target = $region48
        $region47: #{tpu_custom_call.1} parent=39 // pred_region
          %258 = dma.done [#allocation6], 36864
        $region48: #{tpu_custom_call.1} parent=39 // pred_fallthru
          _
        // Predicated region
        $region49: #{tpu_custom_call.1} parent=39 // pred_check
          %p259 = pneg %p87
        $region50: #{tpu_custom_call.1} parent=39 // pred_check_branch
          %261 = sbr.rel (%p259) target = $region52
        $region51: #{tpu_custom_call.1} parent=39 // pred_region
          %262 = dma.done [#allocation6], 96
        $region52: #{tpu_custom_call.1} parent=39 // pred_fallthru
          _
        // Predicated region
        $region53: #{tpu_custom_call.1} parent=39 // pred_check
          %p263 = pneg %p108
        $region54: #{tpu_custom_call.1} parent=39 // pred_check_branch
          %265 = sbr.rel (%p263) target = $region56
        $region55: #{tpu_custom_call.1} parent=39 // pred_region
          %266 = dma.done [#allocation9], 96
        $region56: #{tpu_custom_call.1} parent=39 // pred_fallthru
          _
        // Predicated region
        $region57: #{tpu_custom_call.1} parent=39 // pred_check
          %p267 = pneg %p129
        $region58: #{tpu_custom_call.1} parent=39 // pred_check_branch
          %269 = sbr.rel (%p267) target = $region60
        $region59: #{tpu_custom_call.1} parent=39 // pred_region
          %270 = dma.done [#allocation9], 96
        $region60: #{tpu_custom_call.1} parent=39 // pred_fallthru
          _
        %s271 = sand.u32 %s32, 1
        %s272 = scalar_lea.sflag [#allocation3], %s271
        %s273 = sand.u32 %s32, 1
        %s274 = smul.addr %s273, 48
        %s275 = scalar_lea.vmem [#allocation2], %s274
        %p276 = pneg %p45
        %p277 = pneg %p42
        %p278 = pneg %p66
        %p279 = pneg %p63
        %p280 = pneg %p87
        %p281 = pneg %p84
        %p282 = pneg %p108
        %p283 = pneg %p105
        %p284 = pneg %p129
        %p285 = pneg %p126
        %p286 = pneg %p155
        %p287 = pneg %p152
        %s288 = sand.u32 %s142, 1
        %s289 = scalar_lea.sflag [#allocation4], %s288
        %s290 = sand.u32 %s142, 1
        %s291 = smul.addr %s290, 48
        %s292 = scalar_lea.vmem [#allocation11], %s291
        %v293 = vld [vmem:[#allocation5] sm:$0xff]
        %v294 = vld [vmem:[#allocation5 + $0x8] sm:$0xff]
        %v295 = vld [vmem:[#allocation5 + $0x10] sm:$0xff]
        %v296 = vld [vmem:[#allocation5 + $0x18] sm:$0xff]
        %v297 = vld [vmem:[#allocation5 + $0x20] sm:$0xff]
        %v298 = vld [vmem:[#allocation5 + $0x28] sm:$0xff]
        %v299 = vld [vmem:[#allocation5 + $0x30] sm:$0xff]
        %v300 = vld [vmem:[#allocation5 + $0x38] sm:$0xff]
        %v301 = vld [vmem:[#allocation5 + $0x40] sm:$0xff]
        %v302 = vld [vmem:[#allocation5 + $0x48] sm:$0xff]
        %v303 = vld [vmem:[#allocation5 + $0x50] sm:$0xff]
        %v304 = vld [vmem:[#allocation5 + $0x58] sm:$0xff]
        %v305 = vld [vmem:[#allocation5 + $0x60] sm:$0xff]
        %v306 = vld [vmem:[#allocation5 + $0x68] sm:$0xff]
        %v307 = vld [vmem:[#allocation5 + $0x70] sm:$0xff]
        %v308 = vld [vmem:[#allocation5 + $0x78] sm:$0xff]
        %v309 = vld [vmem:[#allocation5 + $0x80] sm:$0xff]
        %v310 = vld [vmem:[#allocation5 + $0x88] sm:$0xff]
        %v311 = vld [vmem:[#allocation5 + $0x90] sm:$0xff]
        %v312 = vld [vmem:[#allocation5 + $0x98] sm:$0xff]
        %v313 = vld [vmem:[#allocation5 + $0xa0] sm:$0xff]
        %v314 = vld [vmem:[#allocation5 + $0xa8] sm:$0xff]
        %v315 = vld [vmem:[#allocation5 + $0xb0] sm:$0xff]
        %v316 = vld [vmem:[#allocation5 + $0xb8] sm:$0xff]
        %v317 = vld [vmem:[#allocation5 + $0xc0] sm:$0xff]
        %v318 = vld [vmem:[#allocation5 + $0xc8] sm:$0xff]
        %v319 = vld [vmem:[#allocation5 + $0xd0] sm:$0xff]
        %v320 = vld [vmem:[#allocation5 + $0xd8] sm:$0xff]
        %v321 = vld [vmem:[#allocation5 + $0xe0] sm:$0xff]
        %v322 = vld [vmem:[#allocation5 + $0xe8] sm:$0xff]
        %v323 = vld [vmem:[#allocation5 + $0xf0] sm:$0xff]
        %v324 = vld [vmem:[#allocation5 + $0xf8] sm:$0xff]
        %v325 = vld [vmem:[#allocation5 + $0x100] sm:$0xff]
        %v326 = vld [vmem:[#allocation5 + $0x108] sm:$0xff]
        %v327 = vld [vmem:[#allocation5 + $0x110] sm:$0xff]
        %v328 = vld [vmem:[#allocation5 + $0x118] sm:$0xff]
        %v329 = vld [vmem:[#allocation5 + $0x120] sm:$0xff]
        %v330 = vld [vmem:[#allocation5 + $0x128] sm:$0xff]
        %v331 = vld [vmem:[#allocation5 + $0x130] sm:$0xff]
        %v332 = vld [vmem:[#allocation5 + $0x138] sm:$0xff]
        %v333 = vld [vmem:[#allocation5 + $0x140] sm:$0xff]
        %v334 = vld [vmem:[#allocation5 + $0x148] sm:$0xff]
        %v335 = vld [vmem:[#allocation5 + $0x150] sm:$0xff]
        %v336 = vld [vmem:[#allocation5 + $0x158] sm:$0xff]
        %v337 = vld [vmem:[#allocation5 + $0x160] sm:$0xff]
        %v338 = vld [vmem:[#allocation5 + $0x168] sm:$0xff]
        %v339 = vld [vmem:[#allocation5 + $0x170] sm:$0xff]
        %v340 = vld [vmem:[#allocation5 + $0x178] sm:$0xff]
        %v341 = vld [vmem:[#allocation5 + $0x180] sm:$0xff]
        %v342 = vld [vmem:[#allocation5 + $0x188] sm:$0xff]
        %v343 = vld [vmem:[#allocation5 + $0x190] sm:$0xff]
        %v344 = vld [vmem:[#allocation5 + $0x198] sm:$0xff]
        %v345 = vld [vmem:[#allocation5 + $0x1a0] sm:$0xff]
        %v346 = vld [vmem:[#allocation5 + $0x1a8] sm:$0xff]
        %v347 = vld [vmem:[#allocation5 + $0x1b0] sm:$0xff]
        %v348 = vld [vmem:[#allocation5 + $0x1b8] sm:$0xff]
        %v349 = vld [vmem:[#allocation5 + $0x1c0] sm:$0xff]
        %v350 = vld [vmem:[#allocation5 + $0x1c8] sm:$0xff]
        %v351 = vld [vmem:[#allocation5 + $0x1d0] sm:$0xff]
        %v352 = vld [vmem:[#allocation5 + $0x1d8] sm:$0xff]
        %v353 = vld [vmem:[#allocation5 + $0x1e0] sm:$0xff]
        %v354 = vld [vmem:[#allocation5 + $0x1e8] sm:$0xff]
        %v355 = vld [vmem:[#allocation5 + $0x1f0] sm:$0xff]
        %v356 = vld [vmem:[#allocation5 + $0x1f8] sm:$0xff]
        %v357 = vld [vmem:[#allocation5 + $0x200] sm:$0xff]
        %v358 = vld [vmem:[#allocation5 + $0x208] sm:$0xff]
        %v359 = vld [vmem:[#allocation5 + $0x210] sm:$0xff]
        %v360 = vld [vmem:[#allocation5 + $0x218] sm:$0xff]
        %v361 = vld [vmem:[#allocation5 + $0x220] sm:$0xff]
        %v362 = vld [vmem:[#allocation5 + $0x228] sm:$0xff]
        %v363 = vld [vmem:[#allocation5 + $0x230] sm:$0xff]
        %v364 = vld [vmem:[#allocation5 + $0x238] sm:$0xff]
        %v365 = vld [vmem:[#allocation5 + $0x240] sm:$0xff]
        %v366 = vld [vmem:[#allocation5 + $0x248] sm:$0xff]
        %v367 = vld [vmem:[#allocation5 + $0x250] sm:$0xff]
        %v368 = vld [vmem:[#allocation5 + $0x258] sm:$0xff]
        %v369 = vld [vmem:[#allocation5 + $0x260] sm:$0xff]
        %v370 = vld [vmem:[#allocation5 + $0x268] sm:$0xff]
        %v371 = vld [vmem:[#allocation5 + $0x270] sm:$0xff]
        %v372 = vld [vmem:[#allocation5 + $0x278] sm:$0xff]
        %v373 = vld [vmem:[#allocation5 + $0x280] sm:$0xff]
        %v374 = vld [vmem:[#allocation5 + $0x288] sm:$0xff]
        %v375 = vld [vmem:[#allocation5 + $0x290] sm:$0xff]
        %v376 = vld [vmem:[#allocation5 + $0x298] sm:$0xff]
        %v377 = vld [vmem:[#allocation5 + $0x2a0] sm:$0xff]
        %v378 = vld [vmem:[#allocation5 + $0x2a8] sm:$0xff]
        %v379 = vld [vmem:[#allocation5 + $0x2b0] sm:$0xff]
        %v380 = vld [vmem:[#allocation5 + $0x2b8] sm:$0xff]
        %v381 = vld [vmem:[#allocation5 + $0x2c0] sm:$0xff]
        %v382 = vld [vmem:[#allocation5 + $0x2c8] sm:$0xff]
        %v383 = vld [vmem:[#allocation5 + $0x2d0] sm:$0xff]
        %v384 = vld [vmem:[#allocation5 + $0x2d8] sm:$0xff]
        %v385 = vld [vmem:[#allocation5 + $0x2e0] sm:$0xff]
        %v386 = vld [vmem:[#allocation5 + $0x2e8] sm:$0xff]
        %v387 = vld [vmem:[#allocation5 + $0x2f0] sm:$0xff]
        %v388 = vld [vmem:[#allocation5 + $0x2f8] sm:$0xff]
        %v389 = vld [vmem:[#allocation5 + $0x300] sm:$0xff]
        %v390 = vld [vmem:[#allocation5 + $0x308] sm:$0xff]
        %v391 = vld [vmem:[#allocation5 + $0x310] sm:$0xff]
        %v392 = vld [vmem:[#allocation5 + $0x318] sm:$0xff]
        %v393 = vld [vmem:[#allocation5 + $0x320] sm:$0xff]
        %v394 = vld [vmem:[#allocation5 + $0x328] sm:$0xff]
        %v395 = vld [vmem:[#allocation5 + $0x330] sm:$0xff]
        %v396 = vld [vmem:[#allocation5 + $0x338] sm:$0xff]
        %v397 = vld [vmem:[#allocation5 + $0x340] sm:$0xff]
        %v398 = vld [vmem:[#allocation5 + $0x348] sm:$0xff]
        %v399 = vld [vmem:[#allocation5 + $0x350] sm:$0xff]
        %v400 = vld [vmem:[#allocation5 + $0x358] sm:$0xff]
        %v401 = vld [vmem:[#allocation5 + $0x360] sm:$0xff]
        %v402 = vld [vmem:[#allocation5 + $0x368] sm:$0xff]
        %v403 = vld [vmem:[#allocation5 + $0x370] sm:$0xff]
        %v404 = vld [vmem:[#allocation5 + $0x378] sm:$0xff]
        %v405 = vld [vmem:[#allocation5 + $0x380] sm:$0xff]
        %v406 = vld [vmem:[#allocation5 + $0x388] sm:$0xff]
        %v407 = vld [vmem:[#allocation5 + $0x390] sm:$0xff]
        %v408 = vld [vmem:[#allocation5 + $0x398] sm:$0xff]
        %v409 = vld [vmem:[#allocation5 + $0x3a0] sm:$0xff]
        %v410 = vld [vmem:[#allocation5 + $0x3a8] sm:$0xff]
        %v411 = vld [vmem:[#allocation5 + $0x3b0] sm:$0xff]
        %v412 = vld [vmem:[#allocation5 + $0x3b8] sm:$0xff]
        %v413 = vld [vmem:[#allocation5 + $0x3c0] sm:$0xff]
        %v414 = vld [vmem:[#allocation5 + $0x3c8] sm:$0xff]
        %v415 = vld [vmem:[#allocation5 + $0x3d0] sm:$0xff]
        %v416 = vld [vmem:[#allocation5 + $0x3d8] sm:$0xff]
        %v417 = vld [vmem:[#allocation5 + $0x3e0] sm:$0xff]
        %v418 = vld [vmem:[#allocation5 + $0x3e8] sm:$0xff]
        %v419 = vld [vmem:[#allocation5 + $0x3f0] sm:$0xff]
        %v420 = vld [vmem:[#allocation5 + $0x3f8] sm:$0xff]
        %v421 = vld [vmem:[#allocation5 + $0x400] sm:$0xff]
        %v422 = vld [vmem:[#allocation5 + $0x408] sm:$0xff]
        %v423 = vld [vmem:[#allocation5 + $0x410] sm:$0xff]
        %v424 = vld [vmem:[#allocation5 + $0x418] sm:$0xff]
        %v425 = vld [vmem:[#allocation5 + $0x420] sm:$0xff]
        %v426 = vld [vmem:[#allocation5 + $0x428] sm:$0xff]
        %v427 = vld [vmem:[#allocation5 + $0x430] sm:$0xff]
        %v428 = vld [vmem:[#allocation5 + $0x438] sm:$0xff]
        %v429 = vld [vmem:[#allocation5 + $0x440] sm:$0xff]
        %v430 = vld [vmem:[#allocation5 + $0x448] sm:$0xff]
        %v431 = vld [vmem:[#allocation5 + $0x450] sm:$0xff]
        %v432 = vld [vmem:[#allocation5 + $0x458] sm:$0xff]
        %v433 = vld [vmem:[#allocation5 + $0x460] sm:$0xff]
        %v434 = vld [vmem:[#allocation5 + $0x468] sm:$0xff]
        %v435 = vld [vmem:[#allocation5 + $0x470] sm:$0xff]
        %v436 = vld [vmem:[#allocation5 + $0x478] sm:$0xff]
        %v437 = vld [vmem:[#allocation5 + $0x480] sm:$0xff]
        %v438 = vld [vmem:[#allocation5 + $0x488] sm:$0xff]
        %v439 = vld [vmem:[#allocation5 + $0x490] sm:$0xff]
        %v440 = vld [vmem:[#allocation5 + $0x498] sm:$0xff]
        %v441 = vld [vmem:[#allocation5 + $0x4a0] sm:$0xff]
        %v442 = vld [vmem:[#allocation5 + $0x4a8] sm:$0xff]
        %v443 = vld [vmem:[#allocation5 + $0x4b0] sm:$0xff]
        %v444 = vld [vmem:[#allocation5 + $0x4b8] sm:$0xff]
        %v445 = vld [vmem:[#allocation5 + $0x4c0] sm:$0xff]
        %v446 = vld [vmem:[#allocation5 + $0x4c8] sm:$0xff]
        %v447 = vld [vmem:[#allocation5 + $0x4d0] sm:$0xff]
        %v448 = vld [vmem:[#allocation5 + $0x4d8] sm:$0xff]
        %v449 = vld [vmem:[#allocation5 + $0x4e0] sm:$0xff]
        %v450 = vld [vmem:[#allocation5 + $0x4e8] sm:$0xff]
        %v451 = vld [vmem:[#allocation5 + $0x4f0] sm:$0xff]
        %v452 = vld [vmem:[#allocation5 + $0x4f8] sm:$0xff]
        %v453 = vld [vmem:[#allocation5 + $0x500] sm:$0xff]
        %v454 = vld [vmem:[#allocation5 + $0x508] sm:$0xff]
        %v455 = vld [vmem:[#allocation5 + $0x510] sm:$0xff]
        %v456 = vld [vmem:[#allocation5 + $0x518] sm:$0xff]
        %v457 = vld [vmem:[#allocation5 + $0x520] sm:$0xff]
        %v458 = vld [vmem:[#allocation5 + $0x528] sm:$0xff]
        %v459 = vld [vmem:[#allocation5 + $0x530] sm:$0xff]
        %v460 = vld [vmem:[#allocation5 + $0x538] sm:$0xff]
        %v461 = vld [vmem:[#allocation5 + $0x540] sm:$0xff]
        %v462 = vld [vmem:[#allocation5 + $0x548] sm:$0xff]
        %v463 = vld [vmem:[#allocation5 + $0x550] sm:$0xff]
        %v464 = vld [vmem:[#allocation5 + $0x558] sm:$0xff]
        %v465 = vld [vmem:[#allocation5 + $0x560] sm:$0xff]
        %v466 = vld [vmem:[#allocation5 + $0x568] sm:$0xff]
        %v467 = vld [vmem:[#allocation5 + $0x570] sm:$0xff]
        %v468 = vld [vmem:[#allocation5 + $0x578] sm:$0xff]
        %v469 = vld [vmem:[#allocation5 + $0x580] sm:$0xff]
        %v470 = vld [vmem:[#allocation5 + $0x588] sm:$0xff]
        %v471 = vld [vmem:[#allocation5 + $0x590] sm:$0xff]
        %v472 = vld [vmem:[#allocation5 + $0x598] sm:$0xff]
        %v473 = vld [vmem:[#allocation5 + $0x5a0] sm:$0xff]
        %v474 = vld [vmem:[#allocation5 + $0x5a8] sm:$0xff]
        %v475 = vld [vmem:[#allocation5 + $0x5b0] sm:$0xff]
        %v476 = vld [vmem:[#allocation5 + $0x5b8] sm:$0xff]
        %v477 = vld [vmem:[#allocation5 + $0x5c0] sm:$0xff]
        %v478 = vld [vmem:[#allocation5 + $0x5c8] sm:$0xff]
        %v479 = vld [vmem:[#allocation5 + $0x5d0] sm:$0xff]
        %v480 = vld [vmem:[#allocation5 + $0x5d8] sm:$0xff]
        %v481 = vld [vmem:[#allocation5 + $0x5e0] sm:$0xff]
        %v482 = vld [vmem:[#allocation5 + $0x5e8] sm:$0xff]
        %v483 = vld [vmem:[#allocation5 + $0x5f0] sm:$0xff]
        %v484 = vld [vmem:[#allocation5 + $0x5f8] sm:$0xff]
        %v485 = vld [vmem:[#allocation5 + $0x600] sm:$0xff]
        %v486 = vld [vmem:[#allocation5 + $0x608] sm:$0xff]
        %v487 = vld [vmem:[#allocation5 + $0x610] sm:$0xff]
        %v488 = vld [vmem:[#allocation5 + $0x618] sm:$0xff]
        %v489 = vld [vmem:[#allocation5 + $0x620] sm:$0xff]
        %v490 = vld [vmem:[#allocation5 + $0x628] sm:$0xff]
        %v491 = vld [vmem:[#allocation5 + $0x630] sm:$0xff]
        %v492 = vld [vmem:[#allocation5 + $0x638] sm:$0xff]
        %v493 = vld [vmem:[#allocation5 + $0x640] sm:$0xff]
        %v494 = vld [vmem:[#allocation5 + $0x648] sm:$0xff]
        %v495 = vld [vmem:[#allocation5 + $0x650] sm:$0xff]
        %v496 = vld [vmem:[#allocation5 + $0x658] sm:$0xff]
        %v497 = vld [vmem:[#allocation5 + $0x660] sm:$0xff]
        %v498 = vld [vmem:[#allocation5 + $0x668] sm:$0xff]
        %v499 = vld [vmem:[#allocation5 + $0x670] sm:$0xff]
        %v500 = vld [vmem:[#allocation5 + $0x678] sm:$0xff]
        %v501 = vld [vmem:[#allocation5 + $0x680] sm:$0xff]
        %v502 = vld [vmem:[#allocation5 + $0x688] sm:$0xff]
        %v503 = vld [vmem:[#allocation5 + $0x690] sm:$0xff]
        %v504 = vld [vmem:[#allocation5 + $0x698] sm:$0xff]
        %v505 = vld [vmem:[#allocation5 + $0x6a0] sm:$0xff]
        %v506 = vld [vmem:[#allocation5 + $0x6a8] sm:$0xff]
        %v507 = vld [vmem:[#allocation5 + $0x6b0] sm:$0xff]
        %v508 = vld [vmem:[#allocation5 + $0x6b8] sm:$0xff]
        %v509 = vld [vmem:[#allocation5 + $0x6c0] sm:$0xff]
        %v510 = vld [vmem:[#allocation5 + $0x6c8] sm:$0xff]
        %v511 = vld [vmem:[#allocation5 + $0x6d0] sm:$0xff]
        %v512 = vld [vmem:[#allocation5 + $0x6d8] sm:$0xff]
        %v513 = vld [vmem:[#allocation5 + $0x6e0] sm:$0xff]
        %v514 = vld [vmem:[#allocation5 + $0x6e8] sm:$0xff]
        %v515 = vld [vmem:[#allocation5 + $0x6f0] sm:$0xff]
        %v516 = vld [vmem:[#allocation5 + $0x6f8] sm:$0xff]
        %v517 = vld [vmem:[#allocation5 + $0x700] sm:$0xff]
        %v518 = vld [vmem:[#allocation5 + $0x708] sm:$0xff]
        %v519 = vld [vmem:[#allocation5 + $0x710] sm:$0xff]
        %v520 = vld [vmem:[#allocation5 + $0x718] sm:$0xff]
        %v521 = vld [vmem:[#allocation5 + $0x720] sm:$0xff]
        %v522 = vld [vmem:[#allocation5 + $0x728] sm:$0xff]
        %v523 = vld [vmem:[#allocation5 + $0x730] sm:$0xff]
        %v524 = vld [vmem:[#allocation5 + $0x738] sm:$0xff]
        %v525 = vld [vmem:[#allocation5 + $0x740] sm:$0xff]
        %v526 = vld [vmem:[#allocation5 + $0x748] sm:$0xff]
        %v527 = vld [vmem:[#allocation5 + $0x750] sm:$0xff]
        %v528 = vld [vmem:[#allocation5 + $0x758] sm:$0xff]
        %v529 = vld [vmem:[#allocation5 + $0x760] sm:$0xff]
        %v530 = vld [vmem:[#allocation5 + $0x768] sm:$0xff]
        %v531 = vld [vmem:[#allocation5 + $0x770] sm:$0xff]
        %v532 = vld [vmem:[#allocation5 + $0x778] sm:$0xff]
        %v533 = vld [vmem:[#allocation5 + $0x780] sm:$0xff]
        %v534 = vld [vmem:[#allocation5 + $0x788] sm:$0xff]
        %v535 = vld [vmem:[#allocation5 + $0x790] sm:$0xff]
        %v536 = vld [vmem:[#allocation5 + $0x798] sm:$0xff]
        %v537 = vld [vmem:[#allocation5 + $0x7a0] sm:$0xff]
        %v538 = vld [vmem:[#allocation5 + $0x7a8] sm:$0xff]
        %v539 = vld [vmem:[#allocation5 + $0x7b0] sm:$0xff]
        %v540 = vld [vmem:[#allocation5 + $0x7b8] sm:$0xff]
        %v541 = vld [vmem:[#allocation5 + $0x7c0] sm:$0xff]
        %v542 = vld [vmem:[#allocation5 + $0x7c8] sm:$0xff]
        %v543 = vld [vmem:[#allocation5 + $0x7d0] sm:$0xff]
        %v544 = vld [vmem:[#allocation5 + $0x7d8] sm:$0xff]
        %v545 = vld [vmem:[#allocation5 + $0x7e0] sm:$0xff]
        %v546 = vld [vmem:[#allocation5 + $0x7e8] sm:$0xff]
        %v547 = vld [vmem:[#allocation5 + $0x7f0] sm:$0xff]
        %v548 = vld [vmem:[#allocation5 + $0x7f8] sm:$0xff]
        %v549 = vld [vmem:[#allocation5 + $0x800] sm:$0xff]
        %v550 = vld [vmem:[#allocation5 + $0x808] sm:$0xff]
        %v551 = vld [vmem:[#allocation5 + $0x810] sm:$0xff]
        %v552 = vld [vmem:[#allocation5 + $0x818] sm:$0xff]
        %v553 = vld [vmem:[#allocation5 + $0x820] sm:$0xff]
        %v554 = vld [vmem:[#allocation5 + $0x828] sm:$0xff]
        %v555 = vld [vmem:[#allocation5 + $0x830] sm:$0xff]
        %v556 = vld [vmem:[#allocation5 + $0x838] sm:$0xff]
        %v557 = vld [vmem:[#allocation5 + $0x840] sm:$0xff]
        %v558 = vld [vmem:[#allocation5 + $0x848] sm:$0xff]
        %v559 = vld [vmem:[#allocation5 + $0x850] sm:$0xff]
        %v560 = vld [vmem:[#allocation5 + $0x858] sm:$0xff]
        %v561 = vld [vmem:[#allocation5 + $0x860] sm:$0xff]
        %v562 = vld [vmem:[#allocation5 + $0x868] sm:$0xff]
        %v563 = vld [vmem:[#allocation5 + $0x870] sm:$0xff]
        %v564 = vld [vmem:[#allocation5 + $0x878] sm:$0xff]
        %v565 = vld [vmem:[#allocation5 + $0x880] sm:$0xff]
        %v566 = vld [vmem:[#allocation5 + $0x888] sm:$0xff]
        %v567 = vld [vmem:[#allocation5 + $0x890] sm:$0xff]
        %v568 = vld [vmem:[#allocation5 + $0x898] sm:$0xff]
        %v569 = vld [vmem:[#allocation5 + $0x8a0] sm:$0xff]
        %v570 = vld [vmem:[#allocation5 + $0x8a8] sm:$0xff]
        %v571 = vld [vmem:[#allocation5 + $0x8b0] sm:$0xff]
        %v572 = vld [vmem:[#allocation5 + $0x8b8] sm:$0xff]
        %v573 = vld [vmem:[#allocation5 + $0x8c0] sm:$0xff]
        %v574 = vld [vmem:[#allocation5 + $0x8c8] sm:$0xff]
        %v575 = vld [vmem:[#allocation5 + $0x8d0] sm:$0xff]
        %v576 = vld [vmem:[#allocation5 + $0x8d8] sm:$0xff]
        %v577 = vld [vmem:[#allocation5 + $0x8e0] sm:$0xff]
        %v578 = vld [vmem:[#allocation5 + $0x8e8] sm:$0xff]
        %v579 = vld [vmem:[#allocation5 + $0x8f0] sm:$0xff]
        %v580 = vld [vmem:[#allocation5 + $0x8f8] sm:$0xff]
        %v581 = vld [vmem:[%s250] sm:$0xff]
        %v582 = vld [vmem:[%s250 + $0x8] sm:$0xff]
        %v583 = vld [vmem:[%s250 + $0x10] sm:$0xff]
        %v584 = vld [vmem:[%s250 + $0x18] sm:$0xff]
        %v585 = vld [vmem:[%s250 + $0x20] sm:$0xff]
        %v586 = vld [vmem:[%s250 + $0x28] sm:$0xff]
        %v587 = vpack.c.bf16 %v581, %v581
        %v588 = vpack.c.bf16 %v582, %v582
        %v589 = vpack.c.bf16 %v583, %v583
        %v590 = vpack.c.bf16 %v584, %v584
        %v591 = vpack.c.bf16 %v585, %v585
        %v592 = vpack.c.bf16 %v586, %v586
        %v593 = vld [vmem:[#allocation7] sm:$0x3f]
        %v595 = vlaneseq
        %v596 = vshrl.u32 %v595, 7
        %v597 = vsub.s32 0, %v596
        %v598 = vrot.slane %v593, %v597
        %v599 = vlaneseq
        %v600 = vshrl.u32 %v599, 7
        %v601 = vsub.s32 1, %v600
        %v602 = vrot.slane %v593, %v601
        %v603 = vlaneseq
        %v604 = vshrl.u32 %v603, 7
        %v605 = vsub.s32 2, %v604
        %v606 = vrot.slane %v593, %v605
        %v607 = vlaneseq
        %v608 = vshrl.u32 %v607, 7
        %v609 = vsub.s32 3, %v608
        %v610 = vrot.slane %v593, %v609
        %v611 = vlaneseq
        %v612 = vshrl.u32 %v611, 7
        %v613 = vsub.s32 4, %v612
        %v614 = vrot.slane %v593, %v613
        %v615 = vlaneseq
        %v616 = vshrl.u32 %v615, 7
        %v617 = vsub.s32 5, %v616
        %v618 = vrot.slane %v593, %v617
        %v913 = vunpack.c.l.b16 %v293
        %v914 = vunpack.c.h.b16 %v293
        %v915 = vunpack.c.l.b16 %v294
        %v916 = vunpack.c.h.b16 %v294
        %v917 = vunpack.c.l.b16 %v295
        %v918 = vunpack.c.h.b16 %v295
        %v919 = vunpack.c.l.b16 %v296
        %v920 = vunpack.c.h.b16 %v296
        %v921 = vunpack.c.l.b16 %v297
        %v922 = vunpack.c.h.b16 %v297
        %v923 = vunpack.c.l.b16 %v298
        %v924 = vunpack.c.h.b16 %v298
        %v925 = vunpack.c.l.b16 %v299
        %v926 = vunpack.c.h.b16 %v299
        %v927 = vunpack.c.l.b16 %v300
        %v928 = vunpack.c.h.b16 %v300
        %v929 = vunpack.c.l.b16 %v301
        %v930 = vunpack.c.h.b16 %v301
        %v931 = vunpack.c.l.b16 %v302
        %v932 = vunpack.c.h.b16 %v302
        %v933 = vunpack.c.l.b16 %v303
        %v934 = vunpack.c.h.b16 %v303
        %v935 = vunpack.c.l.b16 %v304
        %v936 = vunpack.c.h.b16 %v304
        %v937 = vunpack.c.l.b16 %v305
        %v938 = vunpack.c.h.b16 %v305
        %v939 = vunpack.c.l.b16 %v306
        %v940 = vunpack.c.h.b16 %v306
        %v941 = vunpack.c.l.b16 %v307
        %v942 = vunpack.c.h.b16 %v307
        %v943 = vunpack.c.l.b16 %v308
        %v944 = vunpack.c.h.b16 %v308
        %v945 = vunpack.c.l.b16 %v309
        %v946 = vunpack.c.h.b16 %v309
        %v947 = vunpack.c.l.b16 %v310
        %v948 = vunpack.c.h.b16 %v310
        %v949 = vunpack.c.l.b16 %v311
        %v950 = vunpack.c.h.b16 %v311
        %v951 = vunpack.c.l.b16 %v312
        %v952 = vunpack.c.h.b16 %v312
        %v953 = vunpack.c.l.b16 %v313
        %v954 = vunpack.c.h.b16 %v313
        %v955 = vunpack.c.l.b16 %v314
        %v956 = vunpack.c.h.b16 %v314
        %v957 = vunpack.c.l.b16 %v315
        %v958 = vunpack.c.h.b16 %v315
        %v959 = vunpack.c.l.b16 %v316
        %v960 = vunpack.c.h.b16 %v316
        %v961 = vunpack.c.l.b16 %v317
        %v962 = vunpack.c.h.b16 %v317
        %v963 = vunpack.c.l.b16 %v318
        %v964 = vunpack.c.h.b16 %v318
        %v965 = vunpack.c.l.b16 %v319
        %v966 = vunpack.c.h.b16 %v319
        %v967 = vunpack.c.l.b16 %v320
        %v968 = vunpack.c.h.b16 %v320
        %v969 = vunpack.c.l.b16 %v321
        %v970 = vunpack.c.h.b16 %v321
        %v971 = vunpack.c.l.b16 %v322
        %v972 = vunpack.c.h.b16 %v322
        %v973 = vunpack.c.l.b16 %v323
        %v974 = vunpack.c.h.b16 %v323
        %v975 = vunpack.c.l.b16 %v324
        %v976 = vunpack.c.h.b16 %v324
        %v977 = vunpack.c.l.b16 %v325
        %v978 = vunpack.c.h.b16 %v325
        %v979 = vunpack.c.l.b16 %v326
        %v980 = vunpack.c.h.b16 %v326
        %v981 = vunpack.c.l.b16 %v327
        %v982 = vunpack.c.h.b16 %v327
        %v983 = vunpack.c.l.b16 %v328
        %v984 = vunpack.c.h.b16 %v328
        %v985 = vunpack.c.l.b16 %v329
        %v986 = vunpack.c.h.b16 %v329
        %v987 = vunpack.c.l.b16 %v330
        %v988 = vunpack.c.h.b16 %v330
        %v989 = vunpack.c.l.b16 %v331
        %v990 = vunpack.c.h.b16 %v331
        %v991 = vunpack.c.l.b16 %v332
        %v992 = vunpack.c.h.b16 %v332
        %v993 = vunpack.c.l.b16 %v333
        %v994 = vunpack.c.h.b16 %v333
        %v995 = vunpack.c.l.b16 %v334
        %v996 = vunpack.c.h.b16 %v334
        %v997 = vunpack.c.l.b16 %v335
        %v998 = vunpack.c.h.b16 %v335
        %v999 = vunpack.c.l.b16 %v336
        %v1000 = vunpack.c.h.b16 %v336
        %v1001 = vunpack.c.l.b16 %v337
        %v1002 = vunpack.c.h.b16 %v337
        %v1003 = vunpack.c.l.b16 %v338
        %v1004 = vunpack.c.h.b16 %v338
        %v1005 = vunpack.c.l.b16 %v339
        %v1006 = vunpack.c.h.b16 %v339
        %v1007 = vunpack.c.l.b16 %v340
        %v1008 = vunpack.c.h.b16 %v340
        %v1009 = vunpack.c.l.b16 %v341
        %v1010 = vunpack.c.h.b16 %v341
        %v1011 = vunpack.c.l.b16 %v342
        %v1012 = vunpack.c.h.b16 %v342
        %v1013 = vunpack.c.l.b16 %v343
        %v1014 = vunpack.c.h.b16 %v343
        %v1015 = vunpack.c.l.b16 %v344
        %v1016 = vunpack.c.h.b16 %v344
        %v1017 = vunpack.c.l.b16 %v345
        %v1018 = vunpack.c.h.b16 %v345
        %v1019 = vunpack.c.l.b16 %v346
        %v1020 = vunpack.c.h.b16 %v346
        %v1021 = vunpack.c.l.b16 %v347
        %v1022 = vunpack.c.h.b16 %v347
        %v1023 = vunpack.c.l.b16 %v348
        %v1024 = vunpack.c.h.b16 %v348
        %v1025 = vunpack.c.l.b16 %v349
        %v1026 = vunpack.c.h.b16 %v349
        %v1027 = vunpack.c.l.b16 %v350
        %v1028 = vunpack.c.h.b16 %v350
        %v1029 = vunpack.c.l.b16 %v351
        %v1030 = vunpack.c.h.b16 %v351
        %v1031 = vunpack.c.l.b16 %v352
        %v1032 = vunpack.c.h.b16 %v352
        %v1033 = vunpack.c.l.b16 %v353
        %v1034 = vunpack.c.h.b16 %v353
        %v1035 = vunpack.c.l.b16 %v354
        %v1036 = vunpack.c.h.b16 %v354
        %v1037 = vunpack.c.l.b16 %v355
        %v1038 = vunpack.c.h.b16 %v355
        %v1039 = vunpack.c.l.b16 %v356
        %v1040 = vunpack.c.h.b16 %v356
        %v1041 = vunpack.c.l.b16 %v357
        %v1042 = vunpack.c.h.b16 %v357
        %v1043 = vunpack.c.l.b16 %v358
        %v1044 = vunpack.c.h.b16 %v358
        %v1045 = vunpack.c.l.b16 %v359
        %v1046 = vunpack.c.h.b16 %v359
        %v1047 = vunpack.c.l.b16 %v360
        %v1048 = vunpack.c.h.b16 %v360
        %v1049 = vunpack.c.l.b16 %v361
        %v1050 = vunpack.c.h.b16 %v361
        %v1051 = vunpack.c.l.b16 %v362
        %v1052 = vunpack.c.h.b16 %v362
        %v1053 = vunpack.c.l.b16 %v363
        %v1054 = vunpack.c.h.b16 %v363
        %v1055 = vunpack.c.l.b16 %v364
        %v1056 = vunpack.c.h.b16 %v364
        %v1057 = vunpack.c.l.b16 %v365
        %v1058 = vunpack.c.h.b16 %v365
        %v1059 = vunpack.c.l.b16 %v366
        %v1060 = vunpack.c.h.b16 %v366
        %v1061 = vunpack.c.l.b16 %v367
        %v1062 = vunpack.c.h.b16 %v367
        %v1063 = vunpack.c.l.b16 %v368
        %v1064 = vunpack.c.h.b16 %v368
        %v1065 = vunpack.c.l.b16 %v369
        %v1066 = vunpack.c.h.b16 %v369
        %v1067 = vunpack.c.l.b16 %v370
        %v1068 = vunpack.c.h.b16 %v370
        %v1069 = vunpack.c.l.b16 %v371
        %v1070 = vunpack.c.h.b16 %v371
        %v1071 = vunpack.c.l.b16 %v372
        %v1072 = vunpack.c.h.b16 %v372
        %v1073 = vunpack.c.l.b16 %v373
        %v1074 = vunpack.c.h.b16 %v373
        %v1075 = vunpack.c.l.b16 %v374
        %v1076 = vunpack.c.h.b16 %v374
        %v1077 = vunpack.c.l.b16 %v375
        %v1078 = vunpack.c.h.b16 %v375
        %v1079 = vunpack.c.l.b16 %v376
        %v1080 = vunpack.c.h.b16 %v376
        %v1081 = vunpack.c.l.b16 %v377
        %v1082 = vunpack.c.h.b16 %v377
        %v1083 = vunpack.c.l.b16 %v378
        %v1084 = vunpack.c.h.b16 %v378
        %v1085 = vunpack.c.l.b16 %v379
        %v1086 = vunpack.c.h.b16 %v379
        %v1087 = vunpack.c.l.b16 %v380
        %v1088 = vunpack.c.h.b16 %v380
        %v1089 = vunpack.c.l.b16 %v381
        %v1090 = vunpack.c.h.b16 %v381
        %v1091 = vunpack.c.l.b16 %v382
        %v1092 = vunpack.c.h.b16 %v382
        %v1093 = vunpack.c.l.b16 %v383
        %v1094 = vunpack.c.h.b16 %v383
        %v1095 = vunpack.c.l.b16 %v384
        %v1096 = vunpack.c.h.b16 %v384
        %v1097 = vunpack.c.l.b16 %v385
        %v1098 = vunpack.c.h.b16 %v385
        %v1099 = vunpack.c.l.b16 %v386
        %v1100 = vunpack.c.h.b16 %v386
        %v1101 = vunpack.c.l.b16 %v387
        %v1102 = vunpack.c.h.b16 %v387
        %v1103 = vunpack.c.l.b16 %v388
        %v1104 = vunpack.c.h.b16 %v388
        %v1105 = vunpack.c.l.b16 %v389
        %v1106 = vunpack.c.h.b16 %v389
        %v1107 = vunpack.c.l.b16 %v390
        %v1108 = vunpack.c.h.b16 %v390
        %v1109 = vunpack.c.l.b16 %v391
        %v1110 = vunpack.c.h.b16 %v391
        %v1111 = vunpack.c.l.b16 %v392
        %v1112 = vunpack.c.h.b16 %v392
        %v1113 = vunpack.c.l.b16 %v393
        %v1114 = vunpack.c.h.b16 %v393
        %v1115 = vunpack.c.l.b16 %v394
        %v1116 = vunpack.c.h.b16 %v394
        %v1117 = vunpack.c.l.b16 %v395
        %v1118 = vunpack.c.h.b16 %v395
        %v1119 = vunpack.c.l.b16 %v396
        %v1120 = vunpack.c.h.b16 %v396
        %v1121 = vunpack.c.l.b16 %v397
        %v1122 = vunpack.c.h.b16 %v397
        %v1123 = vunpack.c.l.b16 %v398
        %v1124 = vunpack.c.h.b16 %v398
        %v1125 = vunpack.c.l.b16 %v399
        %v1126 = vunpack.c.h.b16 %v399
        %v1127 = vunpack.c.l.b16 %v400
        %v1128 = vunpack.c.h.b16 %v400
        %v1129 = vunpack.c.l.b16 %v401
        %v1130 = vunpack.c.h.b16 %v401
        %v1131 = vunpack.c.l.b16 %v402
        %v1132 = vunpack.c.h.b16 %v402
        %v1133 = vunpack.c.l.b16 %v403
        %v1134 = vunpack.c.h.b16 %v403
        %v1135 = vunpack.c.l.b16 %v404
        %v1136 = vunpack.c.h.b16 %v404
        %v1137 = vunpack.c.l.b16 %v405
        %v1138 = vunpack.c.h.b16 %v405
        %v1139 = vunpack.c.l.b16 %v406
        %v1140 = vunpack.c.h.b16 %v406
        %v1141 = vunpack.c.l.b16 %v407
        %v1142 = vunpack.c.h.b16 %v407
        %v1143 = vunpack.c.l.b16 %v408
        %v1144 = vunpack.c.h.b16 %v408
        %v1145 = vunpack.c.l.b16 %v409
        %v1146 = vunpack.c.h.b16 %v409
        %v1147 = vunpack.c.l.b16 %v410
        %v1148 = vunpack.c.h.b16 %v410
        %v1149 = vunpack.c.l.b16 %v411
        %v1150 = vunpack.c.h.b16 %v411
        %v1151 = vunpack.c.l.b16 %v412
        %v1152 = vunpack.c.h.b16 %v412
        %v1153 = vunpack.c.l.b16 %v413
        %v1154 = vunpack.c.h.b16 %v413
        %v1155 = vunpack.c.l.b16 %v414
        %v1156 = vunpack.c.h.b16 %v414
        %v1157 = vunpack.c.l.b16 %v415
        %v1158 = vunpack.c.h.b16 %v415
        %v1159 = vunpack.c.l.b16 %v416
        %v1160 = vunpack.c.h.b16 %v416
        %v1161 = vunpack.c.l.b16 %v417
        %v1162 = vunpack.c.h.b16 %v417
        %v1163 = vunpack.c.l.b16 %v418
        %v1164 = vunpack.c.h.b16 %v418
        %v1165 = vunpack.c.l.b16 %v419
        %v1166 = vunpack.c.h.b16 %v419
        %v1167 = vunpack.c.l.b16 %v420
        %v1168 = vunpack.c.h.b16 %v420
        %v1169 = vunpack.c.l.b16 %v421
        %v1170 = vunpack.c.h.b16 %v421
        %v1171 = vunpack.c.l.b16 %v422
        %v1172 = vunpack.c.h.b16 %v422
        %v1173 = vunpack.c.l.b16 %v423
        %v1174 = vunpack.c.h.b16 %v423
        %v1175 = vunpack.c.l.b16 %v424
        %v1176 = vunpack.c.h.b16 %v424
        %v1177 = vunpack.c.l.b16 %v425
        %v1178 = vunpack.c.h.b16 %v425
        %v1179 = vunpack.c.l.b16 %v426
        %v1180 = vunpack.c.h.b16 %v426
        %v1181 = vunpack.c.l.b16 %v427
        %v1182 = vunpack.c.h.b16 %v427
        %v1183 = vunpack.c.l.b16 %v428
        %v1184 = vunpack.c.h.b16 %v428
        %v1185 = vunpack.c.l.b16 %v429
        %v1186 = vunpack.c.h.b16 %v429
        %v1187 = vunpack.c.l.b16 %v430
        %v1188 = vunpack.c.h.b16 %v430
        %v1189 = vunpack.c.l.b16 %v431
        %v1190 = vunpack.c.h.b16 %v431
        %v1191 = vunpack.c.l.b16 %v432
        %v1192 = vunpack.c.h.b16 %v432
        %v1193 = vunpack.c.l.b16 %v433
        %v1194 = vunpack.c.h.b16 %v433
        %v1195 = vunpack.c.l.b16 %v434
        %v1196 = vunpack.c.h.b16 %v434
        %v1197 = vunpack.c.l.b16 %v435
        %v1198 = vunpack.c.h.b16 %v435
        %v1199 = vunpack.c.l.b16 %v436
        %v1200 = vunpack.c.h.b16 %v436
        %v1201 = vunpack.c.l.b16 %v437
        %v1202 = vunpack.c.h.b16 %v437
        %v1203 = vunpack.c.l.b16 %v438
        %v1204 = vunpack.c.h.b16 %v438
        %v1205 = vunpack.c.l.b16 %v439
        %v1206 = vunpack.c.h.b16 %v439
        %v1207 = vunpack.c.l.b16 %v440
        %v1208 = vunpack.c.h.b16 %v440
        %v1209 = vunpack.c.l.b16 %v441
        %v1210 = vunpack.c.h.b16 %v441
        %v1211 = vunpack.c.l.b16 %v442
        %v1212 = vunpack.c.h.b16 %v442
        %v1213 = vunpack.c.l.b16 %v443
        %v1214 = vunpack.c.h.b16 %v443
        %v1215 = vunpack.c.l.b16 %v444
        %v1216 = vunpack.c.h.b16 %v444
        %v1217 = vunpack.c.l.b16 %v445
        %v1218 = vunpack.c.h.b16 %v445
        %v1219 = vunpack.c.l.b16 %v446
        %v1220 = vunpack.c.h.b16 %v446
        %v1221 = vunpack.c.l.b16 %v447
        %v1222 = vunpack.c.h.b16 %v447
        %v1223 = vunpack.c.l.b16 %v448
        %v1224 = vunpack.c.h.b16 %v448
        %v1225 = vunpack.c.l.b16 %v449
        %v1226 = vunpack.c.h.b16 %v449
        %v1227 = vunpack.c.l.b16 %v450
        %v1228 = vunpack.c.h.b16 %v450
        %v1229 = vunpack.c.l.b16 %v451
        %v1230 = vunpack.c.h.b16 %v451
        %v1231 = vunpack.c.l.b16 %v452
        %v1232 = vunpack.c.h.b16 %v452
        %v1233 = vunpack.c.l.b16 %v453
        %v1234 = vunpack.c.h.b16 %v453
        %v1235 = vunpack.c.l.b16 %v454
        %v1236 = vunpack.c.h.b16 %v454
        %v1237 = vunpack.c.l.b16 %v455
        %v1238 = vunpack.c.h.b16 %v455
        %v1239 = vunpack.c.l.b16 %v456
        %v1240 = vunpack.c.h.b16 %v456
        %v1241 = vunpack.c.l.b16 %v457
        %v1242 = vunpack.c.h.b16 %v457
        %v1243 = vunpack.c.l.b16 %v458
        %v1244 = vunpack.c.h.b16 %v458
        %v1245 = vunpack.c.l.b16 %v459
        %v1246 = vunpack.c.h.b16 %v459
        %v1247 = vunpack.c.l.b16 %v460
        %v1248 = vunpack.c.h.b16 %v460
        %v1249 = vunpack.c.l.b16 %v461
        %v1250 = vunpack.c.h.b16 %v461
        %v1251 = vunpack.c.l.b16 %v462
        %v1252 = vunpack.c.h.b16 %v462
        %v1253 = vunpack.c.l.b16 %v463
        %v1254 = vunpack.c.h.b16 %v463
        %v1255 = vunpack.c.l.b16 %v464
        %v1256 = vunpack.c.h.b16 %v464
        %v1257 = vunpack.c.l.b16 %v465
        %v1258 = vunpack.c.h.b16 %v465
        %v1259 = vunpack.c.l.b16 %v466
        %v1260 = vunpack.c.h.b16 %v466
        %v1261 = vunpack.c.l.b16 %v467
        %v1262 = vunpack.c.h.b16 %v467
        %v1263 = vunpack.c.l.b16 %v468
        %v1264 = vunpack.c.h.b16 %v468
        %v1265 = vunpack.c.l.b16 %v469
        %v1266 = vunpack.c.h.b16 %v469
        %v1267 = vunpack.c.l.b16 %v470
        %v1268 = vunpack.c.h.b16 %v470
        %v1269 = vunpack.c.l.b16 %v471
        %v1270 = vunpack.c.h.b16 %v471
        %v1271 = vunpack.c.l.b16 %v472
        %v1272 = vunpack.c.h.b16 %v472
        %v1273 = vunpack.c.l.b16 %v473
        %v1274 = vunpack.c.h.b16 %v473
        %v1275 = vunpack.c.l.b16 %v474
        %v1276 = vunpack.c.h.b16 %v474
        %v1277 = vunpack.c.l.b16 %v475
        %v1278 = vunpack.c.h.b16 %v475
        %v1279 = vunpack.c.l.b16 %v476
        %v1280 = vunpack.c.h.b16 %v476
        %v1281 = vunpack.c.l.b16 %v477
        %v1282 = vunpack.c.h.b16 %v477
        %v1283 = vunpack.c.l.b16 %v478
        %v1284 = vunpack.c.h.b16 %v478
        %v1285 = vunpack.c.l.b16 %v479
        %v1286 = vunpack.c.h.b16 %v479
        %v1287 = vunpack.c.l.b16 %v480
        %v1288 = vunpack.c.h.b16 %v480
        %v1289 = vunpack.c.l.b16 %v481
        %v1290 = vunpack.c.h.b16 %v481
        %v1291 = vunpack.c.l.b16 %v482
        %v1292 = vunpack.c.h.b16 %v482
        %v1293 = vunpack.c.l.b16 %v483
        %v1294 = vunpack.c.h.b16 %v483
        %v1295 = vunpack.c.l.b16 %v484
        %v1296 = vunpack.c.h.b16 %v484
        %v1297 = vunpack.c.l.b16 %v485
        %v1298 = vunpack.c.h.b16 %v485
        %v1299 = vunpack.c.l.b16 %v486
        %v1300 = vunpack.c.h.b16 %v486
        %v1301 = vunpack.c.l.b16 %v487
        %v1302 = vunpack.c.h.b16 %v487
        %v1303 = vunpack.c.l.b16 %v488
        %v1304 = vunpack.c.h.b16 %v488
        %v1305 = vunpack.c.l.b16 %v489
        %v1306 = vunpack.c.h.b16 %v489
        %v1307 = vunpack.c.l.b16 %v490
        %v1308 = vunpack.c.h.b16 %v490
        %v1309 = vunpack.c.l.b16 %v491
        %v1310 = vunpack.c.h.b16 %v491
        %v1311 = vunpack.c.l.b16 %v492
        %v1312 = vunpack.c.h.b16 %v492
        %v1313 = vunpack.c.l.b16 %v493
        %v1314 = vunpack.c.h.b16 %v493
        %v1315 = vunpack.c.l.b16 %v494
        %v1316 = vunpack.c.h.b16 %v494
        %v1317 = vunpack.c.l.b16 %v495
        %v1318 = vunpack.c.h.b16 %v495
        %v1319 = vunpack.c.l.b16 %v496
        %v1320 = vunpack.c.h.b16 %v496
        %v1321 = vunpack.c.l.b16 %v497
        %v1322 = vunpack.c.h.b16 %v497
        %v1323 = vunpack.c.l.b16 %v498
        %v1324 = vunpack.c.h.b16 %v498
        %v1325 = vunpack.c.l.b16 %v499
        %v1326 = vunpack.c.h.b16 %v499
        %v1327 = vunpack.c.l.b16 %v500
        %v1328 = vunpack.c.h.b16 %v500
        %v1329 = vunpack.c.l.b16 %v501
        %v1330 = vunpack.c.h.b16 %v501
        %v1331 = vunpack.c.l.b16 %v502
        %v1332 = vunpack.c.h.b16 %v502
        %v1333 = vunpack.c.l.b16 %v503
        %v1334 = vunpack.c.h.b16 %v503
        %v1335 = vunpack.c.l.b16 %v504
        %v1336 = vunpack.c.h.b16 %v504
        %v1337 = vunpack.c.l.b16 %v505
        %v1338 = vunpack.c.h.b16 %v505
        %v1339 = vunpack.c.l.b16 %v506
        %v1340 = vunpack.c.h.b16 %v506
        %v1341 = vunpack.c.l.b16 %v507
        %v1342 = vunpack.c.h.b16 %v507
        %v1343 = vunpack.c.l.b16 %v508
        %v1344 = vunpack.c.h.b16 %v508
        %v1345 = vunpack.c.l.b16 %v509
        %v1346 = vunpack.c.h.b16 %v509
        %v1347 = vunpack.c.l.b16 %v510
        %v1348 = vunpack.c.h.b16 %v510
        %v1349 = vunpack.c.l.b16 %v511
        %v1350 = vunpack.c.h.b16 %v511
        %v1351 = vunpack.c.l.b16 %v512
        %v1352 = vunpack.c.h.b16 %v512
        %v1353 = vunpack.c.l.b16 %v513
        %v1354 = vunpack.c.h.b16 %v513
        %v1355 = vunpack.c.l.b16 %v514
        %v1356 = vunpack.c.h.b16 %v514
        %v1357 = vunpack.c.l.b16 %v515
        %v1358 = vunpack.c.h.b16 %v515
        %v1359 = vunpack.c.l.b16 %v516
        %v1360 = vunpack.c.h.b16 %v516
        %v1361 = vunpack.c.l.b16 %v517
        %v1362 = vunpack.c.h.b16 %v517
        %v1363 = vunpack.c.l.b16 %v518
        %v1364 = vunpack.c.h.b16 %v518
        %v1365 = vunpack.c.l.b16 %v519
        %v1366 = vunpack.c.h.b16 %v519
        %v1367 = vunpack.c.l.b16 %v520
        %v1368 = vunpack.c.h.b16 %v520
        %v1369 = vunpack.c.l.b16 %v521
        %v1370 = vunpack.c.h.b16 %v521
        %v1371 = vunpack.c.l.b16 %v522
        %v1372 = vunpack.c.h.b16 %v522
        %v1373 = vunpack.c.l.b16 %v523
        %v1374 = vunpack.c.h.b16 %v523
        %v1375 = vunpack.c.l.b16 %v524
        %v1376 = vunpack.c.h.b16 %v524
        %v1377 = vunpack.c.l.b16 %v525
        %v1378 = vunpack.c.h.b16 %v525
        %v1379 = vunpack.c.l.b16 %v526
        %v1380 = vunpack.c.h.b16 %v526
        %v1381 = vunpack.c.l.b16 %v527
        %v1382 = vunpack.c.h.b16 %v527
        %v1383 = vunpack.c.l.b16 %v528
        %v1384 = vunpack.c.h.b16 %v528
        %v1385 = vunpack.c.l.b16 %v529
        %v1386 = vunpack.c.h.b16 %v529
        %v1387 = vunpack.c.l.b16 %v530
        %v1388 = vunpack.c.h.b16 %v530
        %v1389 = vunpack.c.l.b16 %v531
        %v1390 = vunpack.c.h.b16 %v531
        %v1391 = vunpack.c.l.b16 %v532
        %v1392 = vunpack.c.h.b16 %v532
        %v1393 = vunpack.c.l.b16 %v533
        %v1394 = vunpack.c.h.b16 %v533
        %v1395 = vunpack.c.l.b16 %v534
        %v1396 = vunpack.c.h.b16 %v534
        %v1397 = vunpack.c.l.b16 %v535
        %v1398 = vunpack.c.h.b16 %v535
        %v1399 = vunpack.c.l.b16 %v536
        %v1400 = vunpack.c.h.b16 %v536
        %v1401 = vunpack.c.l.b16 %v537
        %v1402 = vunpack.c.h.b16 %v537
        %v1403 = vunpack.c.l.b16 %v538
        %v1404 = vunpack.c.h.b16 %v538
        %v1405 = vunpack.c.l.b16 %v539
        %v1406 = vunpack.c.h.b16 %v539
        %v1407 = vunpack.c.l.b16 %v540
        %v1408 = vunpack.c.h.b16 %v540
        %v1409 = vunpack.c.l.b16 %v541
        %v1410 = vunpack.c.h.b16 %v541
        %v1411 = vunpack.c.l.b16 %v542
        %v1412 = vunpack.c.h.b16 %v542
        %v1413 = vunpack.c.l.b16 %v543
        %v1414 = vunpack.c.h.b16 %v543
        %v1415 = vunpack.c.l.b16 %v544
        %v1416 = vunpack.c.h.b16 %v544
        %v1417 = vunpack.c.l.b16 %v545
        %v1418 = vunpack.c.h.b16 %v545
        %v1419 = vunpack.c.l.b16 %v546
        %v1420 = vunpack.c.h.b16 %v546
        %v1421 = vunpack.c.l.b16 %v547
        %v1422 = vunpack.c.h.b16 %v547
        %v1423 = vunpack.c.l.b16 %v548
        %v1424 = vunpack.c.h.b16 %v548
        %v1425 = vunpack.c.l.b16 %v549
        %v1426 = vunpack.c.h.b16 %v549
        %v1427 = vunpack.c.l.b16 %v550
        %v1428 = vunpack.c.h.b16 %v550
        %v1429 = vunpack.c.l.b16 %v551
        %v1430 = vunpack.c.h.b16 %v551
        %v1431 = vunpack.c.l.b16 %v552
        %v1432 = vunpack.c.h.b16 %v552
        %v1433 = vunpack.c.l.b16 %v553
        %v1434 = vunpack.c.h.b16 %v553
        %v1435 = vunpack.c.l.b16 %v554
        %v1436 = vunpack.c.h.b16 %v554
        %v1437 = vunpack.c.l.b16 %v555
        %v1438 = vunpack.c.h.b16 %v555
        %v1439 = vunpack.c.l.b16 %v556
        %v1440 = vunpack.c.h.b16 %v556
        %v1441 = vunpack.c.l.b16 %v557
        %v1442 = vunpack.c.h.b16 %v557
        %v1443 = vunpack.c.l.b16 %v558
        %v1444 = vunpack.c.h.b16 %v558
        %v1445 = vunpack.c.l.b16 %v559
        %v1446 = vunpack.c.h.b16 %v559
        %v1447 = vunpack.c.l.b16 %v560
        %v1448 = vunpack.c.h.b16 %v560
        %v1449 = vunpack.c.l.b16 %v561
        %v1450 = vunpack.c.h.b16 %v561
        %v1451 = vunpack.c.l.b16 %v562
        %v1452 = vunpack.c.h.b16 %v562
        %v1453 = vunpack.c.l.b16 %v563
        %v1454 = vunpack.c.h.b16 %v563
        %v1455 = vunpack.c.l.b16 %v564
        %v1456 = vunpack.c.h.b16 %v564
        %v1457 = vunpack.c.l.b16 %v565
        %v1458 = vunpack.c.h.b16 %v565
        %v1459 = vunpack.c.l.b16 %v566
        %v1460 = vunpack.c.h.b16 %v566
        %v1461 = vunpack.c.l.b16 %v567
        %v1462 = vunpack.c.h.b16 %v567
        %v1463 = vunpack.c.l.b16 %v568
        %v1464 = vunpack.c.h.b16 %v568
        %v1465 = vunpack.c.l.b16 %v569
        %v1466 = vunpack.c.h.b16 %v569
        %v1467 = vunpack.c.l.b16 %v570
        %v1468 = vunpack.c.h.b16 %v570
        %v1469 = vunpack.c.l.b16 %v571
        %v1470 = vunpack.c.h.b16 %v571
        %v1471 = vunpack.c.l.b16 %v572
        %v1472 = vunpack.c.h.b16 %v572
        %v1473 = vunpack.c.l.b16 %v573
        %v1474 = vunpack.c.h.b16 %v573
        %v1475 = vunpack.c.l.b16 %v574
        %v1476 = vunpack.c.h.b16 %v574
        %v1477 = vunpack.c.l.b16 %v575
        %v1478 = vunpack.c.h.b16 %v575
        %v1479 = vunpack.c.l.b16 %v576
        %v1480 = vunpack.c.h.b16 %v576
        %v1481 = vunpack.c.l.b16 %v577
        %v1482 = vunpack.c.h.b16 %v577
        %v1483 = vunpack.c.l.b16 %v578
        %v1484 = vunpack.c.h.b16 %v578
        %v1485 = vunpack.c.l.b16 %v579
        %v1486 = vunpack.c.h.b16 %v579
        %v1487 = vunpack.c.l.b16 %v580
        %v1488 = vunpack.c.h.b16 %v580
        %v1489 = vpack.c.b16 %v919, %v913
        %v1490 = vpack.c.b16 %v920, %v914
        %v1491 = vpack.c.b16 %v921, %v915
        %v1492 = vpack.c.b16 %v922, %v916
        %v1493 = vpack.c.b16 %v923, %v917
        %v1494 = vpack.c.b16 %v924, %v918
        %v1495 = vpack.c.b16 %v931, %v925
        %v1496 = vpack.c.b16 %v932, %v926
        %v1497 = vpack.c.b16 %v933, %v927
        %v1498 = vpack.c.b16 %v934, %v928
        %v1499 = vpack.c.b16 %v935, %v929
        %v1500 = vpack.c.b16 %v936, %v930
        %v1501 = vpack.c.b16 %v943, %v937
        %v1502 = vpack.c.b16 %v944, %v938
        %v1503 = vpack.c.b16 %v945, %v939
        %v1504 = vpack.c.b16 %v946, %v940
        %v1505 = vpack.c.b16 %v947, %v941
        %v1506 = vpack.c.b16 %v948, %v942
        %v1507 = vpack.c.b16 %v955, %v949
        %v1508 = vpack.c.b16 %v956, %v950
        %v1509 = vpack.c.b16 %v957, %v951
        %v1510 = vpack.c.b16 %v958, %v952
        %v1511 = vpack.c.b16 %v959, %v953
        %v1512 = vpack.c.b16 %v960, %v954
        %v1513 = vpack.c.b16 %v967, %v961
        %v1514 = vpack.c.b16 %v968, %v962
        %v1515 = vpack.c.b16 %v969, %v963
        %v1516 = vpack.c.b16 %v970, %v964
        %v1517 = vpack.c.b16 %v971, %v965
        %v1518 = vpack.c.b16 %v972, %v966
        %v1519 = vpack.c.b16 %v979, %v973
        %v1520 = vpack.c.b16 %v980, %v974
        %v1521 = vpack.c.b16 %v981, %v975
        %v1522 = vpack.c.b16 %v982, %v976
        %v1523 = vpack.c.b16 %v983, %v977
        %v1524 = vpack.c.b16 %v984, %v978
        %v1525 = vpack.c.b16 %v991, %v985
        %v1526 = vpack.c.b16 %v992, %v986
        %v1527 = vpack.c.b16 %v993, %v987
        %v1528 = vpack.c.b16 %v994, %v988
        %v1529 = vpack.c.b16 %v995, %v989
        %v1530 = vpack.c.b16 %v996, %v990
        %v1531 = vpack.c.b16 %v1003, %v997
        %v1532 = vpack.c.b16 %v1004, %v998
        %v1533 = vpack.c.b16 %v1005, %v999
        %v1534 = vpack.c.b16 %v1006, %v1000
        %v1535 = vpack.c.b16 %v1007, %v1001
        %v1536 = vpack.c.b16 %v1008, %v1002
        %v1537 = vpack.c.b16 %v1015, %v1009
        %v1538 = vpack.c.b16 %v1016, %v1010
        %v1539 = vpack.c.b16 %v1017, %v1011
        %v1540 = vpack.c.b16 %v1018, %v1012
        %v1541 = vpack.c.b16 %v1019, %v1013
        %v1542 = vpack.c.b16 %v1020, %v1014
        %v1543 = vpack.c.b16 %v1027, %v1021
        %v1544 = vpack.c.b16 %v1028, %v1022
        %v1545 = vpack.c.b16 %v1029, %v1023
        %v1546 = vpack.c.b16 %v1030, %v1024
        %v1547 = vpack.c.b16 %v1031, %v1025
        %v1548 = vpack.c.b16 %v1032, %v1026
        %v1549 = vpack.c.b16 %v1039, %v1033
        %v1550 = vpack.c.b16 %v1040, %v1034
        %v1551 = vpack.c.b16 %v1041, %v1035
        %v1552 = vpack.c.b16 %v1042, %v1036
        %v1553 = vpack.c.b16 %v1043, %v1037
        %v1554 = vpack.c.b16 %v1044, %v1038
        %v1555 = vpack.c.b16 %v1051, %v1045
        %v1556 = vpack.c.b16 %v1052, %v1046
        %v1557 = vpack.c.b16 %v1053, %v1047
        %v1558 = vpack.c.b16 %v1054, %v1048
        %v1559 = vpack.c.b16 %v1055, %v1049
        %v1560 = vpack.c.b16 %v1056, %v1050
        %v1561 = vpack.c.b16 %v1063, %v1057
        %v1562 = vpack.c.b16 %v1064, %v1058
        %v1563 = vpack.c.b16 %v1065, %v1059
        %v1564 = vpack.c.b16 %v1066, %v1060
        %v1565 = vpack.c.b16 %v1067, %v1061
        %v1566 = vpack.c.b16 %v1068, %v1062
        %v1567 = vpack.c.b16 %v1075, %v1069
        %v1568 = vpack.c.b16 %v1076, %v1070
        %v1569 = vpack.c.b16 %v1077, %v1071
        %v1570 = vpack.c.b16 %v1078, %v1072
        %v1571 = vpack.c.b16 %v1079, %v1073
        %v1572 = vpack.c.b16 %v1080, %v1074
        %v1573 = vpack.c.b16 %v1087, %v1081
        %v1574 = vpack.c.b16 %v1088, %v1082
        %v1575 = vpack.c.b16 %v1089, %v1083
        %v1576 = vpack.c.b16 %v1090, %v1084
        %v1577 = vpack.c.b16 %v1091, %v1085
        %v1578 = vpack.c.b16 %v1092, %v1086
        %v1579 = vpack.c.b16 %v1099, %v1093
        %v1580 = vpack.c.b16 %v1100, %v1094
        %v1581 = vpack.c.b16 %v1101, %v1095
        %v1582 = vpack.c.b16 %v1102, %v1096
        %v1583 = vpack.c.b16 %v1103, %v1097
        %v1584 = vpack.c.b16 %v1104, %v1098
        %v1585 = vpack.c.b16 %v1111, %v1105
        %v1586 = vpack.c.b16 %v1112, %v1106
        %v1587 = vpack.c.b16 %v1113, %v1107
        %v1588 = vpack.c.b16 %v1114, %v1108
        %v1589 = vpack.c.b16 %v1115, %v1109
        %v1590 = vpack.c.b16 %v1116, %v1110
        %v1591 = vpack.c.b16 %v1123, %v1117
        %v1592 = vpack.c.b16 %v1124, %v1118
        %v1593 = vpack.c.b16 %v1125, %v1119
        %v1594 = vpack.c.b16 %v1126, %v1120
        %v1595 = vpack.c.b16 %v1127, %v1121
        %v1596 = vpack.c.b16 %v1128, %v1122
        %v1597 = vpack.c.b16 %v1135, %v1129
        %v1598 = vpack.c.b16 %v1136, %v1130
        %v1599 = vpack.c.b16 %v1137, %v1131
        %v1600 = vpack.c.b16 %v1138, %v1132
        %v1601 = vpack.c.b16 %v1139, %v1133
        %v1602 = vpack.c.b16 %v1140, %v1134
        %v1603 = vpack.c.b16 %v1147, %v1141
        %v1604 = vpack.c.b16 %v1148, %v1142
        %v1605 = vpack.c.b16 %v1149, %v1143
        %v1606 = vpack.c.b16 %v1150, %v1144
        %v1607 = vpack.c.b16 %v1151, %v1145
        %v1608 = vpack.c.b16 %v1152, %v1146
        %v1609 = vpack.c.b16 %v1159, %v1153
        %v1610 = vpack.c.b16 %v1160, %v1154
        %v1611 = vpack.c.b16 %v1161, %v1155
        %v1612 = vpack.c.b16 %v1162, %v1156
        %v1613 = vpack.c.b16 %v1163, %v1157
        %v1614 = vpack.c.b16 %v1164, %v1158
        %v1615 = vpack.c.b16 %v1171, %v1165
        %v1616 = vpack.c.b16 %v1172, %v1166
        %v1617 = vpack.c.b16 %v1173, %v1167
        %v1618 = vpack.c.b16 %v1174, %v1168
        %v1619 = vpack.c.b16 %v1175, %v1169
        %v1620 = vpack.c.b16 %v1176, %v1170
        %v1621 = vpack.c.b16 %v1183, %v1177
        %v1622 = vpack.c.b16 %v1184, %v1178
        %v1623 = vpack.c.b16 %v1185, %v1179
        %v1624 = vpack.c.b16 %v1186, %v1180
        %v1625 = vpack.c.b16 %v1187, %v1181
        %v1626 = vpack.c.b16 %v1188, %v1182
        %v1627 = vpack.c.b16 %v1195, %v1189
        %v1628 = vpack.c.b16 %v1196, %v1190
        %v1629 = vpack.c.b16 %v1197, %v1191
        %v1630 = vpack.c.b16 %v1198, %v1192
        %v1631 = vpack.c.b16 %v1199, %v1193
        %v1632 = vpack.c.b16 %v1200, %v1194
        %v1633 = vpack.c.b16 %v1207, %v1201
        %v1634 = vpack.c.b16 %v1208, %v1202
        %v1635 = vpack.c.b16 %v1209, %v1203
        %v1636 = vpack.c.b16 %v1210, %v1204
        %v1637 = vpack.c.b16 %v1211, %v1205
        %v1638 = vpack.c.b16 %v1212, %v1206
        %v1639 = vpack.c.b16 %v1219, %v1213
        %v1640 = vpack.c.b16 %v1220, %v1214
        %v1641 = vpack.c.b16 %v1221, %v1215
        %v1642 = vpack.c.b16 %v1222, %v1216
        %v1643 = vpack.c.b16 %v1223, %v1217
        %v1644 = vpack.c.b16 %v1224, %v1218
        %v1645 = vpack.c.b16 %v1231, %v1225
        %v1646 = vpack.c.b16 %v1232, %v1226
        %v1647 = vpack.c.b16 %v1233, %v1227
        %v1648 = vpack.c.b16 %v1234, %v1228
        %v1649 = vpack.c.b16 %v1235, %v1229
        %v1650 = vpack.c.b16 %v1236, %v1230
        %v1651 = vpack.c.b16 %v1243, %v1237
        %v1652 = vpack.c.b16 %v1244, %v1238
        %v1653 = vpack.c.b16 %v1245, %v1239
        %v1654 = vpack.c.b16 %v1246, %v1240
        %v1655 = vpack.c.b16 %v1247, %v1241
        %v1656 = vpack.c.b16 %v1248, %v1242
        %v1657 = vpack.c.b16 %v1255, %v1249
        %v1658 = vpack.c.b16 %v1256, %v1250
        %v1659 = vpack.c.b16 %v1257, %v1251
        %v1660 = vpack.c.b16 %v1258, %v1252
        %v1661 = vpack.c.b16 %v1259, %v1253
        %v1662 = vpack.c.b16 %v1260, %v1254
        %v1663 = vpack.c.b16 %v1267, %v1261
        %v1664 = vpack.c.b16 %v1268, %v1262
        %v1665 = vpack.c.b16 %v1269, %v1263
        %v1666 = vpack.c.b16 %v1270, %v1264
        %v1667 = vpack.c.b16 %v1271, %v1265
        %v1668 = vpack.c.b16 %v1272, %v1266
        %v1669 = vpack.c.b16 %v1279, %v1273
        %v1670 = vpack.c.b16 %v1280, %v1274
        %v1671 = vpack.c.b16 %v1281, %v1275
        %v1672 = vpack.c.b16 %v1282, %v1276
        %v1673 = vpack.c.b16 %v1283, %v1277
        %v1674 = vpack.c.b16 %v1284, %v1278
        %v1675 = vpack.c.b16 %v1291, %v1285
        %v1676 = vpack.c.b16 %v1292, %v1286
        %v1677 = vpack.c.b16 %v1293, %v1287
        %v1678 = vpack.c.b16 %v1294, %v1288
        %v1679 = vpack.c.b16 %v1295, %v1289
        %v1680 = vpack.c.b16 %v1296, %v1290
        %v1681 = vpack.c.b16 %v1303, %v1297
        %v1682 = vpack.c.b16 %v1304, %v1298
        %v1683 = vpack.c.b16 %v1305, %v1299
        %v1684 = vpack.c.b16 %v1306, %v1300
        %v1685 = vpack.c.b16 %v1307, %v1301
        %v1686 = vpack.c.b16 %v1308, %v1302
        %v1687 = vpack.c.b16 %v1315, %v1309
        %v1688 = vpack.c.b16 %v1316, %v1310
        %v1689 = vpack.c.b16 %v1317, %v1311
        %v1690 = vpack.c.b16 %v1318, %v1312
        %v1691 = vpack.c.b16 %v1319, %v1313
        %v1692 = vpack.c.b16 %v1320, %v1314
        %v1693 = vpack.c.b16 %v1327, %v1321
        %v1694 = vpack.c.b16 %v1328, %v1322
        %v1695 = vpack.c.b16 %v1329, %v1323
        %v1696 = vpack.c.b16 %v1330, %v1324
        %v1697 = vpack.c.b16 %v1331, %v1325
        %v1698 = vpack.c.b16 %v1332, %v1326
        %v1699 = vpack.c.b16 %v1339, %v1333
        %v1700 = vpack.c.b16 %v1340, %v1334
        %v1701 = vpack.c.b16 %v1341, %v1335
        %v1702 = vpack.c.b16 %v1342, %v1336
        %v1703 = vpack.c.b16 %v1343, %v1337
        %v1704 = vpack.c.b16 %v1344, %v1338
        %v1705 = vpack.c.b16 %v1351, %v1345
        %v1706 = vpack.c.b16 %v1352, %v1346
        %v1707 = vpack.c.b16 %v1353, %v1347
        %v1708 = vpack.c.b16 %v1354, %v1348
        %v1709 = vpack.c.b16 %v1355, %v1349
        %v1710 = vpack.c.b16 %v1356, %v1350
        %v1711 = vpack.c.b16 %v1363, %v1357
        %v1712 = vpack.c.b16 %v1364, %v1358
        %v1713 = vpack.c.b16 %v1365, %v1359
        %v1714 = vpack.c.b16 %v1366, %v1360
        %v1715 = vpack.c.b16 %v1367, %v1361
        %v1716 = vpack.c.b16 %v1368, %v1362
        %v1717 = vpack.c.b16 %v1375, %v1369
        %v1718 = vpack.c.b16 %v1376, %v1370
        %v1719 = vpack.c.b16 %v1377, %v1371
        %v1720 = vpack.c.b16 %v1378, %v1372
        %v1721 = vpack.c.b16 %v1379, %v1373
        %v1722 = vpack.c.b16 %v1380, %v1374
        %v1723 = vpack.c.b16 %v1387, %v1381
        %v1724 = vpack.c.b16 %v1388, %v1382
        %v1725 = vpack.c.b16 %v1389, %v1383
        %v1726 = vpack.c.b16 %v1390, %v1384
        %v1727 = vpack.c.b16 %v1391, %v1385
        %v1728 = vpack.c.b16 %v1392, %v1386
        %v1729 = vpack.c.b16 %v1399, %v1393
        %v1730 = vpack.c.b16 %v1400, %v1394
        %v1731 = vpack.c.b16 %v1401, %v1395
        %v1732 = vpack.c.b16 %v1402, %v1396
        %v1733 = vpack.c.b16 %v1403, %v1397
        %v1734 = vpack.c.b16 %v1404, %v1398
        %v1735 = vpack.c.b16 %v1411, %v1405
        %v1736 = vpack.c.b16 %v1412, %v1406
        %v1737 = vpack.c.b16 %v1413, %v1407
        %v1738 = vpack.c.b16 %v1414, %v1408
        %v1739 = vpack.c.b16 %v1415, %v1409
        %v1740 = vpack.c.b16 %v1416, %v1410
        %v1741 = vpack.c.b16 %v1423, %v1417
        %v1742 = vpack.c.b16 %v1424, %v1418
        %v1743 = vpack.c.b16 %v1425, %v1419
        %v1744 = vpack.c.b16 %v1426, %v1420
        %v1745 = vpack.c.b16 %v1427, %v1421
        %v1746 = vpack.c.b16 %v1428, %v1422
        %v1747 = vpack.c.b16 %v1435, %v1429
        %v1748 = vpack.c.b16 %v1436, %v1430
        %v1749 = vpack.c.b16 %v1437, %v1431
        %v1750 = vpack.c.b16 %v1438, %v1432
        %v1751 = vpack.c.b16 %v1439, %v1433
        %v1752 = vpack.c.b16 %v1440, %v1434
        %v1753 = vpack.c.b16 %v1447, %v1441
        %v1754 = vpack.c.b16 %v1448, %v1442
        %v1755 = vpack.c.b16 %v1449, %v1443
        %v1756 = vpack.c.b16 %v1450, %v1444
        %v1757 = vpack.c.b16 %v1451, %v1445
        %v1758 = vpack.c.b16 %v1452, %v1446
        %v1759 = vpack.c.b16 %v1459, %v1453
        %v1760 = vpack.c.b16 %v1460, %v1454
        %v1761 = vpack.c.b16 %v1461, %v1455
        %v1762 = vpack.c.b16 %v1462, %v1456
        %v1763 = vpack.c.b16 %v1463, %v1457
        %v1764 = vpack.c.b16 %v1464, %v1458
        %v1765 = vpack.c.b16 %v1471, %v1465
        %v1766 = vpack.c.b16 %v1472, %v1466
        %v1767 = vpack.c.b16 %v1473, %v1467
        %v1768 = vpack.c.b16 %v1474, %v1468
        %v1769 = vpack.c.b16 %v1475, %v1469
        %v1770 = vpack.c.b16 %v1476, %v1470
        %v1771 = vpack.c.b16 %v1483, %v1477
        %v1772 = vpack.c.b16 %v1484, %v1478
        %v1773 = vpack.c.b16 %v1485, %v1479
        %v1774 = vpack.c.b16 %v1486, %v1480
        %v1775 = vpack.c.b16 %v1487, %v1481
        %v1776 = vpack.c.b16 %v1488, %v1482
        %2065 = vmatprep.subr.bf16.mxu0 %v1490
        %2066 = vmatpush1.bf16.msra.mxu0 %v1489
        %2067 = vmatprep.subr.bf16.mxu0 %v1496
        %2068 = vmatpush1.bf16.msra.mxu0 %v1495
        %2069 = vmatprep.subr.bf16.mxu0 %v1502
        %2070 = vmatpush1.bf16.msra.mxu0 %v1501
        %2071 = vmatprep.subr.bf16.mxu0 %v1508
        %2072 = vmatpush1.bf16.msra.mxu0 %v1507
        %2073 = vmatprep.subr.bf16.mxu0 %v1514
        %2074 = vmatpush1.bf16.msra.mxu0 %v1513
        %2075 = vmatprep.subr.bf16.mxu0 %v1520
        %2076 = vmatpush1.bf16.msra.mxu0 %v1519
        %2077 = vmatprep.subr.bf16.mxu0 %v1526
        %2078 = vmatpush1.bf16.msra.mxu0 %v1525
        %2079 = vmatprep.subr.bf16.mxu0 %v1532
        %2080 = vmatpush1.bf16.msra.mxu0 %v1531
        %2081 = vmatprep.subr.bf16.mxu0 %v1538
        %2082 = vmatpush1.bf16.msra.mxu0 %v1537
        %2083 = vmatprep.subr.bf16.mxu0 %v1544
        %2084 = vmatpush1.bf16.msra.mxu0 %v1543
        %2085 = vmatprep.subr.bf16.mxu0 %v1550
        %2086 = vmatpush1.bf16.msra.mxu0 %v1549
        %2087 = vmatprep.subr.bf16.mxu0 %v1556
        %2088 = vmatpush1.bf16.msra.mxu0 %v1555
        %2089 = vmatprep.subr.bf16.mxu0 %v1562
        %2090 = vmatpush1.bf16.msra.mxu0 %v1561
        %2091 = vmatprep.subr.bf16.mxu0 %v1568
        %2092 = vmatpush1.bf16.msra.mxu0 %v1567
        %2093 = vmatprep.subr.bf16.mxu0 %v1574
        %2094 = vmatpush1.bf16.msra.mxu0 %v1573
        %2095 = vmatprep.subr.bf16.mxu0 %v1580
        %2096 = vmatpush1.bf16.msra.mxu0 %v1579
        %2097 = vmatprep.mubr.bf16.mxu0 %v588
        %2098 = vmatmul.mubr.bf16.gmra.mrb[0].mxu0 %v587
        %v2099 = vpop.f32.mrb[0].mxu0
        %v2100 = vadd.f32 %v598, %v2099
        %v2101 = vpop.f32.mrb[0].mxu0
        %v2102 = vadd.f32 %v602, %v2101
        %v2103 = vpop.f32.mrb[0].mxu0
        %v2104 = vpop.f32.mrb[0].mxu0
        %2105 = vdwg.mxu0
        %2106 = vmatprep.subr.bf16.mxu0 %v1586
        %2107 = vmatpush1.bf16.msra.mxu0 %v1585
        %2108 = vmatprep.subr.bf16.mxu0 %v1592
        %2109 = vmatpush1.bf16.msra.mxu0 %v1591
        %2110 = vmatprep.subr.bf16.mxu0 %v1598
        %2111 = vmatpush1.bf16.msra.mxu0 %v1597
        %2112 = vmatprep.subr.bf16.mxu0 %v1604
        %2113 = vmatpush1.bf16.msra.mxu0 %v1603
        %2114 = vmatprep.subr.bf16.mxu0 %v1610
        %2115 = vmatpush1.bf16.msra.mxu0 %v1609
        %2116 = vmatprep.subr.bf16.mxu0 %v1616
        %2117 = vmatpush1.bf16.msra.mxu0 %v1615
        %2118 = vmatprep.subr.bf16.mxu0 %v1622
        %2119 = vmatpush1.bf16.msra.mxu0 %v1621
        %2120 = vmatprep.subr.bf16.mxu0 %v1628
        %2121 = vmatpush1.bf16.msra.mxu0 %v1627
        %2122 = vmatprep.subr.bf16.mxu0 %v1634
        %2123 = vmatpush1.bf16.msra.mxu0 %v1633
        %2124 = vmatprep.subr.bf16.mxu0 %v1640
        %2125 = vmatpush1.bf16.msra.mxu0 %v1639
        %2126 = vmatprep.subr.bf16.mxu0 %v1646
        %2127 = vmatpush1.bf16.msra.mxu0 %v1645
        %2128 = vmatprep.subr.bf16.mxu0 %v1652
        %2129 = vmatpush1.bf16.msra.mxu0 %v1651
        %2130 = vmatprep.subr.bf16.mxu0 %v1658
        %2131 = vmatpush1.bf16.msra.mxu0 %v1657
        %2132 = vmatprep.subr.bf16.mxu0 %v1664
        %2133 = vmatpush1.bf16.msra.mxu0 %v1663
        %2134 = vmatprep.subr.bf16.mxu0 %v1670
        %2135 = vmatpush1.bf16.msra.mxu0 %v1669
        %2136 = vmatprep.subr.bf16.mxu0 %v1676
        %2137 = vmatpush1.bf16.msra.mxu0 %v1675
        %2138 = vmatprep.mubr.bf16.mxu0 %v590
        %2139 = vmatmul.mubr.bf16.gmra.mrb[0].mxu0 %v589
        %v2140 = vpop.f32.mrb[0].mxu0
        %v2141 = vadd.f32 %v2100, %v2140
        %v2142 = vpop.f32.mrb[0].mxu0
        %v2143 = vadd.f32 %v2102, %v2142
        %v2144 = vpop.f32.mrb[0].mxu0
        %v2145 = vpop.f32.mrb[0].mxu0
        %2146 = vdwg.mxu0
        %2147 = vmatprep.subr.bf16.mxu0 %v1682
        %2148 = vmatpush1.bf16.msra.mxu0 %v1681
        %2149 = vmatprep.subr.bf16.mxu0 %v1688
        %2150 = vmatpush1.bf16.msra.mxu0 %v1687
        %2151 = vmatprep.subr.bf16.mxu0 %v1694
        %2152 = vmatpush1.bf16.msra.mxu0 %v1693
        %2153 = vmatprep.subr.bf16.mxu0 %v1700
        %2154 = vmatpush1.bf16.msra.mxu0 %v1699
        %2155 = vmatprep.subr.bf16.mxu0 %v1706
        %2156 = vmatpush1.bf16.msra.mxu0 %v1705
        %2157 = vmatprep.subr.bf16.mxu0 %v1712
        %2158 = vmatpush1.bf16.msra.mxu0 %v1711
        %2159 = vmatprep.subr.bf16.mxu0 %v1718
        %2160 = vmatpush1.bf16.msra.mxu0 %v1717
        %2161 = vmatprep.subr.bf16.mxu0 %v1724
        %2162 = vmatpush1.bf16.msra.mxu0 %v1723
        %2163 = vmatprep.subr.bf16.mxu0 %v1730
        %2164 = vmatpush1.bf16.msra.mxu0 %v1729
        %2165 = vmatprep.subr.bf16.mxu0 %v1736
        %2166 = vmatpush1.bf16.msra.mxu0 %v1735
        %2167 = vmatprep.subr.bf16.mxu0 %v1742
        %2168 = vmatpush1.bf16.msra.mxu0 %v1741
        %2169 = vmatprep.subr.bf16.mxu0 %v1748
        %2170 = vmatpush1.bf16.msra.mxu0 %v1747
        %2171 = vmatprep.subr.bf16.mxu0 %v1754
        %2172 = vmatpush1.bf16.msra.mxu0 %v1753
        %2173 = vmatprep.subr.bf16.mxu0 %v1760
        %2174 = vmatpush1.bf16.msra.mxu0 %v1759
        %2175 = vmatprep.subr.bf16.mxu0 %v1766
        %2176 = vmatpush1.bf16.msra.mxu0 %v1765
        %2177 = vmatprep.subr.bf16.mxu0 %v1772
        %2178 = vmatpush1.bf16.msra.mxu0 %v1771
        %2179 = vmatprep.mubr.bf16.mxu0 %v592
        %2180 = vmatmul.mubr.bf16.gmra.mrb[0].mxu0 %v591
        %v2181 = vpop.f32.mrb[0].mxu0
        %v2182 = vadd.f32 %v2141, %v2181
        %v2183 = vpop.f32.mrb[0].mxu0
        %v2184 = vadd.f32 %v2143, %v2183
        %v2185 = vpop.f32.mrb[0].mxu0
        %v2186 = vpop.f32.mrb[0].mxu0
        %2187 = vdwg.mxu0
        %2188 = vmatprep.subr.bf16.mxu0 %v1492
        %2189 = vmatpush1.bf16.msra.mxu0 %v1491
        %2190 = vmatprep.subr.bf16.mxu0 %v1498
        %2191 = vmatpush1.bf16.msra.mxu0 %v1497
        %2192 = vmatprep.subr.bf16.mxu0 %v1504
        %2193 = vmatpush1.bf16.msra.mxu0 %v1503
        %2194 = vmatprep.subr.bf16.mxu0 %v1510
        %2195 = vmatpush1.bf16.msra.mxu0 %v1509
        %2196 = vmatprep.subr.bf16.mxu0 %v1516
        %2197 = vmatpush1.bf16.msra.mxu0 %v1515
        %2198 = vmatprep.subr.bf16.mxu0 %v1522
        %2199 = vmatpush1.bf16.msra.mxu0 %v1521
        %2200 = vmatprep.subr.bf16.mxu0 %v1528
        %2201 = vmatpush1.bf16.msra.mxu0 %v1527
        %2202 = vmatprep.subr.bf16.mxu0 %v1534
        %2203 = vmatpush1.bf16.msra.mxu0 %v1533
        %2204 = vmatprep.subr.bf16.mxu0 %v1540
        %2205 = vmatpush1.bf16.msra.mxu0 %v1539
        %2206 = vmatprep.subr.bf16.mxu0 %v1546
        %2207 = vmatpush1.bf16.msra.mxu0 %v1545
        %2208 = vmatprep.subr.bf16.mxu0 %v1552
        %2209 = vmatpush1.bf16.msra.mxu0 %v1551
        %2210 = vmatprep.subr.bf16.mxu0 %v1558
        %2211 = vmatpush1.bf16.msra.mxu0 %v1557
        %2212 = vmatprep.subr.bf16.mxu0 %v1564
        %2213 = vmatpush1.bf16.msra.mxu0 %v1563
        %2214 = vmatprep.subr.bf16.mxu0 %v1570
        %2215 = vmatpush1.bf16.msra.mxu0 %v1569
        %2216 = vmatprep.subr.bf16.mxu0 %v1576
        %2217 = vmatpush1.bf16.msra.mxu0 %v1575
        %2218 = vmatprep.subr.bf16.mxu0 %v1582
        %2219 = vmatpush1.bf16.msra.mxu0 %v1581
        %2220 = vmatprep.mubr.bf16.mxu0 %v588
        %2221 = vmatmul.mubr.bf16.gmra.mrb[0].mxu0 %v587
        %v2222 = vpop.f32.mrb[0].mxu0
        %v2223 = vadd.f32 %v606, %v2222
        %v2224 = vpop.f32.mrb[0].mxu0
        %v2225 = vadd.f32 %v610, %v2224
        %v2226 = vpop.f32.mrb[0].mxu0
        %v2227 = vpop.f32.mrb[0].mxu0
        %2228 = vdwg.mxu0
        %2229 = vmatprep.subr.bf16.mxu0 %v1588
        %2230 = vmatpush1.bf16.msra.mxu0 %v1587
        %2231 = vmatprep.subr.bf16.mxu0 %v1594
        %2232 = vmatpush1.bf16.msra.mxu0 %v1593
        %2233 = vmatprep.subr.bf16.mxu0 %v1600
        %2234 = vmatpush1.bf16.msra.mxu0 %v1599
        %2235 = vmatprep.subr.bf16.mxu0 %v1606
        %2236 = vmatpush1.bf16.msra.mxu0 %v1605
        %2237 = vmatprep.subr.bf16.mxu0 %v1612
        %2238 = vmatpush1.bf16.msra.mxu0 %v1611
        %2239 = vmatprep.subr.bf16.mxu0 %v1618
        %2240 = vmatpush1.bf16.msra.mxu0 %v1617
        %2241 = vmatprep.subr.bf16.mxu0 %v1624
        %2242 = vmatpush1.bf16.msra.mxu0 %v1623
        %2243 = vmatprep.subr.bf16.mxu0 %v1630
        %2244 = vmatpush1.bf16.msra.mxu0 %v1629
        %2245 = vmatprep.subr.bf16.mxu0 %v1636
        %2246 = vmatpush1.bf16.msra.mxu0 %v1635
        %2247 = vmatprep.subr.bf16.mxu0 %v1642
        %2248 = vmatpush1.bf16.msra.mxu0 %v1641
        %2249 = vmatprep.subr.bf16.mxu0 %v1648
        %2250 = vmatpush1.bf16.msra.mxu0 %v1647
        %2251 = vmatprep.subr.bf16.mxu0 %v1654
        %2252 = vmatpush1.bf16.msra.mxu0 %v1653
        %2253 = vmatprep.subr.bf16.mxu0 %v1660
        %2254 = vmatpush1.bf16.msra.mxu0 %v1659
        %2255 = vmatprep.subr.bf16.mxu0 %v1666
        %2256 = vmatpush1.bf16.msra.mxu0 %v1665
        %2257 = vmatprep.subr.bf16.mxu0 %v1672
        %2258 = vmatpush1.bf16.msra.mxu0 %v1671
        %2259 = vmatprep.subr.bf16.mxu0 %v1678
        %2260 = vmatpush1.bf16.msra.mxu0 %v1677
        %2261 = vmatprep.mubr.bf16.mxu0 %v590
        %2262 = vmatmul.mubr.bf16.gmra.mrb[0].mxu0 %v589
        %v2263 = vpop.f32.mrb[0].mxu0
        %v2264 = vadd.f32 %v2223, %v2263
        %v2265 = vpop.f32.mrb[0].mxu0
        %v2266 = vadd.f32 %v2225, %v2265
        %v2267 = vpop.f32.mrb[0].mxu0
        %v2268 = vpop.f32.mrb[0].mxu0
        %2269 = vdwg.mxu0
        %2270 = vmatprep.subr.bf16.mxu0 %v1684
        %2271 = vmatpush1.bf16.msra.mxu0 %v1683
        %2272 = vmatprep.subr.bf16.mxu0 %v1690
        %2273 = vmatpush1.bf16.msra.mxu0 %v1689
        %2274 = vmatprep.subr.bf16.mxu0 %v1696
        %2275 = vmatpush1.bf16.msra.mxu0 %v1695
        %2276 = vmatprep.subr.bf16.mxu0 %v1702
        %2277 = vmatpush1.bf16.msra.mxu0 %v1701
        %2278 = vmatprep.subr.bf16.mxu0 %v1708
        %2279 = vmatpush1.bf16.msra.mxu0 %v1707
        %2280 = vmatprep.subr.bf16.mxu0 %v1714
        %2281 = vmatpush1.bf16.msra.mxu0 %v1713
        %2282 = vmatprep.subr.bf16.mxu0 %v1720
        %2283 = vmatpush1.bf16.msra.mxu0 %v1719
        %2284 = vmatprep.subr.bf16.mxu0 %v1726
        %2285 = vmatpush1.bf16.msra.mxu0 %v1725
        %2286 = vmatprep.subr.bf16.mxu0 %v1732
        %2287 = vmatpush1.bf16.msra.mxu0 %v1731
        %2288 = vmatprep.subr.bf16.mxu0 %v1738
        %2289 = vmatpush1.bf16.msra.mxu0 %v1737
        %2290 = vmatprep.subr.bf16.mxu0 %v1744
        %2291 = vmatpush1.bf16.msra.mxu0 %v1743
        %2292 = vmatprep.subr.bf16.mxu0 %v1750
        %2293 = vmatpush1.bf16.msra.mxu0 %v1749
        %2294 = vmatprep.subr.bf16.mxu0 %v1756
        %2295 = vmatpush1.bf16.msra.mxu0 %v1755
        %2296 = vmatprep.subr.bf16.mxu0 %v1762
        %2297 = vmatpush1.bf16.msra.mxu0 %v1761
        %2298 = vmatprep.subr.bf16.mxu0 %v1768
        %2299 = vmatpush1.bf16.msra.mxu0 %v1767
        %2300 = vmatprep.subr.bf16.mxu0 %v1774
        %2301 = vmatpush1.bf16.msra.mxu0 %v1773
        %2302 = vmatprep.mubr.bf16.mxu0 %v592
        %2303 = vmatmul.mubr.bf16.gmra.mrb[0].mxu0 %v591
        %v2304 = vpop.f32.mrb[0].mxu0
        %v2305 = vadd.f32 %v2264, %v2304
        %v2306 = vpop.f32.mrb[0].mxu0
        %v2307 = vadd.f32 %v2266, %v2306
        %v2308 = vpop.f32.mrb[0].mxu0
        %v2309 = vpop.f32.mrb[0].mxu0
        %2310 = vdwg.mxu0
        %2311 = vmatprep.subr.bf16.mxu0 %v1494
        %2312 = vmatpush1.bf16.msra.mxu0 %v1493
        %2313 = vmatprep.subr.bf16.mxu0 %v1500
        %2314 = vmatpush1.bf16.msra.mxu0 %v1499
        %2315 = vmatprep.subr.bf16.mxu0 %v1506
        %2316 = vmatpush1.bf16.msra.mxu0 %v1505
        %2317 = vmatprep.subr.bf16.mxu0 %v1512
        %2318 = vmatpush1.bf16.msra.mxu0 %v1511
        %2319 = vmatprep.subr.bf16.mxu0 %v1518
        %2320 = vmatpush1.bf16.msra.mxu0 %v1517
        %2321 = vmatprep.subr.bf16.mxu0 %v1524
        %2322 = vmatpush1.bf16.msra.mxu0 %v1523
        %2323 = vmatprep.subr.bf16.mxu0 %v1530
        %2324 = vmatpush1.bf16.msra.mxu0 %v1529
        %2325 = vmatprep.subr.bf16.mxu0 %v1536
        %2326 = vmatpush1.bf16.msra.mxu0 %v1535
        %2327 = vmatprep.subr.bf16.mxu0 %v1542
        %2328 = vmatpush1.bf16.msra.mxu0 %v1541
        %2329 = vmatprep.subr.bf16.mxu0 %v1548
        %2330 = vmatpush1.bf16.msra.mxu0 %v1547
        %2331 = vmatprep.subr.bf16.mxu0 %v1554
        %2332 = vmatpush1.bf16.msra.mxu0 %v1553
        %2333 = vmatprep.subr.bf16.mxu0 %v1560
        %2334 = vmatpush1.bf16.msra.mxu0 %v1559
        %2335 = vmatprep.subr.bf16.mxu0 %v1566
        %2336 = vmatpush1.bf16.msra.mxu0 %v1565
        %2337 = vmatprep.subr.bf16.mxu0 %v1572
        %2338 = vmatpush1.bf16.msra.mxu0 %v1571
        %2339 = vmatprep.subr.bf16.mxu0 %v1578
        %2340 = vmatpush1.bf16.msra.mxu0 %v1577
        %2341 = vmatprep.subr.bf16.mxu0 %v1584
        %2342 = vmatpush1.bf16.msra.mxu0 %v1583
        %2343 = vmatprep.mubr.bf16.mxu0 %v588
        %2344 = vmatmul.mubr.bf16.gmra.mrb[0].mxu0 %v587
        %v2345 = vpop.f32.mrb[0].mxu0
        %v2346 = vadd.f32 %v614, %v2345
        %v2347 = vpop.f32.mrb[0].mxu0
        %v2348 = vadd.f32 %v618, %v2347
        %v2349 = vpop.f32.mrb[0].mxu0
        %v2350 = vpop.f32.mrb[0].mxu0
        %2351 = vdwg.mxu0
        %2352 = vmatprep.subr.bf16.mxu0 %v1590
        %2353 = vmatpush1.bf16.msra.mxu0 %v1589
        %2354 = vmatprep.subr.bf16.mxu0 %v1596
        %2355 = vmatpush1.bf16.msra.mxu0 %v1595
        %2356 = vmatprep.subr.bf16.mxu0 %v1602
        %2357 = vmatpush1.bf16.msra.mxu0 %v1601
        %2358 = vmatprep.subr.bf16.mxu0 %v1608
        %2359 = vmatpush1.bf16.msra.mxu0 %v1607
        %2360 = vmatprep.subr.bf16.mxu0 %v1614
        %2361 = vmatpush1.bf16.msra.mxu0 %v1613
        %2362 = vmatprep.subr.bf16.mxu0 %v1620
        %2363 = vmatpush1.bf16.msra.mxu0 %v1619
        %2364 = vmatprep.subr.bf16.mxu0 %v1626
        %2365 = vmatpush1.bf16.msra.mxu0 %v1625
        %2366 = vmatprep.subr.bf16.mxu0 %v1632
        %2367 = vmatpush1.bf16.msra.mxu0 %v1631
        %2368 = vmatprep.subr.bf16.mxu0 %v1638
        %2369 = vmatpush1.bf16.msra.mxu0 %v1637
        %2370 = vmatprep.subr.bf16.mxu0 %v1644
        %2371 = vmatpush1.bf16.msra.mxu0 %v1643
        %2372 = vmatprep.subr.bf16.mxu0 %v1650
        %2373 = vmatpush1.bf16.msra.mxu0 %v1649
        %2374 = vmatprep.subr.bf16.mxu0 %v1656
        %2375 = vmatpush1.bf16.msra.mxu0 %v1655
        %2376 = vmatprep.subr.bf16.mxu0 %v1662
        %2377 = vmatpush1.bf16.msra.mxu0 %v1661
        %2378 = vmatprep.subr.bf16.mxu0 %v1668
        %2379 = vmatpush1.bf16.msra.mxu0 %v1667
        %2380 = vmatprep.subr.bf16.mxu0 %v1674
        %2381 = vmatpush1.bf16.msra.mxu0 %v1673
        %2382 = vmatprep.subr.bf16.mxu0 %v1680
        %2383 = vmatpush1.bf16.msra.mxu0 %v1679
        %2384 = vmatprep.mubr.bf16.mxu0 %v590
        %2385 = vmatmul.mubr.bf16.gmra.mrb[0].mxu0 %v589
        %v2386 = vpop.f32.mrb[0].mxu0
        %v2387 = vadd.f32 %v2346, %v2386
        %v2388 = vpop.f32.mrb[0].mxu0
        %v2389 = vadd.f32 %v2348, %v2388
        %v2390 = vpop.f32.mrb[0].mxu0
        %v2391 = vpop.f32.mrb[0].mxu0
        %2392 = vdwg.mxu0
        %2393 = vmatprep.subr.bf16.mxu0 %v1686
        %2394 = vmatpush1.bf16.msra.mxu0 %v1685
        %2395 = vmatprep.subr.bf16.mxu0 %v1692
        %2396 = vmatpush1.bf16.msra.mxu0 %v1691
        %2397 = vmatprep.subr.bf16.mxu0 %v1698
        %2398 = vmatpush1.bf16.msra.mxu0 %v1697
        %2399 = vmatprep.subr.bf16.mxu0 %v1704
        %2400 = vmatpush1.bf16.msra.mxu0 %v1703
        %2401 = vmatprep.subr.bf16.mxu0 %v1710
        %2402 = vmatpush1.bf16.msra.mxu0 %v1709
        %2403 = vmatprep.subr.bf16.mxu0 %v1716
        %2404 = vmatpush1.bf16.msra.mxu0 %v1715
        %2405 = vmatprep.subr.bf16.mxu0 %v1722
        %2406 = vmatpush1.bf16.msra.mxu0 %v1721
        %2407 = vmatprep.subr.bf16.mxu0 %v1728
        %2408 = vmatpush1.bf16.msra.mxu0 %v1727
        %2409 = vmatprep.subr.bf16.mxu0 %v1734
        %2410 = vmatpush1.bf16.msra.mxu0 %v1733
        %2411 = vmatprep.subr.bf16.mxu0 %v1740
        %2412 = vmatpush1.bf16.msra.mxu0 %v1739
        %2413 = vmatprep.subr.bf16.mxu0 %v1746
        %2414 = vmatpush1.bf16.msra.mxu0 %v1745
        %2415 = vmatprep.subr.bf16.mxu0 %v1752
        %2416 = vmatpush1.bf16.msra.mxu0 %v1751
        %2417 = vmatprep.subr.bf16.mxu0 %v1758
        %2418 = vmatpush1.bf16.msra.mxu0 %v1757
        %2419 = vmatprep.subr.bf16.mxu0 %v1764
        %2420 = vmatpush1.bf16.msra.mxu0 %v1763
        %2421 = vmatprep.subr.bf16.mxu0 %v1770
        %2422 = vmatpush1.bf16.msra.mxu0 %v1769
        %2423 = vmatprep.subr.bf16.mxu0 %v1776
        %2424 = vmatpush1.bf16.msra.mxu0 %v1775
        %2425 = vmatprep.mubr.bf16.mxu0 %v592
        %2426 = vmatmul.mubr.bf16.gmra.mrb[0].mxu0 %v591
        %v2427 = vpop.f32.mrb[0].mxu0
        %v2428 = vadd.f32 %v2387, %v2427
        %v2429 = vpop.f32.mrb[0].mxu0
        %v2430 = vadd.f32 %v2389, %v2429
        %v2431 = vpop.f32.mrb[0].mxu0
        %v2432 = vpop.f32.mrb[0].mxu0
        %2433 = vdwg.mxu0
        %v2434 = vmul.f32 %v2182, 0.5
        %v2435 = vmul.f32 %v2184, 0.5
        %v2436 = vmul.f32 %v2305, 0.5
        %v2437 = vmul.f32 %v2307, 0.5
        %v2438 = vmul.f32 %v2428, 0.5
        %v2439 = vmul.f32 %v2430, 0.5
        %v2440 = vmul.f32 %v2182, 0.70710677
        %v2441 = vmul.f32 %v2184, 0.70710677
        %v2442 = vmul.f32 %v2305, 0.70710677
        %v2443 = vmul.f32 %v2307, 0.70710677
        %v2444 = vmul.f32 %v2428, 0.70710677
        %v2445 = vmul.f32 %v2430, 0.70710677
        %v2446 = verf.f32.pop %v2440
        %v2447 = verf.f32.pop %v2441
        %v2448 = verf.f32.pop %v2442
        %v2449 = verf.f32.pop %v2443
        %v2450 = verf.f32.pop %v2444
        %v2451 = verf.f32.pop %v2445
        %v2452 = vadd.f32 %v2446, 1.0
        %v2453 = vadd.f32 %v2447, 1.0
        %v2454 = vadd.f32 %v2448, 1.0
        %v2455 = vadd.f32 %v2449, 1.0
        %v2456 = vadd.f32 %v2450, 1.0
        %v2457 = vadd.f32 %v2451, 1.0
        %v2458 = vmul.f32 %v2434, %v2452
        %v2459 = vmul.f32 %v2435, %v2453
        %v2460 = vmul.f32 %v2436, %v2454
        %v2461 = vmul.f32 %v2437, %v2455
        %v2462 = vmul.f32 %v2438, %v2456
        %v2463 = vmul.f32 %v2439, %v2457
        %v2464 = vadd.f32 %v2458, %v2459
        %v2465 = vadd.f32 %v2464, %v2460
        %v2466 = vadd.f32 %v2465, %v2461
        %v2467 = vadd.f32 %v2466, %v2462
        %v2468 = vadd.f32 %v2467, %v2463
        %2469 = vadd.xlane.f32.xlu0 %v2468
        %v2470 = vpop.xlane.xlu0 %2469
        %v2471 = vrcp.pop 768.0
        %v2472 = vmul.f32 %v2470, %v2471
        %v2473 = vsub.f32 %v2458, %v2472
        %v2474 = vsub.f32 %v2459, %v2472
        %v2475 = vsub.f32 %v2460, %v2472
        %v2476 = vsub.f32 %v2461, %v2472
        %v2477 = vsub.f32 %v2462, %v2472
        %v2478 = vsub.f32 %v2463, %v2472
        %v2479 = vmul.f32 %v2473, %v2473
        %v2480 = vmul.f32 %v2474, %v2474
        %v2481 = vmul.f32 %v2475, %v2475
        %v2482 = vmul.f32 %v2476, %v2476
        %v2483 = vmul.f32 %v2477, %v2477
        %v2484 = vmul.f32 %v2478, %v2478
        %v2485 = vadd.f32 %v2479, %v2480
        %v2486 = vadd.f32 %v2485, %v2481
        %v2487 = vadd.f32 %v2486, %v2482
        %v2488 = vadd.f32 %v2487, %v2483
        %v2489 = vadd.f32 %v2488, %v2484
        %2490 = vadd.xlane.f32.xlu0 %v2489
        %v2491 = vpop.xlane.xlu0 %2490
        %v2492 = vmul.f32 %v2491, %v2471
        %v2493 = vadd.f32 %v2492, 1e-12
        %v2494 = vrsqrt.pop %v2493
        %v2495 = vmul.f32 %v2473, %v2494
        %v2496 = vmul.f32 %v2474, %v2494
        %v2497 = vmul.f32 %v2475, %v2494
        %v2498 = vmul.f32 %v2476, %v2494
        %v2499 = vmul.f32 %v2477, %v2494
        %v2500 = vmul.f32 %v2478, %v2494
        %v2501 = vld [vmem:[#allocation8] sm:$0x3f]
        %v2503 = vlaneseq
        %v2504 = vshrl.u32 %v2503, 7
        %v2505 = vsub.s32 0, %v2504
        %v2506 = vrot.slane %v2501, %v2505
        %v2507 = vlaneseq
        %v2508 = vshrl.u32 %v2507, 7
        %v2509 = vsub.s32 1, %v2508
        %v2510 = vrot.slane %v2501, %v2509
        %v2511 = vlaneseq
        %v2512 = vshrl.u32 %v2511, 7
        %v2513 = vsub.s32 2, %v2512
        %v2514 = vrot.slane %v2501, %v2513
        %v2515 = vlaneseq
        %v2516 = vshrl.u32 %v2515, 7
        %v2517 = vsub.s32 3, %v2516
        %v2518 = vrot.slane %v2501, %v2517
        %v2519 = vlaneseq
        %v2520 = vshrl.u32 %v2519, 7
        %v2521 = vsub.s32 4, %v2520
        %v2522 = vrot.slane %v2501, %v2521
        %v2523 = vlaneseq
        %v2524 = vshrl.u32 %v2523, 7
        %v2525 = vsub.s32 5, %v2524
        %v2526 = vrot.slane %v2501, %v2525
        %v2533 = vmul.f32 %v2495, %v2506
        %v2534 = vmul.f32 %v2496, %v2510
        %v2535 = vmul.f32 %v2497, %v2514
        %v2536 = vmul.f32 %v2498, %v2518
        %v2537 = vmul.f32 %v2499, %v2522
        %v2538 = vmul.f32 %v2500, %v2526
        %v2539 = vld [vmem:[#allocation10] sm:$0x3f]
        %v2541 = vlaneseq
        %v2542 = vshrl.u32 %v2541, 7
        %v2543 = vsub.s32 0, %v2542
        %v2544 = vrot.slane %v2539, %v2543
        %v2545 = vlaneseq
        %v2546 = vshrl.u32 %v2545, 7
        %v2547 = vsub.s32 1, %v2546
        %v2548 = vrot.slane %v2539, %v2547
        %v2549 = vlaneseq
        %v2550 = vshrl.u32 %v2549, 7
        %v2551 = vsub.s32 2, %v2550
        %v2552 = vrot.slane %v2539, %v2551
        %v2553 = vlaneseq
        %v2554 = vshrl.u32 %v2553, 7
        %v2555 = vsub.s32 3, %v2554
        %v2556 = vrot.slane %v2539, %v2555
        %v2557 = vlaneseq
        %v2558 = vshrl.u32 %v2557, 7
        %v2559 = vsub.s32 4, %v2558
        %v2560 = vrot.slane %v2539, %v2559
        %v2561 = vlaneseq
        %v2562 = vshrl.u32 %v2561, 7
        %v2563 = vsub.s32 5, %v2562
        %v2564 = vrot.slane %v2539, %v2563
        %v2571 = vadd.f32 %v2533, %v2544
        %v2572 = vadd.f32 %v2534, %v2548
        %v2573 = vadd.f32 %v2535, %v2552
        %v2574 = vadd.f32 %v2536, %v2556
        %v2575 = vadd.f32 %v2537, %v2560
        %v2576 = vadd.f32 %v2538, %v2564
        %2577 = vst [vmem:[%s292] sm:$0xff] %v2571
        %2578 = vst [vmem:[%s292 + $0x8] sm:$0xff] %v2572
        %2579 = vst [vmem:[%s292 + $0x10] sm:$0xff] %v2573
        %2580 = vst [vmem:[%s292 + $0x18] sm:$0xff] %v2574
        %2581 = vst [vmem:[%s292 + $0x20] sm:$0xff] %v2575
        %2582 = vst [vmem:[%s292 + $0x28] sm:$0xff] %v2576
        %s2583 = sand.u32 %s142, 1
        %s2584 = scalar_lea.sflag [#allocation4], %s2583
        %s2585 = sand.u32 %s142, 1
        %s2586 = smul.addr %s2585, 48
        %s2587 = scalar_lea.vmem [#allocation11], %s2586
        // Predicated region
        $region61: #{tpu_custom_call.1} parent=39 // pred_check
          %p2588 = pneg %p152
        $region62: #{tpu_custom_call.1} parent=39 // pred_check_branch
          %2590 = sbr.rel (%p2588) target = $region64
        $region63: #{tpu_custom_call.1} parent=39 // pred_region
          %s2592 = ssub.s32 768, 768
          %2593 = vsyncadd %s2584, %s2592
          %s2594 = smul.addr %s24, 6
          %s2595 = smul.addr %s2594, 128
          %s2596 = scalar_lea.hbm %s5, %s2595
          %s2598 = sshll.u32 %s2587, 4
          %s2599 = int_to_ptr.vmem [resolvable:$true] %s2598
          %2601 = dma.vmem_to_hbm [thread:$0]  %s2599, 768, %s2596, %s2584
        $region64: #{tpu_custom_call.1} parent=39 // pred_fallthru
          _
      $region40: #{tpu_custom_call.1} parent=5 // pred_fallthru
        _
      %p2602 = scmp.le.s32.totalorder 2, %s19
      // Predicated region
      $region65: #{tpu_custom_call.1} parent=5 // pred_check
        %p2603 = pneg %p2602
      $region66: #{tpu_custom_call.1} parent=5 // pred_check_branch
        %2605 = sbr.rel (%p2603) target = $region68
      $region67: #{tpu_custom_call.1} parent=5 // pred_region
        %s2606 = ssub.s32 %s19, 2
        // Predicated region
        $region69: #{tpu_custom_call.1} parent=67 // pred_check
          %p2607 = pneg %p158
        $region70: #{tpu_custom_call.1} parent=67 // pred_check_branch
          %2609 = sbr.rel (%p2607) target = $region72
        $region71: #{tpu_custom_call.1} parent=67 // pred_region
          %s2610 = sand.u32 %s143, 1
          %s2611 = scalar_lea.sflag [#allocation4], %s2610
          %s2612 = sand.u32 %s143, 1
          %s2613 = smul.addr %s2612, 48
          %s2614 = scalar_lea.vmem [#allocation11], %s2613
          %2615 = dma.done %s2611, 768
        $region72: #{tpu_custom_call.1} parent=67 // pred_fallthru
          _
      $region68: #{tpu_custom_call.1} parent=5 // pred_fallthru
        _
    $region6: #{tpu_custom_call.1} parent=1 // loop_footer
      %s23 = sadd.s32 1, %s19
    $region7: #{tpu_custom_call.1} parent=1 // loop_footer_branch
      %18 = sbr.rel target = $region3
    $region8: #{tpu_custom_call.1} parent=1 // loop_exit
      _
    %2616 = vsyncpa [#allocation3], 1
    %s2617 = scalar_lea.sflag [#allocation3], 1
    %2618 = vsyncpa %s2617, 1
    %2619 = vsyncpa [#allocation6], 1
    %2620 = vsyncpa [#allocation9], 1
    %2621 = vsyncpa [#allocation4], 1
    %s2622 = scalar_lea.sflag [#allocation4], 1
    %2623 = vsyncpa %s2622, 1

// kernel: tpu_custom_call.1
$region0: #{tpu_custom_call.1}
  #allocation0 [shape = 'u32[]', space=smem, size = 0x4, offset = 0x4, fixed_abs, tag = 'smem constant byte address 0x4 - core index']
  #allocation1 [shape = 'u32[144,128]{1,0:T(1,128)}', space=vmem, size = 0x12000, scoped, tag = 'internal scratch']
  %s0 = inlined_call_operand.hbm [shape: f32[16,768], index: 0, kind: input, shape index: {}]
  %s1 = inlined_call_operand.hbm [shape: bf16[768,768], index: 1, kind: input, shape index: {}]
  %s2 = inlined_call_operand.hbm [shape: f32[1,768], index: 2, kind: input, shape index: {}]
  %s3 = inlined_call_operand.hbm [shape: f32[1,768], index: 3, kind: input, shape index: {}]
  %s4 = inlined_call_operand.hbm [shape: f32[1,768], index: 4, kind: input, shape index: {}]
  %s5 = inlined_call_operand.hbm [shape: f32[16,768], index: 5, kind: output, shape index: {}]
  %s6 = sld [smem:[#allocation0]]
  $region73: #{tpu_custom_call.1} parent=0
    _
  %s8 = ssub.s32 1, %s6
  %s9 = scalar_select 0, %s8, %s6
  $region1: #{tpu_custom_call.1} parent=0
    #allocation2 [shape = 'u8[49152]{0}', space=vmem, size = 0xc000, scoped, tag = 'input window, operand 0']
    #allocation3 [shape = 's32[2]{0}', space=sflag, size = 0x8, scoped, tag = 'scoped memory for tpu_custom_call.1']
    #allocation4 [shape = 's32[2]{0}', space=sflag, size = 0x8, scoped, tag = 'scoped memory for tpu_custom_call.1']
    #allocation5 [shape = 'u8[1179648]{0}', space=vmem, size = 0x120000, scoped, tag = 'input window, operand 1, single buffered']
    #allocation6 [shape = 's32[1]{0}', space=sflag, size = 0x4, scoped, tag = 'scoped memory for tpu_custom_call.1']
    #allocation7 [shape = 'u8[3072]{0}', space=vmem, size = 0xc00, scoped, tag = 'input window, operand 2, single buffered']
    #allocation8 [shape = 'u8[3072]{0}', space=vmem, size = 0xc00, scoped, tag = 'input window, operand 3, single buffered']
    #allocation9 [shape = 's32[1]{0}', space=sflag, size = 0x4, scoped, tag = 'scoped memory for tpu_custom_call.1']
    #allocation10 [shape = 'u8[3072]{0}', space=vmem, size = 0xc00, scoped, tag = 'input window, operand 4, single buffered']
    #allocation11 [shape = 'u8[49152]{0}', space=vmem, size = 0xc000, scoped, tag = 'output window, operand 0']
    %10 = vsyncpa [#allocation3], 0
    %s11 = scalar_lea.sflag [#allocation3], 1
    %12 = vsyncpa %s11, 0
    %13 = vsyncpa [#allocation6], 0
    %14 = vsyncpa [#allocation9], 0
    %15 = vsyncpa [#allocation4], 0
    %s16 = scalar_lea.sflag [#allocation4], 1
    %17 = vsyncpa %s16, 0
    loop: start=0, step=1, limit=4
    $region2: #{tpu_custom_call.1} parent=1 // loop_pre_header
      _
    $region3: #{tpu_custom_call.1} parent=1 // loop_header
      %s19 = sphi 0, %s23
      %p20 = scmp.ge.s32.totalorder %s19, 4
      %s29 = sphi 0, %s31
      %s32 = sphi 0, %s29
      %s33 = sphi 0, %s32
      %s49 = sphi 0, %s33
      %s53 = sphi 0, %s53
      %s55 = sphi 0, %s53
      %s56 = sphi 0, %s55
      %s70 = sphi 0, %s56
      %s74 = sphi 0, %s74
      %s76 = sphi 0, %s74
      %s77 = sphi 0, %s76
      %s91 = sphi 0, %s77
      %s95 = sphi 0, %s95
      %s97 = sphi 0, %s95
      %s98 = sphi 0, %s97
      %s112 = sphi 0, %s98
      %s116 = sphi 0, %s116
      %s118 = sphi 0, %s116
      %s119 = sphi 0, %s118
      %s133 = sphi 0, %s119
      %s139 = sphi 0, %s141
      %s142 = sphi 0, %s139
      %s143 = sphi 0, %s142
      %s159 = sphi 0, %s143
    $region4: #{tpu_custom_call.1} parent=1 // loop_header_branch
      %22 = sbr.rel (%p20) target = $region8
    $region5: #{tpu_custom_call.1} parent=1 // loop_body
      %s24 = ssub.s32 %s19, 1
      %s25 = ssub.s32 %s19, 2
      %s26 = sadd.s32 %s19, 1
      %s27 = ssub.s32 %s19, %s26
      %p28 = scmp.eq.s32.totalorder %s27, 0
      %s30 = sadd.s32 %s29, 1
      %s31 = scalar_select %p28, %s29, %s30
      %p34 = pneg %p28
      %p35 = scmp.eq.s32.totalorder %s19, 1
      %p36 = por %p34, %p35
      %p37 = scmp.ne.s32.totalorder %s29, %s32
      %p38 = scmp.eq.s32.totalorder %s19, 0
      %p39 = por %p37, %p38
      %p40 = scmp.ne.s32.totalorder %s29, %s32
      %p41 = scmp.eq.s32.totalorder %s24, 1
      %p42 = por %p40, %p41
      %p43 = scmp.ne.s32.totalorder %s32, %s33
      %p44 = scmp.eq.s32.totalorder %s24, 0
      %p45 = por %p43, %p44
      %p46 = scmp.ne.s32.totalorder %s32, %s33
      %p47 = scmp.eq.s32.totalorder %s25, 1
      %p48 = por %p46, %p47
      %p50 = scmp.ne.s32.totalorder %s33, %s49
      %p51 = scmp.eq.s32.totalorder %s25, 0
      %p52 = por %p50, %p51
      %s54 = sadd.s32 %s53, 1
      %p57 = scmp.eq.s32.totalorder %s19, 1
      %p58 = scmp.ne.s32.totalorder %s53, %s55
      %p59 = scmp.eq.s32.totalorder %s19, 0
      %p60 = por %p58, %p59
      %p61 = scmp.ne.s32.totalorder %s53, %s55
      %p62 = scmp.eq.s32.totalorder %s24, 1
      %p63 = por %p61, %p62
      %p64 = scmp.ne.s32.totalorder %s55, %s56
      %p65 = scmp.eq.s32.totalorder %s24, 0
      %p66 = por %p64, %p65
      %p67 = scmp.ne.s32.totalorder %s55, %s56
      %p68 = scmp.eq.s32.totalorder %s25, 1
      %p69 = por %p67, %p68
      %p71 = scmp.ne.s32.totalorder %s56, %s70
      %p72 = scmp.eq.s32.totalorder %s25, 0
      %p73 = por %p71, %p72
      %s75 = sadd.s32 %s74, 1
      %p78 = scmp.eq.s32.totalorder %s19, 1
      %p79 = scmp.ne.s32.totalorder %s74, %s76
      %p80 = scmp.eq.s32.totalorder %s19, 0
      %p81 = por %p79, %p80
      %p82 = scmp.ne.s32.totalorder %s74, %s76
      %p83 = scmp.eq.s32.totalorder %s24, 1
      %p84 = por %p82, %p83
      %p85 = scmp.ne.s32.totalorder %s76, %s77
      %p86 = scmp.eq.s32.totalorder %s24, 0
      %p87 = por %p85, %p86
      %p88 = scmp.ne.s32.totalorder %s76, %s77
      %p89 = scmp.eq.s32.totalorder %s25, 1
      %p90 = por %p88, %p89
      %p92 = scmp.ne.s32.totalorder %s77, %s91
      %p93 = scmp.eq.s32.totalorder %s25, 0
      %p94 = por %p92, %p93
      %s96 = sadd.s32 %s95, 1
      %p99 = scmp.eq.s32.totalorder %s19, 1
      %p100 = scmp.ne.s32.totalorder %s95, %s97
      %p101 = scmp.eq.s32.totalorder %s19, 0
      %p102 = por %p100, %p101
      %p103 = scmp.ne.s32.totalorder %s95, %s97
      %p104 = scmp.eq.s32.totalorder %s24, 1
      %p105 = por %p103, %p104
      %p106 = scmp.ne.s32.totalorder %s97, %s98
      %p107 = scmp.eq.s32.totalorder %s24, 0
      %p108 = por %p106, %p107
      %p109 = scmp.ne.s32.totalorder %s97, %s98
      %p110 = scmp.eq.s32.totalorder %s25, 1
      %p111 = por %p109, %p110
      %p113 = scmp.ne.s32.totalorder %s98, %s112
      %p114 = scmp.eq.s32.totalorder %s25, 0
      %p115 = por %p113, %p114
      %s117 = sadd.s32 %s116, 1
      %p120 = scmp.eq.s32.totalorder %s19, 1
      %p121 = scmp.ne.s32.totalorder %s116, %s118
      %p122 = scmp.eq.s32.totalorder %s19, 0
      %p123 = por %p121, %p122
      %p124 = scmp.ne.s32.totalorder %s116, %s118
      %p125 = scmp.eq.s32.totalorder %s24, 1
      %p126 = por %p124, %p125
      %p127 = scmp.ne.s32.totalorder %s118, %s119
      %p128 = scmp.eq.s32.totalorder %s24, 0
      %p129 = por %p127, %p128
      %p130 = scmp.ne.s32.totalorder %s118, %s119
      %p131 = scmp.eq.s32.totalorder %s25, 1
      %p132 = por %p130, %p131
      %p134 = scmp.ne.s32.totalorder %s119, %s133
      %p135 = scmp.eq.s32.totalorder %s25, 0
      %p136 = por %p134, %p135
      %s137 = ssub.s32 %s19, %s26
      %p138 = scmp.eq.s32.totalorder %s137, 0
      %s140 = sadd.s32 %s139, 1
      %s141 = scalar_select %p138, %s139, %s140
      %p144 = pneg %p138
      %p145 = scmp.eq.s32.totalorder %s19, 1
      %p146 = por %p144, %p145
      %p147 = scmp.ne.s32.totalorder %s139, %s142
      %p148 = scmp.eq.s32.totalorder %s19, 0
      %p149 = por %p147, %p148
      %p150 = scmp.ne.s32.totalorder %s139, %s142
      %p151 = scmp.eq.s32.totalorder %s24, 1
      %p152 = por %p150, %p151
      %p153 = scmp.ne.s32.totalorder %s142, %s143
      %p154 = scmp.eq.s32.totalorder %s24, 0
      %p155 = por %p153, %p154
      %p156 = scmp.ne.s32.totalorder %s142, %s143
      %p157 = scmp.eq.s32.totalorder %s25, 1
      %p158 = por %p156, %p157
      %p160 = scmp.ne.s32.totalorder %s143, %s159
      %p161 = scmp.eq.s32.totalorder %s25, 0
      %p162 = por %p160, %p161
      %p163 = scmp.le.s32.totalorder 1, %s19
      %p164 = scmp.lt.s32.totalorder %s19, 3
      %p165 = pnand %p163, %p164
      %p166 = pneg %p165
      // Predicated region
      $region9: #{tpu_custom_call.1} parent=5 // pred_check
        _
      $region10: #{tpu_custom_call.1} parent=5 // pred_check_branch
        %168 = sbr.rel (%p165) target = $region12
      $region11: #{tpu_custom_call.1} parent=5 // pred_region
        %s169 = ssub.s32 %s19, 1
        // Predicated region
        $region13: #{tpu_custom_call.1} parent=11 // pred_check
          %p170 = pneg %p66
        $region14: #{tpu_custom_call.1} parent=11 // pred_check_branch
          %172 = sbr.rel (%p170) target = $region16
        $region15: #{tpu_custom_call.1} parent=11 // pred_region
          %s174 = ssub.s32 36864, 36864
          %175 = vsyncadd [#allocation6], %s174
          %s176 = sshll.u32 [#allocation5], 4
          %s177 = int_to_ptr.vmem [resolvable:$true] %s176
          %182 = dma.hbm_to_vmem [thread:$0]  %s1, 36864, %s177, [#allocation6], 384, 384, 24
        $region16: #{tpu_custom_call.1} parent=11 // pred_fallthru
          _
        // Predicated region
        $region17: #{tpu_custom_call.1} parent=11 // pred_check
          %p183 = pneg %p87
        $region18: #{tpu_custom_call.1} parent=11 // pred_check_branch
          %185 = sbr.rel (%p183) target = $region20
        $region19: #{tpu_custom_call.1} parent=11 // pred_region
          %s187 = ssub.s32 96, 96
          %188 = vsyncadd [#allocation6], %s187
          %s190 = sshll.u32 [#allocation7], 4
          %s191 = int_to_ptr.vmem [resolvable:$true] %s190
          %193 = dma.hbm_to_vmem [thread:$0]  %s2, 96, %s191, [#allocation6]
        $region20: #{tpu_custom_call.1} parent=11 // pred_fallthru
          _
        // Predicated region
        $region21: #{tpu_custom_call.1} parent=11 // pred_check
          %p194 = pneg %p108
        $region22: #{tpu_custom_call.1} parent=11 // pred_check_branch
          %196 = sbr.rel (%p194) target = $region24
        $region23: #{tpu_custom_call.1} parent=11 // pred_region
          %s198 = ssub.s32 96, 96
          %199 = vsyncadd [#allocation9], %s198
          %s201 = sshll.u32 [#allocation8], 4
          %s202 = int_to_ptr.vmem [resolvable:$true] %s201
          %204 = dma.hbm_to_vmem [thread:$0]  %s3, 96, %s202, [#allocation9]
        $region24: #{tpu_custom_call.1} parent=11 // pred_fallthru
          _
        // Predicated region
        $region25: #{tpu_custom_call.1} parent=11 // pred_check
          %p205 = pneg %p129
        $region26: #{tpu_custom_call.1} parent=11 // pred_check_branch
          %207 = sbr.rel (%p205) target = $region28
        $region27: #{tpu_custom_call.1} parent=11 // pred_region
          %s209 = ssub.s32 96, 96
          %210 = vsyncadd [#allocation9], %s209
          %s212 = sshll.u32 [#allocation10], 4
          %s213 = int_to_ptr.vmem [resolvable:$true] %s212
          %215 = dma.hbm_to_vmem [thread:$0]  %s4, 96, %s213, [#allocation9]
        $region28: #{tpu_custom_call.1} parent=11 // pred_fallthru
          _
      $region12: #{tpu_custom_call.1} parent=5 // pred_fallthru
        _
      %p216 = scmp.lt.s32.totalorder %s19, 2
      // Predicated region
      $region29: #{tpu_custom_call.1} parent=5 // pred_check
        %p217 = pneg %p216
      $region30: #{tpu_custom_call.1} parent=5 // pred_check_branch
        %219 = sbr.rel (%p217) target = $region32
      $region31: #{tpu_custom_call.1} parent=5 // pred_region
        // Predicated region
        $region33: #{tpu_custom_call.1} parent=31 // pred_check
          %p220 = pneg %p39
        $region34: #{tpu_custom_call.1} parent=31 // pred_check_branch
          %222 = sbr.rel (%p220) target = $region36
        $region35: #{tpu_custom_call.1} parent=31 // pred_region
          %s223 = sand.u32 %s29, 1
          %s224 = scalar_lea.sflag [#allocation3], %s223
          %s225 = sand.u32 %s29, 1
          %s226 = smul.addr %s225, 48
          %s227 = scalar_lea.vmem [#allocation2], %s226
          %s229 = ssub.s32 768, 768
          %230 = vsyncadd %s224, %s229
          %s231 = smul.addr %s19, 6
          %s232 = smul.addr %s231, 128
          %s233 = scalar_lea.hbm %s0, %s232
          %s235 = sshll.u32 %s227, 4
          %s236 = int_to_ptr.vmem [resolvable:$true] %s235
          %238 = dma.hbm_to_vmem [thread:$0]  %s233, 768, %s236, %s224
        $region36: #{tpu_custom_call.1} parent=31 // pred_fallthru
          _
      $region32: #{tpu_custom_call.1} parent=5 // pred_fallthru
        _
      %p239 = scmp.le.s32.totalorder 1, %s19
      %p240 = scmp.lt.s32.totalorder %s19, 3
      %p241 = pnand %p239, %p240
      %p242 = pneg %p241
      // Predicated region
      $region37: #{tpu_custom_call.1} parent=5 // pred_check
        _
      $region38: #{tpu_custom_call.1} parent=5 // pred_check_branch
        %244 = sbr.rel (%p241) target = $region40
      $region39: #{tpu_custom_call.1} parent=5 // pred_region
        %s245 = ssub.s32 %s19, 1
        %s246 = sand.u32 %s32, 1
        %s247 = scalar_lea.sflag [#allocation3], %s246
        %s248 = sand.u32 %s32, 1
        %s249 = smul.addr %s248, 48
        %s250 = scalar_lea.vmem [#allocation2], %s249
        // Predicated region
        $region41: #{tpu_custom_call.1} parent=39 // pred_check
          %p251 = pneg %p45
        $region42: #{tpu_custom_call.1} parent=39 // pred_check_branch
          %253 = sbr.rel (%p251) target = $region44
        $region43: #{tpu_custom_call.1} parent=39 // pred_region
          %254 = dma.done %s247, 768
        $region44: #{tpu_custom_call.1} parent=39 // pred_fallthru
          _
        // Predicated region
        $region45: #{tpu_custom_call.1} parent=39 // pred_check
          %p255 = pneg %p66
        $region46: #{tpu_custom_call.1} parent=39 // pred_check_branch
          %257 = sbr.rel (%p255) target = $region48
        $region47: #{tpu_custom_call.1} parent=39 // pred_region
          %258 = dma.done [#allocation6], 36864
        $region48: #{tpu_custom_call.1} parent=39 // pred_fallthru
          _
        // Predicated region
        $region49: #{tpu_custom_call.1} parent=39 // pred_check
          %p259 = pneg %p87
        $region50: #{tpu_custom_call.1} parent=39 // pred_check_branch
          %261 = sbr.rel (%p259) target = $region52
        $region51: #{tpu_custom_call.1} parent=39 // pred_region
          %262 = dma.done [#allocation6], 96
        $region52: #{tpu_custom_call.1} parent=39 // pred_fallthru
          _
        // Predicated region
        $region53: #{tpu_custom_call.1} parent=39 // pred_check
          %p263 = pneg %p108
        $region54: #{tpu_custom_call.1} parent=39 // pred_check_branch
          %265 = sbr.rel (%p263) target = $region56
        $region55: #{tpu_custom_call.1} parent=39 // pred_region
          %266 = dma.done [#allocation9], 96
        $region56: #{tpu_custom_call.1} parent=39 // pred_fallthru
          _
        // Predicated region
        $region57: #{tpu_custom_call.1} parent=39 // pred_check
          %p267 = pneg %p129
        $region58: #{tpu_custom_call.1} parent=39 // pred_check_branch
          %269 = sbr.rel (%p267) target = $region60
        $region59: #{tpu_custom_call.1} parent=39 // pred_region
          %270 = dma.done [#allocation9], 96
        $region60: #{tpu_custom_call.1} parent=39 // pred_fallthru
          _
        %s271 = sand.u32 %s32, 1
        %s272 = scalar_lea.sflag [#allocation3], %s271
        %s273 = sand.u32 %s32, 1
        %s274 = smul.addr %s273, 48
        %s275 = scalar_lea.vmem [#allocation2], %s274
        %p276 = pneg %p45
        %p277 = pneg %p42
        %p278 = pneg %p66
        %p279 = pneg %p63
        %p280 = pneg %p87
        %p281 = pneg %p84
        %p282 = pneg %p108
        %p283 = pneg %p105
        %p284 = pneg %p129
        %p285 = pneg %p126
        %p286 = pneg %p155
        %p287 = pneg %p152
        %s288 = sand.u32 %s142, 1
        %s289 = scalar_lea.sflag [#allocation4], %s288
        %s290 = sand.u32 %s142, 1
        %s291 = smul.addr %s290, 48
        %s292 = scalar_lea.vmem [#allocation11], %s291
        %v293 = vld [vmem:[#allocation5] sm:$0xff]
        %v294 = vld [vmem:[#allocation5 + $0x8] sm:$0xff]
        %v295 = vld [vmem:[#allocation5 + $0x10] sm:$0xff]
        %v296 = vld [vmem:[#allocation5 + $0x18] sm:$0xff]
        %v297 = vld [vmem:[#allocation5 + $0x20] sm:$0xff]
        %v298 = vld [vmem:[#allocation5 + $0x28] sm:$0xff]
        %v299 = vld [vmem:[#allocation5 + $0x30] sm:$0xff]
        %v300 = vld [vmem:[#allocation5 + $0x38] sm:$0xff]
        %v301 = vld [vmem:[#allocation5 + $0x40] sm:$0xff]
        %v302 = vld [vmem:[#allocation5 + $0x48] sm:$0xff]
        %v303 = vld [vmem:[#allocation5 + $0x50] sm:$0xff]
        %v304 = vld [vmem:[#allocation5 + $0x58] sm:$0xff]
        %v305 = vld [vmem:[#allocation5 + $0x60] sm:$0xff]
        %v306 = vld [vmem:[#allocation5 + $0x68] sm:$0xff]
        %v307 = vld [vmem:[#allocation5 + $0x70] sm:$0xff]
        %v308 = vld [vmem:[#allocation5 + $0x78] sm:$0xff]
        %v309 = vld [vmem:[#allocation5 + $0x80] sm:$0xff]
        %v310 = vld [vmem:[#allocation5 + $0x88] sm:$0xff]
        %v311 = vld [vmem:[#allocation5 + $0x90] sm:$0xff]
        %v312 = vld [vmem:[#allocation5 + $0x98] sm:$0xff]
        %v313 = vld [vmem:[#allocation5 + $0xa0] sm:$0xff]
        %v314 = vld [vmem:[#allocation5 + $0xa8] sm:$0xff]
        %v315 = vld [vmem:[#allocation5 + $0xb0] sm:$0xff]
        %v316 = vld [vmem:[#allocation5 + $0xb8] sm:$0xff]
        %v317 = vld [vmem:[#allocation5 + $0xc0] sm:$0xff]
        %v318 = vld [vmem:[#allocation5 + $0xc8] sm:$0xff]
        %v319 = vld [vmem:[#allocation5 + $0xd0] sm:$0xff]
        %v320 = vld [vmem:[#allocation5 + $0xd8] sm:$0xff]
        %v321 = vld [vmem:[#allocation5 + $0xe0] sm:$0xff]
        %v322 = vld [vmem:[#allocation5 + $0xe8] sm:$0xff]
        %v323 = vld [vmem:[#allocation5 + $0xf0] sm:$0xff]
        %v324 = vld [vmem:[#allocation5 + $0xf8] sm:$0xff]
        %v325 = vld [vmem:[#allocation5 + $0x100] sm:$0xff]
        %v326 = vld [vmem:[#allocation5 + $0x108] sm:$0xff]
        %v327 = vld [vmem:[#allocation5 + $0x110] sm:$0xff]
        %v328 = vld [vmem:[#allocation5 + $0x118] sm:$0xff]
        %v329 = vld [vmem:[#allocation5 + $0x120] sm:$0xff]
        %v330 = vld [vmem:[#allocation5 + $0x128] sm:$0xff]
        %v331 = vld [vmem:[#allocation5 + $0x130] sm:$0xff]
        %v332 = vld [vmem:[#allocation5 + $0x138] sm:$0xff]
        %v333 = vld [vmem:[#allocation5 + $0x140] sm:$0xff]
        %v334 = vld [vmem:[#allocation5 + $0x148] sm:$0xff]
        %v335 = vld [vmem:[#allocation5 + $0x150] sm:$0xff]
        %v336 = vld [vmem:[#allocation5 + $0x158] sm:$0xff]
        %v337 = vld [vmem:[#allocation5 + $0x160] sm:$0xff]
        %v338 = vld [vmem:[#allocation5 + $0x168] sm:$0xff]
        %v339 = vld [vmem:[#allocation5 + $0x170] sm:$0xff]
        %v340 = vld [vmem:[#allocation5 + $0x178] sm:$0xff]
        %v341 = vld [vmem:[#allocation5 + $0x180] sm:$0xff]
        %v342 = vld [vmem:[#allocation5 + $0x188] sm:$0xff]
        %v343 = vld [vmem:[#allocation5 + $0x190] sm:$0xff]
        %v344 = vld [vmem:[#allocation5 + $0x198] sm:$0xff]
        %v345 = vld [vmem:[#allocation5 + $0x1a0] sm:$0xff]
        %v346 = vld [vmem:[#allocation5 + $0x1a8] sm:$0xff]
        %v347 = vld [vmem:[#allocation5 + $0x1b0] sm:$0xff]
        %v348 = vld [vmem:[#allocation5 + $0x1b8] sm:$0xff]
        %v349 = vld [vmem:[#allocation5 + $0x1c0] sm:$0xff]
        %v350 = vld [vmem:[#allocation5 + $0x1c8] sm:$0xff]
        %v351 = vld [vmem:[#allocation5 + $0x1d0] sm:$0xff]
        %v352 = vld [vmem:[#allocation5 + $0x1d8] sm:$0xff]
        %v353 = vld [vmem:[#allocation5 + $0x1e0] sm:$0xff]
        %v354 = vld [vmem:[#allocation5 + $0x1e8] sm:$0xff]
        %v355 = vld [vmem:[#allocation5 + $0x1f0] sm:$0xff]
        %v356 = vld [vmem:[#allocation5 + $0x1f8] sm:$0xff]
        %v357 = vld [vmem:[#allocation5 + $0x200] sm:$0xff]
        %v358 = vld [vmem:[#allocation5 + $0x208] sm:$0xff]
        %v359 = vld [vmem:[#allocation5 + $0x210] sm:$0xff]
        %v360 = vld [vmem:[#allocation5 + $0x218] sm:$0xff]
        %v361 = vld [vmem:[#allocation5 + $0x220] sm:$0xff]
        %v362 = vld [vmem:[#allocation5 + $0x228] sm:$0xff]
        %v363 = vld [vmem:[#allocation5 + $0x230] sm:$0xff]
        %v364 = vld [vmem:[#allocation5 + $0x238] sm:$0xff]
        %v365 = vld [vmem:[#allocation5 + $0x240] sm:$0xff]
        %v366 = vld [vmem:[#allocation5 + $0x248] sm:$0xff]
        %v367 = vld [vmem:[#allocation5 + $0x250] sm:$0xff]
        %v368 = vld [vmem:[#allocation5 + $0x258] sm:$0xff]
        %v369 = vld [vmem:[#allocation5 + $0x260] sm:$0xff]
        %v370 = vld [vmem:[#allocation5 + $0x268] sm:$0xff]
        %v371 = vld [vmem:[#allocation5 + $0x270] sm:$0xff]
        %v372 = vld [vmem:[#allocation5 + $0x278] sm:$0xff]
        %v373 = vld [vmem:[#allocation5 + $0x280] sm:$0xff]
        %v374 = vld [vmem:[#allocation5 + $0x288] sm:$0xff]
        %v375 = vld [vmem:[#allocation5 + $0x290] sm:$0xff]
        %v376 = vld [vmem:[#allocation5 + $0x298] sm:$0xff]
        %v377 = vld [vmem:[#allocation5 + $0x2a0] sm:$0xff]
        %v378 = vld [vmem:[#allocation5 + $0x2a8] sm:$0xff]
        %v379 = vld [vmem:[#allocation5 + $0x2b0] sm:$0xff]
        %v380 = vld [vmem:[#allocation5 + $0x2b8] sm:$0xff]
        %v381 = vld [vmem:[#allocation5 + $0x2c0] sm:$0xff]
        %v382 = vld [vmem:[#allocation5 + $0x2c8] sm:$0xff]
        %v383 = vld [vmem:[#allocation5 + $0x2d0] sm:$0xff]
        %v384 = vld [vmem:[#allocation5 + $0x2d8] sm:$0xff]
        %v385 = vld [vmem:[#allocation5 + $0x2e0] sm:$0xff]
        %v386 = vld [vmem:[#allocation5 + $0x2e8] sm:$0xff]
        %v387 = vld [vmem:[#allocation5 + $0x2f0] sm:$0xff]
        %v388 = vld [vmem:[#allocation5 + $0x2f8] sm:$0xff]
        %v389 = vld [vmem:[#allocation5 + $0x300] sm:$0xff]
        %v390 = vld [vmem:[#allocation5 + $0x308] sm:$0xff]
        %v391 = vld [vmem:[#allocation5 + $0x310] sm:$0xff]
        %v392 = vld [vmem:[#allocation5 + $0x318] sm:$0xff]
        %v393 = vld [vmem:[#allocation5 + $0x320] sm:$0xff]
        %v394 = vld [vmem:[#allocation5 + $0x328] sm:$0xff]
        %v395 = vld [vmem:[#allocation5 + $0x330] sm:$0xff]
        %v396 = vld [vmem:[#allocation5 + $0x338] sm:$0xff]
        %v397 = vld [vmem:[#allocation5 + $0x340] sm:$0xff]
        %v398 = vld [vmem:[#allocation5 + $0x348] sm:$0xff]
        %v399 = vld [vmem:[#allocation5 + $0x350] sm:$0xff]
        %v400 = vld [vmem:[#allocation5 + $0x358] sm:$0xff]
        %v401 = vld [vmem:[#allocation5 + $0x360] sm:$0xff]
        %v402 = vld [vmem:[#allocation5 + $0x368] sm:$0xff]
        %v403 = vld [vmem:[#allocation5 + $0x370] sm:$0xff]
        %v404 = vld [vmem:[#allocation5 + $0x378] sm:$0xff]
        %v405 = vld [vmem:[#allocation5 + $0x380] sm:$0xff]
        %v406 = vld [vmem:[#allocation5 + $0x388] sm:$0xff]
        %v407 = vld [vmem:[#allocation5 + $0x390] sm:$0xff]
        %v408 = vld [vmem:[#allocation5 + $0x398] sm:$0xff]
        %v409 = vld [vmem:[#allocation5 + $0x3a0] sm:$0xff]
        %v410 = vld [vmem:[#allocation5 + $0x3a8] sm:$0xff]
        %v411 = vld [vmem:[#allocation5 + $0x3b0] sm:$0xff]
        %v412 = vld [vmem:[#allocation5 + $0x3b8] sm:$0xff]
        %v413 = vld [vmem:[#allocation5 + $0x3c0] sm:$0xff]
        %v414 = vld [vmem:[#allocation5 + $0x3c8] sm:$0xff]
        %v415 = vld [vmem:[#allocation5 + $0x3d0] sm:$0xff]
        %v416 = vld [vmem:[#allocation5 + $0x3d8] sm:$0xff]
        %v417 = vld [vmem:[#allocation5 + $0x3e0] sm:$0xff]
        %v418 = vld [vmem:[#allocation5 + $0x3e8] sm:$0xff]
        %v419 = vld [vmem:[#allocation5 + $0x3f0] sm:$0xff]
        %v420 = vld [vmem:[#allocation5 + $0x3f8] sm:$0xff]
        %v421 = vld [vmem:[#allocation5 + $0x400] sm:$0xff]
        %v422 = vld [vmem:[#allocation5 + $0x408] sm:$0xff]
        %v423 = vld [vmem:[#allocation5 + $0x410] sm:$0xff]
        %v424 = vld [vmem:[#allocation5 + $0x418] sm:$0xff]
        %v425 = vld [vmem:[#allocation5 + $0x420] sm:$0xff]
        %v426 = vld [vmem:[#allocation5 + $0x428] sm:$0xff]
        %v427 = vld [vmem:[#allocation5 + $0x430] sm:$0xff]
        %v428 = vld [vmem:[#allocation5 + $0x438] sm:$0xff]
        %v429 = vld [vmem:[#allocation5 + $0x440] sm:$0xff]
        %v430 = vld [vmem:[#allocation5 + $0x448] sm:$0xff]
        %v431 = vld [vmem:[#allocation5 + $0x450] sm:$0xff]
        %v432 = vld [vmem:[#allocation5 + $0x458] sm:$0xff]
        %v433 = vld [vmem:[#allocation5 + $0x460] sm:$0xff]
        %v434 = vld [vmem:[#allocation5 + $0x468] sm:$0xff]
        %v435 = vld [vmem:[#allocation5 + $0x470] sm:$0xff]
        %v436 = vld [vmem:[#allocation5 + $0x478] sm:$0xff]
        %v437 = vld [vmem:[#allocation5 + $0x480] sm:$0xff]
        %v438 = vld [vmem:[#allocation5 + $0x488] sm:$0xff]
        %v439 = vld [vmem:[#allocation5 + $0x490] sm:$0xff]
        %v440 = vld [vmem:[#allocation5 + $0x498] sm:$0xff]
        %v441 = vld [vmem:[#allocation5 + $0x4a0] sm:$0xff]
        %v442 = vld [vmem:[#allocation5 + $0x4a8] sm:$0xff]
        %v443 = vld [vmem:[#allocation5 + $0x4b0] sm:$0xff]
        %v444 = vld [vmem:[#allocation5 + $0x4b8] sm:$0xff]
        %v445 = vld [vmem:[#allocation5 + $0x4c0] sm:$0xff]
        %v446 = vld [vmem:[#allocation5 + $0x4c8] sm:$0xff]
        %v447 = vld [vmem:[#allocation5 + $0x4d0] sm:$0xff]
        %v448 = vld [vmem:[#allocation5 + $0x4d8] sm:$0xff]
        %v449 = vld [vmem:[#allocation5 + $0x4e0] sm:$0xff]
        %v450 = vld [vmem:[#allocation5 + $0x4e8] sm:$0xff]
        %v451 = vld [vmem:[#allocation5 + $0x4f0] sm:$0xff]
        %v452 = vld [vmem:[#allocation5 + $0x4f8] sm:$0xff]
        %v453 = vld [vmem:[#allocation5 + $0x500] sm:$0xff]
        %v454 = vld [vmem:[#allocation5 + $0x508] sm:$0xff]
        %v455 = vld [vmem:[#allocation5 + $0x510] sm:$0xff]
        %v456 = vld [vmem:[#allocation5 + $0x518] sm:$0xff]
        %v457 = vld [vmem:[#allocation5 + $0x520] sm:$0xff]
        %v458 = vld [vmem:[#allocation5 + $0x528] sm:$0xff]
        %v459 = vld [vmem:[#allocation5 + $0x530] sm:$0xff]
        %v460 = vld [vmem:[#allocation5 + $0x538] sm:$0xff]
        %v461 = vld [vmem:[#allocation5 + $0x540] sm:$0xff]
        %v462 = vld [vmem:[#allocation5 + $0x548] sm:$0xff]
        %v463 = vld [vmem:[#allocation5 + $0x550] sm:$0xff]
        %v464 = vld [vmem:[#allocation5 + $0x558] sm:$0xff]
        %v465 = vld [vmem:[#allocation5 + $0x560] sm:$0xff]
        %v466 = vld [vmem:[#allocation5 + $0x568] sm:$0xff]
        %v467 = vld [vmem:[#allocation5 + $0x570] sm:$0xff]
        %v468 = vld [vmem:[#allocation5 + $0x578] sm:$0xff]
        %v469 = vld [vmem:[#allocation5 + $0x580] sm:$0xff]
        %v470 = vld [vmem:[#allocation5 + $0x588] sm:$0xff]
        %v471 = vld [vmem:[#allocation5 + $0x590] sm:$0xff]
        %v472 = vld [vmem:[#allocation5 + $0x598] sm:$0xff]
        %v473 = vld [vmem:[#allocation5 + $0x5a0] sm:$0xff]
        %v474 = vld [vmem:[#allocation5 + $0x5a8] sm:$0xff]
        %v475 = vld [vmem:[#allocation5 + $0x5b0] sm:$0xff]
        %v476 = vld [vmem:[#allocation5 + $0x5b8] sm:$0xff]
        %v477 = vld [vmem:[#allocation5 + $0x5c0] sm:$0xff]
        %v478 = vld [vmem:[#allocation5 + $0x5c8] sm:$0xff]
        %v479 = vld [vmem:[#allocation5 + $0x5d0] sm:$0xff]
        %v480 = vld [vmem:[#allocation5 + $0x5d8] sm:$0xff]
        %v481 = vld [vmem:[#allocation5 + $0x5e0] sm:$0xff]
        %v482 = vld [vmem:[#allocation5 + $0x5e8] sm:$0xff]
        %v483 = vld [vmem:[#allocation5 + $0x5f0] sm:$0xff]
        %v484 = vld [vmem:[#allocation5 + $0x5f8] sm:$0xff]
        %v485 = vld [vmem:[#allocation5 + $0x600] sm:$0xff]
        %v486 = vld [vmem:[#allocation5 + $0x608] sm:$0xff]
        %v487 = vld [vmem:[#allocation5 + $0x610] sm:$0xff]
        %v488 = vld [vmem:[#allocation5 + $0x618] sm:$0xff]
        %v489 = vld [vmem:[#allocation5 + $0x620] sm:$0xff]
        %v490 = vld [vmem:[#allocation5 + $0x628] sm:$0xff]
        %v491 = vld [vmem:[#allocation5 + $0x630] sm:$0xff]
        %v492 = vld [vmem:[#allocation5 + $0x638] sm:$0xff]
        %v493 = vld [vmem:[#allocation5 + $0x640] sm:$0xff]
        %v494 = vld [vmem:[#allocation5 + $0x648] sm:$0xff]
        %v495 = vld [vmem:[#allocation5 + $0x650] sm:$0xff]
        %v496 = vld [vmem:[#allocation5 + $0x658] sm:$0xff]
        %v497 = vld [vmem:[#allocation5 + $0x660] sm:$0xff]
        %v498 = vld [vmem:[#allocation5 + $0x668] sm:$0xff]
        %v499 = vld [vmem:[#allocation5 + $0x670] sm:$0xff]
        %v500 = vld [vmem:[#allocation5 + $0x678] sm:$0xff]
        %v501 = vld [vmem:[#allocation5 + $0x680] sm:$0xff]
        %v502 = vld [vmem:[#allocation5 + $0x688] sm:$0xff]
        %v503 = vld [vmem:[#allocation5 + $0x690] sm:$0xff]
        %v504 = vld [vmem:[#allocation5 + $0x698] sm:$0xff]
        %v505 = vld [vmem:[#allocation5 + $0x6a0] sm:$0xff]
        %v506 = vld [vmem:[#allocation5 + $0x6a8] sm:$0xff]
        %v507 = vld [vmem:[#allocation5 + $0x6b0] sm:$0xff]
        %v508 = vld [vmem:[#allocation5 + $0x6b8] sm:$0xff]
        %v509 = vld [vmem:[#allocation5 + $0x6c0] sm:$0xff]
        %v510 = vld [vmem:[#allocation5 + $0x6c8] sm:$0xff]
        %v511 = vld [vmem:[#allocation5 + $0x6d0] sm:$0xff]
        %v512 = vld [vmem:[#allocation5 + $0x6d8] sm:$0xff]
        %v513 = vld [vmem:[#allocation5 + $0x6e0] sm:$0xff]
        %v514 = vld [vmem:[#allocation5 + $0x6e8] sm:$0xff]
        %v515 = vld [vmem:[#allocation5 + $0x6f0] sm:$0xff]
        %v516 = vld [vmem:[#allocation5 + $0x6f8] sm:$0xff]
        %v517 = vld [vmem:[#allocation5 + $0x700] sm:$0xff]
        %v518 = vld [vmem:[#allocation5 + $0x708] sm:$0xff]
        %v519 = vld [vmem:[#allocation5 + $0x710] sm:$0xff]
        %v520 = vld [vmem:[#allocation5 + $0x718] sm:$0xff]
        %v521 = vld [vmem:[#allocation5 + $0x720] sm:$0xff]
        %v522 = vld [vmem:[#allocation5 + $0x728] sm:$0xff]
        %v523 = vld [vmem:[#allocation5 + $0x730] sm:$0xff]
        %v524 = vld [vmem:[#allocation5 + $0x738] sm:$0xff]
        %v525 = vld [vmem:[#allocation5 + $0x740] sm:$0xff]
        %v526 = vld [vmem:[#allocation5 + $0x748] sm:$0xff]
        %v527 = vld [vmem:[#allocation5 + $0x750] sm:$0xff]
        %v528 = vld [vmem:[#allocation5 + $0x758] sm:$0xff]
        %v529 = vld [vmem:[#allocation5 + $0x760] sm:$0xff]
        %v530 = vld [vmem:[#allocation5 + $0x768] sm:$0xff]
        %v531 = vld [vmem:[#allocation5 + $0x770] sm:$0xff]
        %v532 = vld [vmem:[#allocation5 + $0x778] sm:$0xff]
        %v533 = vld [vmem:[#allocation5 + $0x780] sm:$0xff]
        %v534 = vld [vmem:[#allocation5 + $0x788] sm:$0xff]
        %v535 = vld [vmem:[#allocation5 + $0x790] sm:$0xff]
        %v536 = vld [vmem:[#allocation5 + $0x798] sm:$0xff]
        %v537 = vld [vmem:[#allocation5 + $0x7a0] sm:$0xff]
        %v538 = vld [vmem:[#allocation5 + $0x7a8] sm:$0xff]
        %v539 = vld [vmem:[#allocation5 + $0x7b0] sm:$0xff]
        %v540 = vld [vmem:[#allocation5 + $0x7b8] sm:$0xff]
        %v541 = vld [vmem:[#allocation5 + $0x7c0] sm:$0xff]
        %v542 = vld [vmem:[#allocation5 + $0x7c8] sm:$0xff]
        %v543 = vld [vmem:[#allocation5 + $0x7d0] sm:$0xff]
        %v544 = vld [vmem:[#allocation5 + $0x7d8] sm:$0xff]
        %v545 = vld [vmem:[#allocation5 + $0x7e0] sm:$0xff]
        %v546 = vld [vmem:[#allocation5 + $0x7e8] sm:$0xff]
        %v547 = vld [vmem:[#allocation5 + $0x7f0] sm:$0xff]
        %v548 = vld [vmem:[#allocation5 + $0x7f8] sm:$0xff]
        %v549 = vld [vmem:[#allocation5 + $0x800] sm:$0xff]
        %v550 = vld [vmem:[#allocation5 + $0x808] sm:$0xff]
        %v551 = vld [vmem:[#allocation5 + $0x810] sm:$0xff]
        %v552 = vld [vmem:[#allocation5 + $0x818] sm:$0xff]
        %v553 = vld [vmem:[#allocation5 + $0x820] sm:$0xff]
        %v554 = vld [vmem:[#allocation5 + $0x828] sm:$0xff]
        %v555 = vld [vmem:[#allocation5 + $0x830] sm:$0xff]
        %v556 = vld [vmem:[#allocation5 + $0x838] sm:$0xff]
        %v557 = vld [vmem:[#allocation5 + $0x840] sm:$0xff]
        %v558 = vld [vmem:[#allocation5 + $0x848] sm:$0xff]
        %v559 = vld [vmem:[#allocation5 + $0x850] sm:$0xff]
        %v560 = vld [vmem:[#allocation5 + $0x858] sm:$0xff]
        %v561 = vld [vmem:[#allocation5 + $0x860] sm:$0xff]
        %v562 = vld [vmem:[#allocation5 + $0x868] sm:$0xff]
        %v563 = vld [vmem:[#allocation5 + $0x870] sm:$0xff]
        %v564 = vld [vmem:[#allocation5 + $0x878] sm:$0xff]
        %v565 = vld [vmem:[#allocation5 + $0x880] sm:$0xff]
        %v566 = vld [vmem:[#allocation5 + $0x888] sm:$0xff]
        %v567 = vld [vmem:[#allocation5 + $0x890] sm:$0xff]
        %v568 = vld [vmem:[#allocation5 + $0x898] sm:$0xff]
        %v569 = vld [vmem:[#allocation5 + $0x8a0] sm:$0xff]
        %v570 = vld [vmem:[#allocation5 + $0x8a8] sm:$0xff]
        %v571 = vld [vmem:[#allocation5 + $0x8b0] sm:$0xff]
        %v572 = vld [vmem:[#allocation5 + $0x8b8] sm:$0xff]
        %v573 = vld [vmem:[#allocation5 + $0x8c0] sm:$0xff]
        %v574 = vld [vmem:[#allocation5 + $0x8c8] sm:$0xff]
        %v575 = vld [vmem:[#allocation5 + $0x8d0] sm:$0xff]
        %v576 = vld [vmem:[#allocation5 + $0x8d8] sm:$0xff]
        %v577 = vld [vmem:[#allocation5 + $0x8e0] sm:$0xff]
        %v578 = vld [vmem:[#allocation5 + $0x8e8] sm:$0xff]
        %v579 = vld [vmem:[#allocation5 + $0x8f0] sm:$0xff]
        %v580 = vld [vmem:[#allocation5 + $0x8f8] sm:$0xff]
        %v581 = vld [vmem:[%s250] sm:$0xff]
        %v582 = vld [vmem:[%s250 + $0x8] sm:$0xff]
        %v583 = vld [vmem:[%s250 + $0x10] sm:$0xff]
        %v584 = vld [vmem:[%s250 + $0x18] sm:$0xff]
        %v585 = vld [vmem:[%s250 + $0x20] sm:$0xff]
        %v586 = vld [vmem:[%s250 + $0x28] sm:$0xff]
        %v587 = vpack.c.bf16 %v581, %v581
        %v588 = vpack.c.bf16 %v582, %v582
        %v589 = vpack.c.bf16 %v583, %v583
        %v590 = vpack.c.bf16 %v584, %v584
        %v591 = vpack.c.bf16 %v585, %v585
        %v592 = vpack.c.bf16 %v586, %v586
        %v593 = vld [vmem:[#allocation7] sm:$0x3f]
        %v595 = vlaneseq
        %v596 = vshrl.u32 %v595, 7
        %v597 = vsub.s32 0, %v596
        %v598 = vrot.slane %v593, %v597
        %v599 = vlaneseq
        %v600 = vshrl.u32 %v599, 7
        %v601 = vsub.s32 1, %v600
        %v602 = vrot.slane %v593, %v601
        %v603 = vlaneseq
        %v604 = vshrl.u32 %v603, 7
        %v605 = vsub.s32 2, %v604
        %v606 = vrot.slane %v593, %v605
        %v607 = vlaneseq
        %v608 = vshrl.u32 %v607, 7
        %v609 = vsub.s32 3, %v608
        %v610 = vrot.slane %v593, %v609
        %v611 = vlaneseq
        %v612 = vshrl.u32 %v611, 7
        %v613 = vsub.s32 4, %v612
        %v614 = vrot.slane %v593, %v613
        %v615 = vlaneseq
        %v616 = vshrl.u32 %v615, 7
        %v617 = vsub.s32 5, %v616
        %v618 = vrot.slane %v593, %v617
        %v913 = vunpack.c.l.b16 %v293
        %v914 = vunpack.c.h.b16 %v293
        %v915 = vunpack.c.l.b16 %v294
        %v916 = vunpack.c.h.b16 %v294
        %v917 = vunpack.c.l.b16 %v295
        %v918 = vunpack.c.h.b16 %v295
        %v919 = vunpack.c.l.b16 %v296
        %v920 = vunpack.c.h.b16 %v296
        %v921 = vunpack.c.l.b16 %v297
        %v922 = vunpack.c.h.b16 %v297
        %v923 = vunpack.c.l.b16 %v298
        %v924 = vunpack.c.h.b16 %v298
        %v925 = vunpack.c.l.b16 %v299
        %v926 = vunpack.c.h.b16 %v299
        %v927 = vunpack.c.l.b16 %v300
        %v928 = vunpack.c.h.b16 %v300
        %v929 = vunpack.c.l.b16 %v301
        %v930 = vunpack.c.h.b16 %v301
        %v931 = vunpack.c.l.b16 %v302
        %v932 = vunpack.c.h.b16 %v302
        %v933 = vunpack.c.l.b16 %v303
        %v934 = vunpack.c.h.b16 %v303
        %v935 = vunpack.c.l.b16 %v304
        %v936 = vunpack.c.h.b16 %v304
        %v937 = vunpack.c.l.b16 %v305
        %v938 = vunpack.c.h.b16 %v305
        %v939 = vunpack.c.l.b16 %v306
        %v940 = vunpack.c.h.b16 %v306
        %v941 = vunpack.c.l.b16 %v307
        %v942 = vunpack.c.h.b16 %v307
        %v943 = vunpack.c.l.b16 %v308
        %v944 = vunpack.c.h.b16 %v308
        %v945 = vunpack.c.l.b16 %v309
        %v946 = vunpack.c.h.b16 %v309
        %v947 = vunpack.c.l.b16 %v310
        %v948 = vunpack.c.h.b16 %v310
        %v949 = vunpack.c.l.b16 %v311
        %v950 = vunpack.c.h.b16 %v311
        %v951 = vunpack.c.l.b16 %v312
        %v952 = vunpack.c.h.b16 %v312
        %v953 = vunpack.c.l.b16 %v313
        %v954 = vunpack.c.h.b16 %v313
        %v955 = vunpack.c.l.b16 %v314
        %v956 = vunpack.c.h.b16 %v314
        %v957 = vunpack.c.l.b16 %v315
        %v958 = vunpack.c.h.b16 %v315
        %v959 = vunpack.c.l.b16 %v316
        %v960 = vunpack.c.h.b16 %v316
        %v961 = vunpack.c.l.b16 %v317
        %v962 = vunpack.c.h.b16 %v317
        %v963 = vunpack.c.l.b16 %v318
        %v964 = vunpack.c.h.b16 %v318
        %v965 = vunpack.c.l.b16 %v319
        %v966 = vunpack.c.h.b16 %v319
        %v967 = vunpack.c.l.b16 %v320
        %v968 = vunpack.c.h.b16 %v320
        %v969 = vunpack.c.l.b16 %v321
        %v970 = vunpack.c.h.b16 %v321
        %v971 = vunpack.c.l.b16 %v322
        %v972 = vunpack.c.h.b16 %v322
        %v973 = vunpack.c.l.b16 %v323
        %v974 = vunpack.c.h.b16 %v323
        %v975 = vunpack.c.l.b16 %v324
        %v976 = vunpack.c.h.b16 %v324
        %v977 = vunpack.c.l.b16 %v325
        %v978 = vunpack.c.h.b16 %v325
        %v979 = vunpack.c.l.b16 %v326
        %v980 = vunpack.c.h.b16 %v326
        %v981 = vunpack.c.l.b16 %v327
        %v982 = vunpack.c.h.b16 %v327
        %v983 = vunpack.c.l.b16 %v328
        %v984 = vunpack.c.h.b16 %v328
        %v985 = vunpack.c.l.b16 %v329
        %v986 = vunpack.c.h.b16 %v329
        %v987 = vunpack.c.l.b16 %v330
        %v988 = vunpack.c.h.b16 %v330
        %v989 = vunpack.c.l.b16 %v331
        %v990 = vunpack.c.h.b16 %v331
        %v991 = vunpack.c.l.b16 %v332
        %v992 = vunpack.c.h.b16 %v332
        %v993 = vunpack.c.l.b16 %v333
        %v994 = vunpack.c.h.b16 %v333
        %v995 = vunpack.c.l.b16 %v334
        %v996 = vunpack.c.h.b16 %v334
        %v997 = vunpack.c.l.b16 %v335
        %v998 = vunpack.c.h.b16 %v335
        %v999 = vunpack.c.l.b16 %v336
        %v1000 = vunpack.c.h.b16 %v336
        %v1001 = vunpack.c.l.b16 %v337
        %v1002 = vunpack.c.h.b16 %v337
        %v1003 = vunpack.c.l.b16 %v338
        %v1004 = vunpack.c.h.b16 %v338
        %v1005 = vunpack.c.l.b16 %v339
        %v1006 = vunpack.c.h.b16 %v339
        %v1007 = vunpack.c.l.b16 %v340
        %v1008 = vunpack.c.h.b16 %v340
        %v1009 = vunpack.c.l.b16 %v341
        %v1010 = vunpack.c.h.b16 %v341
        %v1011 = vunpack.c.l.b16 %v342
        %v1012 = vunpack.c.h.b16 %v342
        %v1013 = vunpack.c.l.b16 %v343
        %v1014 = vunpack.c.h.b16 %v343
        %v1015 = vunpack.c.l.b16 %v344
        %v1016 = vunpack.c.h.b16 %v344
        %v1017 = vunpack.c.l.b16 %v345
        %v1018 = vunpack.c.h.b16 %v345
        %v1019 = vunpack.c.l.b16 %v346
        %v1020 = vunpack.c.h.b16 %v346
        %v1021 = vunpack.c.l.b16 %v347
        %v1022 = vunpack.c.h.b16 %v347
        %v1023 = vunpack.c.l.b16 %v348
        %v1024 = vunpack.c.h.b16 %v348
        %v1025 = vunpack.c.l.b16 %v349
        %v1026 = vunpack.c.h.b16 %v349
        %v1027 = vunpack.c.l.b16 %v350
        %v1028 = vunpack.c.h.b16 %v350
        %v1029 = vunpack.c.l.b16 %v351
        %v1030 = vunpack.c.h.b16 %v351
        %v1031 = vunpack.c.l.b16 %v352
        %v1032 = vunpack.c.h.b16 %v352
        %v1033 = vunpack.c.l.b16 %v353
        %v1034 = vunpack.c.h.b16 %v353
        %v1035 = vunpack.c.l.b16 %v354
        %v1036 = vunpack.c.h.b16 %v354
        %v1037 = vunpack.c.l.b16 %v355
        %v1038 = vunpack.c.h.b16 %v355
        %v1039 = vunpack.c.l.b16 %v356
        %v1040 = vunpack.c.h.b16 %v356
        %v1041 = vunpack.c.l.b16 %v357
        %v1042 = vunpack.c.h.b16 %v357
        %v1043 = vunpack.c.l.b16 %v358
        %v1044 = vunpack.c.h.b16 %v358
        %v1045 = vunpack.c.l.b16 %v359
        %v1046 = vunpack.c.h.b16 %v359
        %v1047 = vunpack.c.l.b16 %v360
        %v1048 = vunpack.c.h.b16 %v360
        %v1049 = vunpack.c.l.b16 %v361
        %v1050 = vunpack.c.h.b16 %v361
        %v1051 = vunpack.c.l.b16 %v362
        %v1052 = vunpack.c.h.b16 %v362
        %v1053 = vunpack.c.l.b16 %v363
        %v1054 = vunpack.c.h.b16 %v363
        %v1055 = vunpack.c.l.b16 %v364
        %v1056 = vunpack.c.h.b16 %v364
        %v1057 = vunpack.c.l.b16 %v365
        %v1058 = vunpack.c.h.b16 %v365
        %v1059 = vunpack.c.l.b16 %v366
        %v1060 = vunpack.c.h.b16 %v366
        %v1061 = vunpack.c.l.b16 %v367
        %v1062 = vunpack.c.h.b16 %v367
        %v1063 = vunpack.c.l.b16 %v368
        %v1064 = vunpack.c.h.b16 %v368
        %v1065 = vunpack.c.l.b16 %v369
        %v1066 = vunpack.c.h.b16 %v369
        %v1067 = vunpack.c.l.b16 %v370
        %v1068 = vunpack.c.h.b16 %v370
        %v1069 = vunpack.c.l.b16 %v371
        %v1070 = vunpack.c.h.b16 %v371
        %v1071 = vunpack.c.l.b16 %v372
        %v1072 = vunpack.c.h.b16 %v372
        %v1073 = vunpack.c.l.b16 %v373
        %v1074 = vunpack.c.h.b16 %v373
        %v1075 = vunpack.c.l.b16 %v374
        %v1076 = vunpack.c.h.b16 %v374
        %v1077 = vunpack.c.l.b16 %v375
        %v1078 = vunpack.c.h.b16 %v375
        %v1079 = vunpack.c.l.b16 %v376
        %v1080 = vunpack.c.h.b16 %v376
        %v1081 = vunpack.c.l.b16 %v377
        %v1082 = vunpack.c.h.b16 %v377
        %v1083 = vunpack.c.l.b16 %v378
        %v1084 = vunpack.c.h.b16 %v378
        %v1085 = vunpack.c.l.b16 %v379
        %v1086 = vunpack.c.h.b16 %v379
        %v1087 = vunpack.c.l.b16 %v380
        %v1088 = vunpack.c.h.b16 %v380
        %v1089 = vunpack.c.l.b16 %v381
        %v1090 = vunpack.c.h.b16 %v381
        %v1091 = vunpack.c.l.b16 %v382
        %v1092 = vunpack.c.h.b16 %v382
        %v1093 = vunpack.c.l.b16 %v383
        %v1094 = vunpack.c.h.b16 %v383
        %v1095 = vunpack.c.l.b16 %v384
        %v1096 = vunpack.c.h.b16 %v384
        %v1097 = vunpack.c.l.b16 %v385
        %v1098 = vunpack.c.h.b16 %v385
        %v1099 = vunpack.c.l.b16 %v386
        %v1100 = vunpack.c.h.b16 %v386
        %v1101 = vunpack.c.l.b16 %v387
        %v1102 = vunpack.c.h.b16 %v387
        %v1103 = vunpack.c.l.b16 %v388
        %v1104 = vunpack.c.h.b16 %v388
        %v1105 = vunpack.c.l.b16 %v389
        %v1106 = vunpack.c.h.b16 %v389
        %v1107 = vunpack.c.l.b16 %v390
        %v1108 = vunpack.c.h.b16 %v390
        %v1109 = vunpack.c.l.b16 %v391
        %v1110 = vunpack.c.h.b16 %v391
        %v1111 = vunpack.c.l.b16 %v392
        %v1112 = vunpack.c.h.b16 %v392
        %v1113 = vunpack.c.l.b16 %v393
        %v1114 = vunpack.c.h.b16 %v393
        %v1115 = vunpack.c.l.b16 %v394
        %v1116 = vunpack.c.h.b16 %v394
        %v1117 = vunpack.c.l.b16 %v395
        %v1118 = vunpack.c.h.b16 %v395
        %v1119 = vunpack.c.l.b16 %v396
        %v1120 = vunpack.c.h.b16 %v396
        %v1121 = vunpack.c.l.b16 %v397
        %v1122 = vunpack.c.h.b16 %v397
        %v1123 = vunpack.c.l.b16 %v398
        %v1124 = vunpack.c.h.b16 %v398
        %v1125 = vunpack.c.l.b16 %v399
        %v1126 = vunpack.c.h.b16 %v399
        %v1127 = vunpack.c.l.b16 %v400
        %v1128 = vunpack.c.h.b16 %v400
        %v1129 = vunpack.c.l.b16 %v401
        %v1130 = vunpack.c.h.b16 %v401
        %v1131 = vunpack.c.l.b16 %v402
        %v1132 = vunpack.c.h.b16 %v402
        %v1133 = vunpack.c.l.b16 %v403
        %v1134 = vunpack.c.h.b16 %v403
        %v1135 = vunpack.c.l.b16 %v404
        %v1136 = vunpack.c.h.b16 %v404
        %v1137 = vunpack.c.l.b16 %v405
        %v1138 = vunpack.c.h.b16 %v405
        %v1139 = vunpack.c.l.b16 %v406
        %v1140 = vunpack.c.h.b16 %v406
        %v1141 = vunpack.c.l.b16 %v407
        %v1142 = vunpack.c.h.b16 %v407
        %v1143 = vunpack.c.l.b16 %v408
        %v1144 = vunpack.c.h.b16 %v408
        %v1145 = vunpack.c.l.b16 %v409
        %v1146 = vunpack.c.h.b16 %v409
        %v1147 = vunpack.c.l.b16 %v410
        %v1148 = vunpack.c.h.b16 %v410
        %v1149 = vunpack.c.l.b16 %v411
        %v1150 = vunpack.c.h.b16 %v411
        %v1151 = vunpack.c.l.b16 %v412
        %v1152 = vunpack.c.h.b16 %v412
        %v1153 = vunpack.c.l.b16 %v413
        %v1154 = vunpack.c.h.b16 %v413
        %v1155 = vunpack.c.l.b16 %v414
        %v1156 = vunpack.c.h.b16 %v414
        %v1157 = vunpack.c.l.b16 %v415
        %v1158 = vunpack.c.h.b16 %v415
        %v1159 = vunpack.c.l.b16 %v416
        %v1160 = vunpack.c.h.b16 %v416
        %v1161 = vunpack.c.l.b16 %v417
        %v1162 = vunpack.c.h.b16 %v417
        %v1163 = vunpack.c.l.b16 %v418
        %v1164 = vunpack.c.h.b16 %v418
        %v1165 = vunpack.c.l.b16 %v419
        %v1166 = vunpack.c.h.b16 %v419
        %v1167 = vunpack.c.l.b16 %v420
        %v1168 = vunpack.c.h.b16 %v420
        %v1169 = vunpack.c.l.b16 %v421
        %v1170 = vunpack.c.h.b16 %v421
        %v1171 = vunpack.c.l.b16 %v422
        %v1172 = vunpack.c.h.b16 %v422
        %v1173 = vunpack.c.l.b16 %v423
        %v1174 = vunpack.c.h.b16 %v423
        %v1175 = vunpack.c.l.b16 %v424
        %v1176 = vunpack.c.h.b16 %v424
        %v1177 = vunpack.c.l.b16 %v425
        %v1178 = vunpack.c.h.b16 %v425
        %v1179 = vunpack.c.l.b16 %v426
        %v1180 = vunpack.c.h.b16 %v426
        %v1181 = vunpack.c.l.b16 %v427
        %v1182 = vunpack.c.h.b16 %v427
        %v1183 = vunpack.c.l.b16 %v428
        %v1184 = vunpack.c.h.b16 %v428
        %v1185 = vunpack.c.l.b16 %v429
        %v1186 = vunpack.c.h.b16 %v429
        %v1187 = vunpack.c.l.b16 %v430
        %v1188 = vunpack.c.h.b16 %v430
        %v1189 = vunpack.c.l.b16 %v431
        %v1190 = vunpack.c.h.b16 %v431
        %v1191 = vunpack.c.l.b16 %v432
        %v1192 = vunpack.c.h.b16 %v432
        %v1193 = vunpack.c.l.b16 %v433
        %v1194 = vunpack.c.h.b16 %v433
        %v1195 = vunpack.c.l.b16 %v434
        %v1196 = vunpack.c.h.b16 %v434
        %v1197 = vunpack.c.l.b16 %v435
        %v1198 = vunpack.c.h.b16 %v435
        %v1199 = vunpack.c.l.b16 %v436
        %v1200 = vunpack.c.h.b16 %v436
        %v1201 = vunpack.c.l.b16 %v437
        %v1202 = vunpack.c.h.b16 %v437
        %v1203 = vunpack.c.l.b16 %v438
        %v1204 = vunpack.c.h.b16 %v438
        %v1205 = vunpack.c.l.b16 %v439
        %v1206 = vunpack.c.h.b16 %v439
        %v1207 = vunpack.c.l.b16 %v440
        %v1208 = vunpack.c.h.b16 %v440
        %v1209 = vunpack.c.l.b16 %v441
        %v1210 = vunpack.c.h.b16 %v441
        %v1211 = vunpack.c.l.b16 %v442
        %v1212 = vunpack.c.h.b16 %v442
        %v1213 = vunpack.c.l.b16 %v443
        %v1214 = vunpack.c.h.b16 %v443
        %v1215 = vunpack.c.l.b16 %v444
        %v1216 = vunpack.c.h.b16 %v444
        %v1217 = vunpack.c.l.b16 %v445
        %v1218 = vunpack.c.h.b16 %v445
        %v1219 = vunpack.c.l.b16 %v446
        %v1220 = vunpack.c.h.b16 %v446
        %v1221 = vunpack.c.l.b16 %v447
        %v1222 = vunpack.c.h.b16 %v447
        %v1223 = vunpack.c.l.b16 %v448
        %v1224 = vunpack.c.h.b16 %v448
        %v1225 = vunpack.c.l.b16 %v449
        %v1226 = vunpack.c.h.b16 %v449
        %v1227 = vunpack.c.l.b16 %v450
        %v1228 = vunpack.c.h.b16 %v450
        %v1229 = vunpack.c.l.b16 %v451
        %v1230 = vunpack.c.h.b16 %v451
        %v1231 = vunpack.c.l.b16 %v452
        %v1232 = vunpack.c.h.b16 %v452
        %v1233 = vunpack.c.l.b16 %v453
        %v1234 = vunpack.c.h.b16 %v453
        %v1235 = vunpack.c.l.b16 %v454
        %v1236 = vunpack.c.h.b16 %v454
        %v1237 = vunpack.c.l.b16 %v455
        %v1238 = vunpack.c.h.b16 %v455
        %v1239 = vunpack.c.l.b16 %v456
        %v1240 = vunpack.c.h.b16 %v456
        %v1241 = vunpack.c.l.b16 %v457
        %v1242 = vunpack.c.h.b16 %v457
        %v1243 = vunpack.c.l.b16 %v458
        %v1244 = vunpack.c.h.b16 %v458
        %v1245 = vunpack.c.l.b16 %v459
        %v1246 = vunpack.c.h.b16 %v459
        %v1247 = vunpack.c.l.b16 %v460
        %v1248 = vunpack.c.h.b16 %v460
        %v1249 = vunpack.c.l.b16 %v461
        %v1250 = vunpack.c.h.b16 %v461
        %v1251 = vunpack.c.l.b16 %v462
        %v1252 = vunpack.c.h.b16 %v462
        %v1253 = vunpack.c.l.b16 %v463
        %v1254 = vunpack.c.h.b16 %v463
        %v1255 = vunpack.c.l.b16 %v464
        %v1256 = vunpack.c.h.b16 %v464
        %v1257 = vunpack.c.l.b16 %v465
        %v1258 = vunpack.c.h.b16 %v465
        %v1259 = vunpack.c.l.b16 %v466
        %v1260 = vunpack.c.h.b16 %v466
        %v1261 = vunpack.c.l.b16 %v467
        %v1262 = vunpack.c.h.b16 %v467
        %v1263 = vunpack.c.l.b16 %v468
        %v1264 = vunpack.c.h.b16 %v468
        %v1265 = vunpack.c.l.b16 %v469
        %v1266 = vunpack.c.h.b16 %v469
        %v1267 = vunpack.c.l.b16 %v470
        %v1268 = vunpack.c.h.b16 %v470
        %v1269 = vunpack.c.l.b16 %v471
        %v1270 = vunpack.c.h.b16 %v471
        %v1271 = vunpack.c.l.b16 %v472
        %v1272 = vunpack.c.h.b16 %v472
        %v1273 = vunpack.c.l.b16 %v473
        %v1274 = vunpack.c.h.b16 %v473
        %v1275 = vunpack.c.l.b16 %v474
        %v1276 = vunpack.c.h.b16 %v474
        %v1277 = vunpack.c.l.b16 %v475
        %v1278 = vunpack.c.h.b16 %v475
        %v1279 = vunpack.c.l.b16 %v476
        %v1280 = vunpack.c.h.b16 %v476
        %v1281 = vunpack.c.l.b16 %v477
        %v1282 = vunpack.c.h.b16 %v477
        %v1283 = vunpack.c.l.b16 %v478
        %v1284 = vunpack.c.h.b16 %v478
        %v1285 = vunpack.c.l.b16 %v479
        %v1286 = vunpack.c.h.b16 %v479
        %v1287 = vunpack.c.l.b16 %v480
        %v1288 = vunpack.c.h.b16 %v480
        %v1289 = vunpack.c.l.b16 %v481
        %v1290 = vunpack.c.h.b16 %v481
        %v1291 = vunpack.c.l.b16 %v482
        %v1292 = vunpack.c.h.b16 %v482
        %v1293 = vunpack.c.l.b16 %v483
        %v1294 = vunpack.c.h.b16 %v483
        %v1295 = vunpack.c.l.b16 %v484
        %v1296 = vunpack.c.h.b16 %v484
        %v1297 = vunpack.c.l.b16 %v485
        %v1298 = vunpack.c.h.b16 %v485
        %v1299 = vunpack.c.l.b16 %v486
        %v1300 = vunpack.c.h.b16 %v486
        %v1301 = vunpack.c.l.b16 %v487
        %v1302 = vunpack.c.h.b16 %v487
        %v1303 = vunpack.c.l.b16 %v488
        %v1304 = vunpack.c.h.b16 %v488
        %v1305 = vunpack.c.l.b16 %v489
        %v1306 = vunpack.c.h.b16 %v489
        %v1307 = vunpack.c.l.b16 %v490
        %v1308 = vunpack.c.h.b16 %v490
        %v1309 = vunpack.c.l.b16 %v491
        %v1310 = vunpack.c.h.b16 %v491
        %v1311 = vunpack.c.l.b16 %v492
        %v1312 = vunpack.c.h.b16 %v492
        %v1313 = vunpack.c.l.b16 %v493
        %v1314 = vunpack.c.h.b16 %v493
        %v1315 = vunpack.c.l.b16 %v494
        %v1316 = vunpack.c.h.b16 %v494
        %v1317 = vunpack.c.l.b16 %v495
        %v1318 = vunpack.c.h.b16 %v495
        %v1319 = vunpack.c.l.b16 %v496
        %v1320 = vunpack.c.h.b16 %v496
        %v1321 = vunpack.c.l.b16 %v497
        %v1322 = vunpack.c.h.b16 %v497
        %v1323 = vunpack.c.l.b16 %v498
        %v1324 = vunpack.c.h.b16 %v498
        %v1325 = vunpack.c.l.b16 %v499
        %v1326 = vunpack.c.h.b16 %v499
        %v1327 = vunpack.c.l.b16 %v500
        %v1328 = vunpack.c.h.b16 %v500
        %v1329 = vunpack.c.l.b16 %v501
        %v1330 = vunpack.c.h.b16 %v501
        %v1331 = vunpack.c.l.b16 %v502
        %v1332 = vunpack.c.h.b16 %v502
        %v1333 = vunpack.c.l.b16 %v503
        %v1334 = vunpack.c.h.b16 %v503
        %v1335 = vunpack.c.l.b16 %v504
        %v1336 = vunpack.c.h.b16 %v504
        %v1337 = vunpack.c.l.b16 %v505
        %v1338 = vunpack.c.h.b16 %v505
        %v1339 = vunpack.c.l.b16 %v506
        %v1340 = vunpack.c.h.b16 %v506
        %v1341 = vunpack.c.l.b16 %v507
        %v1342 = vunpack.c.h.b16 %v507
        %v1343 = vunpack.c.l.b16 %v508
        %v1344 = vunpack.c.h.b16 %v508
        %v1345 = vunpack.c.l.b16 %v509
        %v1346 = vunpack.c.h.b16 %v509
        %v1347 = vunpack.c.l.b16 %v510
        %v1348 = vunpack.c.h.b16 %v510
        %v1349 = vunpack.c.l.b16 %v511
        %v1350 = vunpack.c.h.b16 %v511
        %v1351 = vunpack.c.l.b16 %v512
        %v1352 = vunpack.c.h.b16 %v512
        %v1353 = vunpack.c.l.b16 %v513
        %v1354 = vunpack.c.h.b16 %v513
        %v1355 = vunpack.c.l.b16 %v514
        %v1356 = vunpack.c.h.b16 %v514
        %v1357 = vunpack.c.l.b16 %v515
        %v1358 = vunpack.c.h.b16 %v515
        %v1359 = vunpack.c.l.b16 %v516
        %v1360 = vunpack.c.h.b16 %v516
        %v1361 = vunpack.c.l.b16 %v517
        %v1362 = vunpack.c.h.b16 %v517
        %v1363 = vunpack.c.l.b16 %v518
        %v1364 = vunpack.c.h.b16 %v518
        %v1365 = vunpack.c.l.b16 %v519
        %v1366 = vunpack.c.h.b16 %v519
        %v1367 = vunpack.c.l.b16 %v520
        %v1368 = vunpack.c.h.b16 %v520
        %v1369 = vunpack.c.l.b16 %v521
        %v1370 = vunpack.c.h.b16 %v521
        %v1371 = vunpack.c.l.b16 %v522
        %v1372 = vunpack.c.h.b16 %v522
        %v1373 = vunpack.c.l.b16 %v523
        %v1374 = vunpack.c.h.b16 %v523
        %v1375 = vunpack.c.l.b16 %v524
        %v1376 = vunpack.c.h.b16 %v524
        %v1377 = vunpack.c.l.b16 %v525
        %v1378 = vunpack.c.h.b16 %v525
        %v1379 = vunpack.c.l.b16 %v526
        %v1380 = vunpack.c.h.b16 %v526
        %v1381 = vunpack.c.l.b16 %v527
        %v1382 = vunpack.c.h.b16 %v527
        %v1383 = vunpack.c.l.b16 %v528
        %v1384 = vunpack.c.h.b16 %v528
        %v1385 = vunpack.c.l.b16 %v529
        %v1386 = vunpack.c.h.b16 %v529
        %v1387 = vunpack.c.l.b16 %v530
        %v1388 = vunpack.c.h.b16 %v530
        %v1389 = vunpack.c.l.b16 %v531
        %v1390 = vunpack.c.h.b16 %v531
        %v1391 = vunpack.c.l.b16 %v532
        %v1392 = vunpack.c.h.b16 %v532
        %v1393 = vunpack.c.l.b16 %v533
        %v1394 = vunpack.c.h.b16 %v533
        %v1395 = vunpack.c.l.b16 %v534
        %v1396 = vunpack.c.h.b16 %v534
        %v1397 = vunpack.c.l.b16 %v535
        %v1398 = vunpack.c.h.b16 %v535
        %v1399 = vunpack.c.l.b16 %v536
        %v1400 = vunpack.c.h.b16 %v536
        %v1401 = vunpack.c.l.b16 %v537
        %v1402 = vunpack.c.h.b16 %v537
        %v1403 = vunpack.c.l.b16 %v538
        %v1404 = vunpack.c.h.b16 %v538
        %v1405 = vunpack.c.l.b16 %v539
        %v1406 = vunpack.c.h.b16 %v539
        %v1407 = vunpack.c.l.b16 %v540
        %v1408 = vunpack.c.h.b16 %v540
        %v1409 = vunpack.c.l.b16 %v541
        %v1410 = vunpack.c.h.b16 %v541
        %v1411 = vunpack.c.l.b16 %v542
        %v1412 = vunpack.c.h.b16 %v542
        %v1413 = vunpack.c.l.b16 %v543
        %v1414 = vunpack.c.h.b16 %v543
        %v1415 = vunpack.c.l.b16 %v544
        %v1416 = vunpack.c.h.b16 %v544
        %v1417 = vunpack.c.l.b16 %v545
        %v1418 = vunpack.c.h.b16 %v545
        %v1419 = vunpack.c.l.b16 %v546
        %v1420 = vunpack.c.h.b16 %v546
        %v1421 = vunpack.c.l.b16 %v547
        %v1422 = vunpack.c.h.b16 %v547
        %v1423 = vunpack.c.l.b16 %v548
        %v1424 = vunpack.c.h.b16 %v548
        %v1425 = vunpack.c.l.b16 %v549
        %v1426 = vunpack.c.h.b16 %v549
        %v1427 = vunpack.c.l.b16 %v550
        %v1428 = vunpack.c.h.b16 %v550
        %v1429 = vunpack.c.l.b16 %v551
        %v1430 = vunpack.c.h.b16 %v551
        %v1431 = vunpack.c.l.b16 %v552
        %v1432 = vunpack.c.h.b16 %v552
        %v1433 = vunpack.c.l.b16 %v553
        %v1434 = vunpack.c.h.b16 %v553
        %v1435 = vunpack.c.l.b16 %v554
        %v1436 = vunpack.c.h.b16 %v554
        %v1437 = vunpack.c.l.b16 %v555
        %v1438 = vunpack.c.h.b16 %v555
        %v1439 = vunpack.c.l.b16 %v556
        %v1440 = vunpack.c.h.b16 %v556
        %v1441 = vunpack.c.l.b16 %v557
        %v1442 = vunpack.c.h.b16 %v557
        %v1443 = vunpack.c.l.b16 %v558
        %v1444 = vunpack.c.h.b16 %v558
        %v1445 = vunpack.c.l.b16 %v559
        %v1446 = vunpack.c.h.b16 %v559
        %v1447 = vunpack.c.l.b16 %v560
        %v1448 = vunpack.c.h.b16 %v560
        %v1449 = vunpack.c.l.b16 %v561
        %v1450 = vunpack.c.h.b16 %v561
        %v1451 = vunpack.c.l.b16 %v562
        %v1452 = vunpack.c.h.b16 %v562
        %v1453 = vunpack.c.l.b16 %v563
        %v1454 = vunpack.c.h.b16 %v563
        %v1455 = vunpack.c.l.b16 %v564
        %v1456 = vunpack.c.h.b16 %v564
        %v1457 = vunpack.c.l.b16 %v565
        %v1458 = vunpack.c.h.b16 %v565
        %v1459 = vunpack.c.l.b16 %v566
        %v1460 = vunpack.c.h.b16 %v566
        %v1461 = vunpack.c.l.b16 %v567
        %v1462 = vunpack.c.h.b16 %v567
        %v1463 = vunpack.c.l.b16 %v568
        %v1464 = vunpack.c.h.b16 %v568
        %v1465 = vunpack.c.l.b16 %v569
        %v1466 = vunpack.c.h.b16 %v569
        %v1467 = vunpack.c.l.b16 %v570
        %v1468 = vunpack.c.h.b16 %v570
        %v1469 = vunpack.c.l.b16 %v571
        %v1470 = vunpack.c.h.b16 %v571
        %v1471 = vunpack.c.l.b16 %v572
        %v1472 = vunpack.c.h.b16 %v572
        %v1473 = vunpack.c.l.b16 %v573
        %v1474 = vunpack.c.h.b16 %v573
        %v1475 = vunpack.c.l.b16 %v574
        %v1476 = vunpack.c.h.b16 %v574
        %v1477 = vunpack.c.l.b16 %v575
        %v1478 = vunpack.c.h.b16 %v575
        %v1479 = vunpack.c.l.b16 %v576
        %v1480 = vunpack.c.h.b16 %v576
        %v1481 = vunpack.c.l.b16 %v577
        %v1482 = vunpack.c.h.b16 %v577
        %v1483 = vunpack.c.l.b16 %v578
        %v1484 = vunpack.c.h.b16 %v578
        %v1485 = vunpack.c.l.b16 %v579
        %v1486 = vunpack.c.h.b16 %v579
        %v1487 = vunpack.c.l.b16 %v580
        %v1488 = vunpack.c.h.b16 %v580
        %v1489 = vpack.c.b16 %v919, %v913
        %v1490 = vpack.c.b16 %v920, %v914
        %v1491 = vpack.c.b16 %v921, %v915
        %v1492 = vpack.c.b16 %v922, %v916
        %v1493 = vpack.c.b16 %v923, %v917
        %v1494 = vpack.c.b16 %v924, %v918
        %v1495 = vpack.c.b16 %v931, %v925
        %v1496 = vpack.c.b16 %v932, %v926
        %v1497 = vpack.c.b16 %v933, %v927
        %v1498 = vpack.c.b16 %v934, %v928
        %v1499 = vpack.c.b16 %v935, %v929
        %v1500 = vpack.c.b16 %v936, %v930
        %v1501 = vpack.c.b16 %v943, %v937
        %v1502 = vpack.c.b16 %v944, %v938
        %v1503 = vpack.c.b16 %v945, %v939
        %v1504 = vpack.c.b16 %v946, %v940
        %v1505 = vpack.c.b16 %v947, %v941
        %v1506 = vpack.c.b16 %v948, %v942
        %v1507 = vpack.c.b16 %v955, %v949
        %v1508 = vpack.c.b16 %v956, %v950
        %v1509 = vpack.c.b16 %v957, %v951
        %v1510 = vpack.c.b16 %v958, %v952
        %v1511 = vpack.c.b16 %v959, %v953
        %v1512 = vpack.c.b16 %v960, %v954
        %v1513 = vpack.c.b16 %v967, %v961
        %v1514 = vpack.c.b16 %v968, %v962
        %v1515 = vpack.c.b16 %v969, %v963
        %v1516 = vpack.c.b16 %v970, %v964
        %v1517 = vpack.c.b16 %v971, %v965
        %v1518 = vpack.c.b16 %v972, %v966
        %v1519 = vpack.c.b16 %v979, %v973
        %v1520 = vpack.c.b16 %v980, %v974
        %v1521 = vpack.c.b16 %v981, %v975
        %v1522 = vpack.c.b16 %v982, %v976
        %v1523 = vpack.c.b16 %v983, %v977
        %v1524 = vpack.c.b16 %v984, %v978
        %v1525 = vpack.c.b16 %v991, %v985
        %v1526 = vpack.c.b16 %v992, %v986
        %v1527 = vpack.c.b16 %v993, %v987
        %v1528 = vpack.c.b16 %v994, %v988
        %v1529 = vpack.c.b16 %v995, %v989
        %v1530 = vpack.c.b16 %v996, %v990
        %v1531 = vpack.c.b16 %v1003, %v997
        %v1532 = vpack.c.b16 %v1004, %v998
        %v1533 = vpack.c.b16 %v1005, %v999
        %v1534 = vpack.c.b16 %v1006, %v1000
        %v1535 = vpack.c.b16 %v1007, %v1001
        %v1536 = vpack.c.b16 %v1008, %v1002
        %v1537 = vpack.c.b16 %v1015, %v1009
        %v1538 = vpack.c.b16 %v1016, %v1010
        %v1539 = vpack.c.b16 %v1017, %v1011
        %v1540 = vpack.c.b16 %v1018, %v1012
        %v1541 = vpack.c.b16 %v1019, %v1013
        %v1542 = vpack.c.b16 %v1020, %v1014
        %v1543 = vpack.c.b16 %v1027, %v1021
        %v1544 = vpack.c.b16 %v1028, %v1022
        %v1545 = vpack.c.b16 %v1029, %v1023
        %v1546 = vpack.c.b16 %v1030, %v1024
        %v1547 = vpack.c.b16 %v1031, %v1025
        %v1548 = vpack.c.b16 %v1032, %v1026
        %v1549 = vpack.c.b16 %v1039, %v1033
        %v1550 = vpack.c.b16 %v1040, %v1034
        %v1551 = vpack.c.b16 %v1041, %v1035
        %v1552 = vpack.c.b16 %v1042, %v1036
        %v1553 = vpack.c.b16 %v1043, %v1037
        %v1554 = vpack.c.b16 %v1044, %v1038
        %v1555 = vpack.c.b16 %v1051, %v1045
        %v1556 = vpack.c.b16 %v1052, %v1046
        %v1557 = vpack.c.b16 %v1053, %v1047
        %v1558 = vpack.c.b16 %v1054, %v1048
        %v1559 = vpack.c.b16 %v1055, %v1049
        %v1560 = vpack.c.b16 %v1056, %v1050
        %v1561 = vpack.c.b16 %v1063, %v1057
        %v1562 = vpack.c.b16 %v1064, %v1058
        %v1563 = vpack.c.b16 %v1065, %v1059
        %v1564 = vpack.c.b16 %v1066, %v1060
        %v1565 = vpack.c.b16 %v1067, %v1061
        %v1566 = vpack.c.b16 %v1068, %v1062
        %v1567 = vpack.c.b16 %v1075, %v1069
        %v1568 = vpack.c.b16 %v1076, %v1070
        %v1569 = vpack.c.b16 %v1077, %v1071
        %v1570 = vpack.c.b16 %v1078, %v1072
        %v1571 = vpack.c.b16 %v1079, %v1073
        %v1572 = vpack.c.b16 %v1080, %v1074
        %v1573 = vpack.c.b16 %v1087, %v1081
        %v1574 = vpack.c.b16 %v1088, %v1082
        %v1575 = vpack.c.b16 %v1089, %v1083
        %v1576 = vpack.c.b16 %v1090, %v1084
        %v1577 = vpack.c.b16 %v1091, %v1085
        %v1578 = vpack.c.b16 %v1092, %v1086
        %v1579 = vpack.c.b16 %v1099, %v1093
        %v1580 = vpack.c.b16 %v1100, %v1094
        %v1581 = vpack.c.b16 %v1101, %v1095
        %v1582 = vpack.c.b16 %v1102, %v1096
        %v1583 = vpack.c.b16 %v1103, %v1097
        %v1584 = vpack.c.b16 %v1104, %v1098
        %v1585 = vpack.c.b16 %v1111, %v1105
        %v1586 = vpack.c.b16 %v1112, %v1106
        %v1587 = vpack.c.b16 %v1113, %v1107
        %v1588 = vpack.c.b16 %v1114, %v1108
        %v1589 = vpack.c.b16 %v1115, %v1109
        %v1590 = vpack.c.b16 %v1116, %v1110
        %v1591 = vpack.c.b16 %v1123, %v1117
        %v1592 = vpack.c.b16 %v1124, %v1118
        %v1593 = vpack.c.b16 %v1125, %v1119
        %v1594 = vpack.c.b16 %v1126, %v1120
        %v1595 = vpack.c.b16 %v1127, %v1121
        %v1596 = vpack.c.b16 %v1128, %v1122
        %v1597 = vpack.c.b16 %v1135, %v1129
        %v1598 = vpack.c.b16 %v1136, %v1130
        %v1599 = vpack.c.b16 %v1137, %v1131
        %v1600 = vpack.c.b16 %v1138, %v1132
        %v1601 = vpack.c.b16 %v1139, %v1133
        %v1602 = vpack.c.b16 %v1140, %v1134
        %v1603 = vpack.c.b16 %v1147, %v1141
        %v1604 = vpack.c.b16 %v1148, %v1142
        %v1605 = vpack.c.b16 %v1149, %v1143
        %v1606 = vpack.c.b16 %v1150, %v1144
        %v1607 = vpack.c.b16 %v1151, %v1145
        %v1608 = vpack.c.b16 %v1152, %v1146
        %v1609 = vpack.c.b16 %v1159, %v1153
        %v1610 = vpack.c.b16 %v1160, %v1154
        %v1611 = vpack.c.b16 %v1161, %v1155
        %v1612 = vpack.c.b16 %v1162, %v1156
        %v1613 = vpack.c.b16 %v1163, %v1157
        %v1614 = vpack.c.b16 %v1164, %v1158
        %v1615 = vpack.c.b16 %v1171, %v1165
        %v1616 = vpack.c.b16 %v1172, %v1166
        %v1617 = vpack.c.b16 %v1173, %v1167
        %v1618 = vpack.c.b16 %v1174, %v1168
        %v1619 = vpack.c.b16 %v1175, %v1169
        %v1620 = vpack.c.b16 %v1176, %v1170
        %v1621 = vpack.c.b16 %v1183, %v1177
        %v1622 = vpack.c.b16 %v1184, %v1178
        %v1623 = vpack.c.b16 %v1185, %v1179
        %v1624 = vpack.c.b16 %v1186, %v1180
        %v1625 = vpack.c.b16 %v1187, %v1181
        %v1626 = vpack.c.b16 %v1188, %v1182
        %v1627 = vpack.c.b16 %v1195, %v1189
        %v1628 = vpack.c.b16 %v1196, %v1190
        %v1629 = vpack.c.b16 %v1197, %v1191
        %v1630 = vpack.c.b16 %v1198, %v1192
        %v1631 = vpack.c.b16 %v1199, %v1193
        %v1632 = vpack.c.b16 %v1200, %v1194
        %v1633 = vpack.c.b16 %v1207, %v1201
        %v1634 = vpack.c.b16 %v1208, %v1202
        %v1635 = vpack.c.b16 %v1209, %v1203
        %v1636 = vpack.c.b16 %v1210, %v1204
        %v1637 = vpack.c.b16 %v1211, %v1205
        %v1638 = vpack.c.b16 %v1212, %v1206
        %v1639 = vpack.c.b16 %v1219, %v1213
        %v1640 = vpack.c.b16 %v1220, %v1214
        %v1641 = vpack.c.b16 %v1221, %v1215
        %v1642 = vpack.c.b16 %v1222, %v1216
        %v1643 = vpack.c.b16 %v1223, %v1217
        %v1644 = vpack.c.b16 %v1224, %v1218
        %v1645 = vpack.c.b16 %v1231, %v1225
        %v1646 = vpack.c.b16 %v1232, %v1226
        %v1647 = vpack.c.b16 %v1233, %v1227
        %v1648 = vpack.c.b16 %v1234, %v1228
        %v1649 = vpack.c.b16 %v1235, %v1229
        %v1650 = vpack.c.b16 %v1236, %v1230
        %v1651 = vpack.c.b16 %v1243, %v1237
        %v1652 = vpack.c.b16 %v1244, %v1238
        %v1653 = vpack.c.b16 %v1245, %v1239
        %v1654 = vpack.c.b16 %v1246, %v1240
        %v1655 = vpack.c.b16 %v1247, %v1241
        %v1656 = vpack.c.b16 %v1248, %v1242
        %v1657 = vpack.c.b16 %v1255, %v1249
        %v1658 = vpack.c.b16 %v1256, %v1250
        %v1659 = vpack.c.b16 %v1257, %v1251
        %v1660 = vpack.c.b16 %v1258, %v1252
        %v1661 = vpack.c.b16 %v1259, %v1253
        %v1662 = vpack.c.b16 %v1260, %v1254
        %v1663 = vpack.c.b16 %v1267, %v1261
        %v1664 = vpack.c.b16 %v1268, %v1262
        %v1665 = vpack.c.b16 %v1269, %v1263
        %v1666 = vpack.c.b16 %v1270, %v1264
        %v1667 = vpack.c.b16 %v1271, %v1265
        %v1668 = vpack.c.b16 %v1272, %v1266
        %v1669 = vpack.c.b16 %v1279, %v1273
        %v1670 = vpack.c.b16 %v1280, %v1274
        %v1671 = vpack.c.b16 %v1281, %v1275
        %v1672 = vpack.c.b16 %v1282, %v1276
        %v1673 = vpack.c.b16 %v1283, %v1277
        %v1674 = vpack.c.b16 %v1284, %v1278
        %v1675 = vpack.c.b16 %v1291, %v1285
        %v1676 = vpack.c.b16 %v1292, %v1286
        %v1677 = vpack.c.b16 %v1293, %v1287
        %v1678 = vpack.c.b16 %v1294, %v1288
        %v1679 = vpack.c.b16 %v1295, %v1289
        %v1680 = vpack.c.b16 %v1296, %v1290
        %v1681 = vpack.c.b16 %v1303, %v1297
        %v1682 = vpack.c.b16 %v1304, %v1298
        %v1683 = vpack.c.b16 %v1305, %v1299
        %v1684 = vpack.c.b16 %v1306, %v1300
        %v1685 = vpack.c.b16 %v1307, %v1301
        %v1686 = vpack.c.b16 %v1308, %v1302
        %v1687 = vpack.c.b16 %v1315, %v1309
        %v1688 = vpack.c.b16 %v1316, %v1310
        %v1689 = vpack.c.b16 %v1317, %v1311
        %v1690 = vpack.c.b16 %v1318, %v1312
        %v1691 = vpack.c.b16 %v1319, %v1313
        %v1692 = vpack.c.b16 %v1320, %v1314
        %v1693 = vpack.c.b16 %v1327, %v1321
        %v1694 = vpack.c.b16 %v1328, %v1322
        %v1695 = vpack.c.b16 %v1329, %v1323
        %v1696 = vpack.c.b16 %v1330, %v1324
        %v1697 = vpack.c.b16 %v1331, %v1325
        %v1698 = vpack.c.b16 %v1332, %v1326
        %v1699 = vpack.c.b16 %v1339, %v1333
        %v1700 = vpack.c.b16 %v1340, %v1334
        %v1701 = vpack.c.b16 %v1341, %v1335
        %v1702 = vpack.c.b16 %v1342, %v1336
        %v1703 = vpack.c.b16 %v1343, %v1337
        %v1704 = vpack.c.b16 %v1344, %v1338
        %v1705 = vpack.c.b16 %v1351, %v1345
        %v1706 = vpack.c.b16 %v1352, %v1346
        %v1707 = vpack.c.b16 %v1353, %v1347
        %v1708 = vpack.c.b16 %v1354, %v1348
        %v1709 = vpack.c.b16 %v1355, %v1349
        %v1710 = vpack.c.b16 %v1356, %v1350
        %v1711 = vpack.c.b16 %v1363, %v1357
        %v1712 = vpack.c.b16 %v1364, %v1358
        %v1713 = vpack.c.b16 %v1365, %v1359
        %v1714 = vpack.c.b16 %v1366, %v1360
        %v1715 = vpack.c.b16 %v1367, %v1361
        %v1716 = vpack.c.b16 %v1368, %v1362
        %v1717 = vpack.c.b16 %v1375, %v1369
        %v1718 = vpack.c.b16 %v1376, %v1370
        %v1719 = vpack.c.b16 %v1377, %v1371
        %v1720 = vpack.c.b16 %v1378, %v1372
        %v1721 = vpack.c.b16 %v1379, %v1373
        %v1722 = vpack.c.b16 %v1380, %v1374
        %v1723 = vpack.c.b16 %v1387, %v1381
        %v1724 = vpack.c.b16 %v1388, %v1382
        %v1725 = vpack.c.b16 %v1389, %v1383
        %v1726 = vpack.c.b16 %v1390, %v1384
        %v1727 = vpack.c.b16 %v1391, %v1385
        %v1728 = vpack.c.b16 %v1392, %v1386
        %v1729 = vpack.c.b16 %v1399, %v1393
        %v1730 = vpack.c.b16 %v1400, %v1394
        %v1731 = vpack.c.b16 %v1401, %v1395
        %v1732 = vpack.c.b16 %v1402, %v1396
        %v1733 = vpack.c.b16 %v1403, %v1397
        %v1734 = vpack.c.b16 %v1404, %v1398
        %v1735 = vpack.c.b16 %v1411, %v1405
        %v1736 = vpack.c.b16 %v1412, %v1406
        %v1737 = vpack.c.b16 %v1413, %v1407
        %v1738 = vpack.c.b16 %v1414, %v1408
        %v1739 = vpack.c.b16 %v1415, %v1409
        %v1740 = vpack.c.b16 %v1416, %v1410
        %v1741 = vpack.c.b16 %v1423, %v1417
        %v1742 = vpack.c.b16 %v1424, %v1418
        %v1743 = vpack.c.b16 %v1425, %v1419
        %v1744 = vpack.c.b16 %v1426, %v1420
        %v1745 = vpack.c.b16 %v1427, %v1421
        %v1746 = vpack.c.b16 %v1428, %v1422
        %v1747 = vpack.c.b16 %v1435, %v1429
        %v1748 = vpack.c.b16 %v1436, %v1430
        %v1749 = vpack.c.b16 %v1437, %v1431
        %v1750 = vpack.c.b16 %v1438, %v1432
        %v1751 = vpack.c.b16 %v1439, %v1433
        %v1752 = vpack.c.b16 %v1440, %v1434
        %v1753 = vpack.c.b16 %v1447, %v1441
        %v1754 = vpack.c.b16 %v1448, %v1442
        %v1755 = vpack.c.b16 %v1449, %v1443
        %v1756 = vpack.c.b16 %v1450, %v1444
        %v1757 = vpack.c.b16 %v1451, %v1445
        %v1758 = vpack.c.b16 %v1452, %v1446
        %v1759 = vpack.c.b16 %v1459, %v1453
        %v1760 = vpack.c.b16 %v1460, %v1454
        %v1761 = vpack.c.b16 %v1461, %v1455
        %v1762 = vpack.c.b16 %v1462, %v1456
        %v1763 = vpack.c.b16 %v1463, %v1457
        %v1764 = vpack.c.b16 %v1464, %v1458
        %v1765 = vpack.c.b16 %v1471, %v1465
        %v1766 = vpack.c.b16 %v1472, %v1466
        %v1767 = vpack.c.b16 %v1473, %v1467
        %v1768 = vpack.c.b16 %v1474, %v1468
        %v1769 = vpack.c.b16 %v1475, %v1469
        %v1770 = vpack.c.b16 %v1476, %v1470
        %v1771 = vpack.c.b16 %v1483, %v1477
        %v1772 = vpack.c.b16 %v1484, %v1478
        %v1773 = vpack.c.b16 %v1485, %v1479
        %v1774 = vpack.c.b16 %v1486, %v1480
        %v1775 = vpack.c.b16 %v1487, %v1481
        %v1776 = vpack.c.b16 %v1488, %v1482
        %2065 = vmatprep.subr.bf16.mxu0 %v1490
        %2066 = vmatpush1.bf16.msra.mxu0 %v1489
        %2067 = vmatprep.subr.bf16.mxu0 %v1496
        %2068 = vmatpush1.bf16.msra.mxu0 %v1495
        %2069 = vmatprep.subr.bf16.mxu0 %v1502
        %2070 = vmatpush1.bf16.msra.mxu0 %v1501
        %2071 = vmatprep.subr.bf16.mxu0 %v1508
        %2072 = vmatpush1.bf16.msra.mxu0 %v1507
        %2073 = vmatprep.subr.bf16.mxu0 %v1514
        %2074 = vmatpush1.bf16.msra.mxu0 %v1513
        %2075 = vmatprep.subr.bf16.mxu0 %v1520
        %2076 = vmatpush1.bf16.msra.mxu0 %v1519
        %2077 = vmatprep.subr.bf16.mxu0 %v1526
        %2078 = vmatpush1.bf16.msra.mxu0 %v1525
        %2079 = vmatprep.subr.bf16.mxu0 %v1532
        %2080 = vmatpush1.bf16.msra.mxu0 %v1531
        %2081 = vmatprep.subr.bf16.mxu0 %v1538
        %2082 = vmatpush1.bf16.msra.mxu0 %v1537
        %2083 = vmatprep.subr.bf16.mxu0 %v1544
        %2084 = vmatpush1.bf16.msra.mxu0 %v1543
        %2085 = vmatprep.subr.bf16.mxu0 %v1550
        %2086 = vmatpush1.bf16.msra.mxu0 %v1549
        %2087 = vmatprep.subr.bf16.mxu0 %v1556
        %2088 = vmatpush1.bf16.msra.mxu0 %v1555
        %2089 = vmatprep.subr.bf16.mxu0 %v1562
        %2090 = vmatpush1.bf16.msra.mxu0 %v1561
        %2091 = vmatprep.subr.bf16.mxu0 %v1568
        %2092 = vmatpush1.bf16.msra.mxu0 %v1567
        %2093 = vmatprep.subr.bf16.mxu0 %v1574
        %2094 = vmatpush1.bf16.msra.mxu0 %v1573
        %2095 = vmatprep.subr.bf16.mxu0 %v1580
        %2096 = vmatpush1.bf16.msra.mxu0 %v1579
        %2097 = vmatprep.mubr.bf16.mxu0 %v588
        %2098 = vmatmul.mubr.bf16.gmra.mrb[0].mxu0 %v587
        %v2099 = vpop.f32.mrb[0].mxu0
        %v2100 = vadd.f32 %v598, %v2099
        %v2101 = vpop.f32.mrb[0].mxu0
        %v2102 = vadd.f32 %v602, %v2101
        %v2103 = vpop.f32.mrb[0].mxu0
        %v2104 = vpop.f32.mrb[0].mxu0
        %2105 = vdwg.mxu0
        %2106 = vmatprep.subr.bf16.mxu0 %v1586
        %2107 = vmatpush1.bf16.msra.mxu0 %v1585
        %2108 = vmatprep.subr.bf16.mxu0 %v1592
        %2109 = vmatpush1.bf16.msra.mxu0 %v1591
        %2110 = vmatprep.subr.bf16.mxu0 %v1598
        %2111 = vmatpush1.bf16.msra.mxu0 %v1597
        %2112 = vmatprep.subr.bf16.mxu0 %v1604
        %2113 = vmatpush1.bf16.msra.mxu0 %v1603
        %2114 = vmatprep.subr.bf16.mxu0 %v1610
        %2115 = vmatpush1.bf16.msra.mxu0 %v1609
        %2116 = vmatprep.subr.bf16.mxu0 %v1616
        %2117 = vmatpush1.bf16.msra.mxu0 %v1615
        %2118 = vmatprep.subr.bf16.mxu0 %v1622
        %2119 = vmatpush1.bf16.msra.mxu0 %v1621
        %2120 = vmatprep.subr.bf16.mxu0 %v1628
        %2121 = vmatpush1.bf16.msra.mxu0 %v1627
        %2122 = vmatprep.subr.bf16.mxu0 %v1634
        %2123 = vmatpush1.bf16.msra.mxu0 %v1633
        %2124 = vmatprep.subr.bf16.mxu0 %v1640
        %2125 = vmatpush1.bf16.msra.mxu0 %v1639
        %2126 = vmatprep.subr.bf16.mxu0 %v1646
        %2127 = vmatpush1.bf16.msra.mxu0 %v1645
        %2128 = vmatprep.subr.bf16.mxu0 %v1652
        %2129 = vmatpush1.bf16.msra.mxu0 %v1651
        %2130 = vmatprep.subr.bf16.mxu0 %v1658
        %2131 = vmatpush1.bf16.msra.mxu0 %v1657
        %2132 = vmatprep.subr.bf16.mxu0 %v1664
        %2133 = vmatpush1.bf16.msra.mxu0 %v1663
        %2134 = vmatprep.subr.bf16.mxu0 %v1670
        %2135 = vmatpush1.bf16.msra.mxu0 %v1669
        %2136 = vmatprep.subr.bf16.mxu0 %v1676
        %2137 = vmatpush1.bf16.msra.mxu0 %v1675
        %2138 = vmatprep.mubr.bf16.mxu0 %v590
        %2139 = vmatmul.mubr.bf16.gmra.mrb[0].mxu0 %v589
        %v2140 = vpop.f32.mrb[0].mxu0
        %v2141 = vadd.f32 %v2100, %v2140
        %v2142 = vpop.f32.mrb[0].mxu0
        %v2143 = vadd.f32 %v2102, %v2142
        %v2144 = vpop.f32.mrb[0].mxu0
        %v2145 = vpop.f32.mrb[0].mxu0
        %2146 = vdwg.mxu0
        %2147 = vmatprep.subr.bf16.mxu0 %v1682
        %2148 = vmatpush1.bf16.msra.mxu0 %v1681
        %2149 = vmatprep.subr.bf16.mxu0 %v1688
        %2150 = vmatpush1.bf16.msra.mxu0 %v1687
        %2151 = vmatprep.subr.bf16.mxu0 %v1694
        %2152 = vmatpush1.bf16.msra.mxu0 %v1693
        %2153 = vmatprep.subr.bf16.mxu0 %v1700
        %2154 = vmatpush1.bf16.msra.mxu0 %v1699
        %2155 = vmatprep.subr.bf16.mxu0 %v1706
        %2156 = vmatpush1.bf16.msra.mxu0 %v1705
        %2157 = vmatprep.subr.bf16.mxu0 %v1712
        %2158 = vmatpush1.bf16.msra.mxu0 %v1711
        %2159 = vmatprep.subr.bf16.mxu0 %v1718
        %2160 = vmatpush1.bf16.msra.mxu0 %v1717
        %2161 = vmatprep.subr.bf16.mxu0 %v1724
        %2162 = vmatpush1.bf16.msra.mxu0 %v1723
        %2163 = vmatprep.subr.bf16.mxu0 %v1730
        %2164 = vmatpush1.bf16.msra.mxu0 %v1729
        %2165 = vmatprep.subr.bf16.mxu0 %v1736
        %2166 = vmatpush1.bf16.msra.mxu0 %v1735
        %2167 = vmatprep.subr.bf16.mxu0 %v1742
        %2168 = vmatpush1.bf16.msra.mxu0 %v1741
        %2169 = vmatprep.subr.bf16.mxu0 %v1748
        %2170 = vmatpush1.bf16.msra.mxu0 %v1747
        %2171 = vmatprep.subr.bf16.mxu0 %v1754
        %2172 = vmatpush1.bf16.msra.mxu0 %v1753
        %2173 = vmatprep.subr.bf16.mxu0 %v1760
        %2174 = vmatpush1.bf16.msra.mxu0 %v1759
        %2175 = vmatprep.subr.bf16.mxu0 %v1766
        %2176 = vmatpush1.bf16.msra.mxu0 %v1765
        %2177 = vmatprep.subr.bf16.mxu0 %v1772
        %2178 = vmatpush1.bf16.msra.mxu0 %v1771
        %2179 = vmatprep.mubr.bf16.mxu0 %v592
        %2180 = vmatmul.mubr.bf16.gmra.mrb[0].mxu0 %v591
        %v2181 = vpop.f32.mrb[0].mxu0
        %v2182 = vadd.f32 %v2141, %v2181
        %v2183 = vpop.f32.mrb[0].mxu0
        %v2184 = vadd.f32 %v2143, %v2183
        %v2185 = vpop.f32.mrb[0].mxu0
        %v2186 = vpop.f32.mrb[0].mxu0
        %2187 = vdwg.mxu0
        %2188 = vmatprep.subr.bf16.mxu0 %v1492
        %2189 = vmatpush1.bf16.msra.mxu0 %v1491
        %2190 = vmatprep.subr.bf16.mxu0 %v1498
        %2191 = vmatpush1.bf16.msra.mxu0 %v1497
        %2192 = vmatprep.subr.bf16.mxu0 %v1504
        %2193 = vmatpush1.bf16.msra.mxu0 %v1503
        %2194 = vmatprep.subr.bf16.mxu0 %v1510
        %2195 = vmatpush1.bf16.msra.mxu0 %v1509
        %2196 = vmatprep.subr.bf16.mxu0 %v1516
        %2197 = vmatpush1.bf16.msra.mxu0 %v1515
        %2198 = vmatprep.subr.bf16.mxu0 %v1522
        %2199 = vmatpush1.bf16.msra.mxu0 %v1521
        %2200 = vmatprep.subr.bf16.mxu0 %v1528
        %2201 = vmatpush1.bf16.msra.mxu0 %v1527
        %2202 = vmatprep.subr.bf16.mxu0 %v1534
        %2203 = vmatpush1.bf16.msra.mxu0 %v1533
        %2204 = vmatprep.subr.bf16.mxu0 %v1540
        %2205 = vmatpush1.bf16.msra.mxu0 %v1539
        %2206 = vmatprep.subr.bf16.mxu0 %v1546
        %2207 = vmatpush1.bf16.msra.mxu0 %v1545
        %2208 = vmatprep.subr.bf16.mxu0 %v1552
        %2209 = vmatpush1.bf16.msra.mxu0 %v1551
        %2210 = vmatprep.subr.bf16.mxu0 %v1558
        %2211 = vmatpush1.bf16.msra.mxu0 %v1557
        %2212 = vmatprep.subr.bf16.mxu0 %v1564
        %2213 = vmatpush1.bf16.msra.mxu0 %v1563
        %2214 = vmatprep.subr.bf16.mxu0 %v1570
        %2215 = vmatpush1.bf16.msra.mxu0 %v1569
        %2216 = vmatprep.subr.bf16.mxu0 %v1576
        %2217 = vmatpush1.bf16.msra.mxu0 %v1575
        %2218 = vmatprep.subr.bf16.mxu0 %v1582
        %2219 = vmatpush1.bf16.msra.mxu0 %v1581
        %2220 = vmatprep.mubr.bf16.mxu0 %v588
        %2221 = vmatmul.mubr.bf16.gmra.mrb[0].mxu0 %v587
        %v2222 = vpop.f32.mrb[0].mxu0
        %v2223 = vadd.f32 %v606, %v2222
        %v2224 = vpop.f32.mrb[0].mxu0
        %v2225 = vadd.f32 %v610, %v2224
        %v2226 = vpop.f32.mrb[0].mxu0
        %v2227 = vpop.f32.mrb[0].mxu0
        %2228 = vdwg.mxu0
        %2229 = vmatprep.subr.bf16.mxu0 %v1588
        %2230 = vmatpush1.bf16.msra.mxu0 %v1587
        %2231 = vmatprep.subr.bf16.mxu0 %v1594
        %2232 = vmatpush1.bf16.msra.mxu0 %v1593
        %2233 = vmatprep.subr.bf16.mxu0 %v1600
        %2234 = vmatpush1.bf16.msra.mxu0 %v1599
        %2235 = vmatprep.subr.bf16.mxu0 %v1606
        %2236 = vmatpush1.bf16.msra.mxu0 %v1605
        %2237 = vmatprep.subr.bf16.mxu0 %v1612
        %2238 = vmatpush1.bf16.msra.mxu0 %v1611
        %2239 = vmatprep.subr.bf16.mxu0 %v1618
        %2240 = vmatpush1.bf16.msra.mxu0 %v1617
        %2241 = vmatprep.subr.bf16.mxu0 %v1624
        %2242 = vmatpush1.bf16.msra.mxu0 %v1623
        %2243 = vmatprep.subr.bf16.mxu0 %v1630
        %2244 = vmatpush1.bf16.msra.mxu0 %v1629
        %2245 = vmatprep.subr.bf16.mxu0 %v1636
        %2246 = vmatpush1.bf16.msra.mxu0 %v1635
        %2247 = vmatprep.subr.bf16.mxu0 %v1642
        %2248 = vmatpush1.bf16.msra.mxu0 %v1641
        %2249 = vmatprep.subr.bf16.mxu0 %v1648
        %2250 = vmatpush1.bf16.msra.mxu0 %v1647
        %2251 = vmatprep.subr.bf16.mxu0 %v1654
        %2252 = vmatpush1.bf16.msra.mxu0 %v1653
        %2253 = vmatprep.subr.bf16.mxu0 %v1660
        %2254 = vmatpush1.bf16.msra.mxu0 %v1659
        %2255 = vmatprep.subr.bf16.mxu0 %v1666
        %2256 = vmatpush1.bf16.msra.mxu0 %v1665
        %2257 = vmatprep.subr.bf16.mxu0 %v1672
        %2258 = vmatpush1.bf16.msra.mxu0 %v1671
        %2259 = vmatprep.subr.bf16.mxu0 %v1678
        %2260 = vmatpush1.bf16.msra.mxu0 %v1677
        %2261 = vmatprep.mubr.bf16.mxu0 %v590
        %2262 = vmatmul.mubr.bf16.gmra.mrb[0].mxu0 %v589
        %v2263 = vpop.f32.mrb[0].mxu0
        %v2264 = vadd.f32 %v2223, %v2263
        %v2265 = vpop.f32.mrb[0].mxu0
        %v2266 = vadd.f32 %v2225, %v2265
        %v2267 = vpop.f32.mrb[0].mxu0
        %v2268 = vpop.f32.mrb[0].mxu0
        %2269 = vdwg.mxu0
        %2270 = vmatprep.subr.bf16.mxu0 %v1684
        %2271 = vmatpush1.bf16.msra.mxu0 %v1683
        %2272 = vmatprep.subr.bf16.mxu0 %v1690
        %2273 = vmatpush1.bf16.msra.mxu0 %v1689
        %2274 = vmatprep.subr.bf16.mxu0 %v1696
        %2275 = vmatpush1.bf16.msra.mxu0 %v1695
        %2276 = vmatprep.subr.bf16.mxu0 %v1702
        %2277 = vmatpush1.bf16.msra.mxu0 %v1701
        %2278 = vmatprep.subr.bf16.mxu0 %v1708
        %2279 = vmatpush1.bf16.msra.mxu0 %v1707
        %2280 = vmatprep.subr.bf16.mxu0 %v1714
        %2281 = vmatpush1.bf16.msra.mxu0 %v1713
        %2282 = vmatprep.subr.bf16.mxu0 %v1720
        %2283 = vmatpush1.bf16.msra.mxu0 %v1719
        %2284 = vmatprep.subr.bf16.mxu0 %v1726
        %2285 = vmatpush1.bf16.msra.mxu0 %v1725
        %2286 = vmatprep.subr.bf16.mxu0 %v1732
        %2287 = vmatpush1.bf16.msra.mxu0 %v1731
        %2288 = vmatprep.subr.bf16.mxu0 %v1738
        %2289 = vmatpush1.bf16.msra.mxu0 %v1737
        %2290 = vmatprep.subr.bf16.mxu0 %v1744
        %2291 = vmatpush1.bf16.msra.mxu0 %v1743
        %2292 = vmatprep.subr.bf16.mxu0 %v1750
        %2293 = vmatpush1.bf16.msra.mxu0 %v1749
        %2294 = vmatprep.subr.bf16.mxu0 %v1756
        %2295 = vmatpush1.bf16.msra.mxu0 %v1755
        %2296 = vmatprep.subr.bf16.mxu0 %v1762
        %2297 = vmatpush1.bf16.msra.mxu0 %v1761
        %2298 = vmatprep.subr.bf16.mxu0 %v1768
        %2299 = vmatpush1.bf16.msra.mxu0 %v1767
        %2300 = vmatprep.subr.bf16.mxu0 %v1774
        %2301 = vmatpush1.bf16.msra.mxu0 %v1773
        %2302 = vmatprep.mubr.bf16.mxu0 %v592
        %2303 = vmatmul.mubr.bf16.gmra.mrb[0].mxu0 %v591
        %v2304 = vpop.f32.mrb[0].mxu0
        %v2305 = vadd.f32 %v2264, %v2304
        %v2306 = vpop.f32.mrb[0].mxu0
        %v2307 = vadd.f32 %v2266, %v2306
        %v2308 = vpop.f32.mrb[0].mxu0
        %v2309 = vpop.f32.mrb[0].mxu0
        %2310 = vdwg.mxu0
        %2311 = vmatprep.subr.bf16.mxu0 %v1494
        %2312 = vmatpush1.bf16.msra.mxu0 %v1493
        %2313 = vmatprep.subr.bf16.mxu0 %v1500
        %2314 = vmatpush1.bf16.msra.mxu0 %v1499
        %2315 = vmatprep.subr.bf16.mxu0 %v1506
        %2316 = vmatpush1.bf16.msra.mxu0 %v1505
        %2317 = vmatprep.subr.bf16.mxu0 %v1512
        %2318 = vmatpush1.bf16.msra.mxu0 %v1511
        %2319 = vmatprep.subr.bf16.mxu0 %v1518
        %2320 = vmatpush1.bf16.msra.mxu0 %v1517
        %2321 = vmatprep.subr.bf16.mxu0 %v1524
        %2322 = vmatpush1.bf16.msra.mxu0 %v1523
        %2323 = vmatprep.subr.bf16.mxu0 %v1530
        %2324 = vmatpush1.bf16.msra.mxu0 %v1529
        %2325 = vmatprep.subr.bf16.mxu0 %v1536
        %2326 = vmatpush1.bf16.msra.mxu0 %v1535
        %2327 = vmatprep.subr.bf16.mxu0 %v1542
        %2328 = vmatpush1.bf16.msra.mxu0 %v1541
        %2329 = vmatprep.subr.bf16.mxu0 %v1548
        %2330 = vmatpush1.bf16.msra.mxu0 %v1547
        %2331 = vmatprep.subr.bf16.mxu0 %v1554
        %2332 = vmatpush1.bf16.msra.mxu0 %v1553
        %2333 = vmatprep.subr.bf16.mxu0 %v1560
        %2334 = vmatpush1.bf16.msra.mxu0 %v1559
        %2335 = vmatprep.subr.bf16.mxu0 %v1566
        %2336 = vmatpush1.bf16.msra.mxu0 %v1565
        %2337 = vmatprep.subr.bf16.mxu0 %v1572
        %2338 = vmatpush1.bf16.msra.mxu0 %v1571
        %2339 = vmatprep.subr.bf16.mxu0 %v1578
        %2340 = vmatpush1.bf16.msra.mxu0 %v1577
        %2341 = vmatprep.subr.bf16.mxu0 %v1584
        %2342 = vmatpush1.bf16.msra.mxu0 %v1583
        %2343 = vmatprep.mubr.bf16.mxu0 %v588
        %2344 = vmatmul.mubr.bf16.gmra.mrb[0].mxu0 %v587
        %v2345 = vpop.f32.mrb[0].mxu0
        %v2346 = vadd.f32 %v614, %v2345
        %v2347 = vpop.f32.mrb[0].mxu0
        %v2348 = vadd.f32 %v618, %v2347
        %v2349 = vpop.f32.mrb[0].mxu0
        %v2350 = vpop.f32.mrb[0].mxu0
        %2351 = vdwg.mxu0
        %2352 = vmatprep.subr.bf16.mxu0 %v1590
        %2353 = vmatpush1.bf16.msra.mxu0 %v1589
        %2354 = vmatprep.subr.bf16.mxu0 %v1596
        %2355 = vmatpush1.bf16.msra.mxu0 %v1595
        %2356 = vmatprep.subr.bf16.mxu0 %v1602
        %2357 = vmatpush1.bf16.msra.mxu0 %v1601
        %2358 = vmatprep.subr.bf16.mxu0 %v1608
        %2359 = vmatpush1.bf16.msra.mxu0 %v1607
        %2360 = vmatprep.subr.bf16.mxu0 %v1614
        %2361 = vmatpush1.bf16.msra.mxu0 %v1613
        %2362 = vmatprep.subr.bf16.mxu0 %v1620
        %2363 = vmatpush1.bf16.msra.mxu0 %v1619
        %2364 = vmatprep.subr.bf16.mxu0 %v1626
        %2365 = vmatpush1.bf16.msra.mxu0 %v1625
        %2366 = vmatprep.subr.bf16.mxu0 %v1632
        %2367 = vmatpush1.bf16.msra.mxu0 %v1631
        %2368 = vmatprep.subr.bf16.mxu0 %v1638
        %2369 = vmatpush1.bf16.msra.mxu0 %v1637
        %2370 = vmatprep.subr.bf16.mxu0 %v1644
        %2371 = vmatpush1.bf16.msra.mxu0 %v1643
        %2372 = vmatprep.subr.bf16.mxu0 %v1650
        %2373 = vmatpush1.bf16.msra.mxu0 %v1649
        %2374 = vmatprep.subr.bf16.mxu0 %v1656
        %2375 = vmatpush1.bf16.msra.mxu0 %v1655
        %2376 = vmatprep.subr.bf16.mxu0 %v1662
        %2377 = vmatpush1.bf16.msra.mxu0 %v1661
        %2378 = vmatprep.subr.bf16.mxu0 %v1668
        %2379 = vmatpush1.bf16.msra.mxu0 %v1667
        %2380 = vmatprep.subr.bf16.mxu0 %v1674
        %2381 = vmatpush1.bf16.msra.mxu0 %v1673
        %2382 = vmatprep.subr.bf16.mxu0 %v1680
        %2383 = vmatpush1.bf16.msra.mxu0 %v1679
        %2384 = vmatprep.mubr.bf16.mxu0 %v590
        %2385 = vmatmul.mubr.bf16.gmra.mrb[0].mxu0 %v589
        %v2386 = vpop.f32.mrb[0].mxu0
        %v2387 = vadd.f32 %v2346, %v2386
        %v2388 = vpop.f32.mrb[0].mxu0
        %v2389 = vadd.f32 %v2348, %v2388
        %v2390 = vpop.f32.mrb[0].mxu0
        %v2391 = vpop.f32.mrb[0].mxu0
        %2392 = vdwg.mxu0
        %2393 = vmatprep.subr.bf16.mxu0 %v1686
        %2394 = vmatpush1.bf16.msra.mxu0 %v1685
        %2395 = vmatprep.subr.bf16.mxu0 %v1692
        %2396 = vmatpush1.bf16.msra.mxu0 %v1691
        %2397 = vmatprep.subr.bf16.mxu0 %v1698
        %2398 = vmatpush1.bf16.msra.mxu0 %v1697
        %2399 = vmatprep.subr.bf16.mxu0 %v1704
        %2400 = vmatpush1.bf16.msra.mxu0 %v1703
        %2401 = vmatprep.subr.bf16.mxu0 %v1710
        %2402 = vmatpush1.bf16.msra.mxu0 %v1709
        %2403 = vmatprep.subr.bf16.mxu0 %v1716
        %2404 = vmatpush1.bf16.msra.mxu0 %v1715
        %2405 = vmatprep.subr.bf16.mxu0 %v1722
        %2406 = vmatpush1.bf16.msra.mxu0 %v1721
        %2407 = vmatprep.subr.bf16.mxu0 %v1728
        %2408 = vmatpush1.bf16.msra.mxu0 %v1727
        %2409 = vmatprep.subr.bf16.mxu0 %v1734
        %2410 = vmatpush1.bf16.msra.mxu0 %v1733
        %2411 = vmatprep.subr.bf16.mxu0 %v1740
        %2412 = vmatpush1.bf16.msra.mxu0 %v1739
        %2413 = vmatprep.subr.bf16.mxu0 %v1746
        %2414 = vmatpush1.bf16.msra.mxu0 %v1745
        %2415 = vmatprep.subr.bf16.mxu0 %v1752
        %2416 = vmatpush1.bf16.msra.mxu0 %v1751
        %2417 = vmatprep.subr.bf16.mxu0 %v1758
        %2418 = vmatpush1.bf16.msra.mxu0 %v1757
        %2419 = vmatprep.subr.bf16.mxu0 %v1764
        %2420 = vmatpush1.bf16.msra.mxu0 %v1763
        %2421 = vmatprep.subr.bf16.mxu0 %v1770
        %2422 = vmatpush1.bf16.msra.mxu0 %v1769
        %2423 = vmatprep.subr.bf16.mxu0 %v1776
        %2424 = vmatpush1.bf16.msra.mxu0 %v1775
        %2425 = vmatprep.mubr.bf16.mxu0 %v592
        %2426 = vmatmul.mubr.bf16.gmra.mrb[0].mxu0 %v591
        %v2427 = vpop.f32.mrb[0].mxu0
        %v2428 = vadd.f32 %v2387, %v2427
        %v2429 = vpop.f32.mrb[0].mxu0
        %v2430 = vadd.f32 %v2389, %v2429
        %v2431 = vpop.f32.mrb[0].mxu0
        %v2432 = vpop.f32.mrb[0].mxu0
        %2433 = vdwg.mxu0
        %v2434 = vmul.f32 %v2182, 0.5
        %v2435 = vmul.f32 %v2184, 0.5
        %v2436 = vmul.f32 %v2305, 0.5
        %v2437 = vmul.f32 %v2307, 0.5
        %v2438 = vmul.f32 %v2428, 0.5
        %v2439 = vmul.f32 %v2430, 0.5
        %v2440 = vmul.f32 %v2182, 0.70710677
        %v2441 = vmul.f32 %v2184, 0.70710677
        %v2442 = vmul.f32 %v2305, 0.70710677
        %v2443 = vmul.f32 %v2307, 0.70710677
        %v2444 = vmul.f32 %v2428, 0.70710677
        %v2445 = vmul.f32 %v2430, 0.70710677
        %v2446 = verf.f32.pop %v2440
        %v2447 = verf.f32.pop %v2441
        %v2448 = verf.f32.pop %v2442
        %v2449 = verf.f32.pop %v2443
        %v2450 = verf.f32.pop %v2444
        %v2451 = verf.f32.pop %v2445
        %v2452 = vadd.f32 %v2446, 1.0
        %v2453 = vadd.f32 %v2447, 1.0
        %v2454 = vadd.f32 %v2448, 1.0
        %v2455 = vadd.f32 %v2449, 1.0
        %v2456 = vadd.f32 %v2450, 1.0
        %v2457 = vadd.f32 %v2451, 1.0
        %v2458 = vmul.f32 %v2434, %v2452
        %v2459 = vmul.f32 %v2435, %v2453
        %v2460 = vmul.f32 %v2436, %v2454
        %v2461 = vmul.f32 %v2437, %v2455
        %v2462 = vmul.f32 %v2438, %v2456
        %v2463 = vmul.f32 %v2439, %v2457
        %v2464 = vadd.f32 %v2458, %v2459
        %v2465 = vadd.f32 %v2464, %v2460
        %v2466 = vadd.f32 %v2465, %v2461
        %v2467 = vadd.f32 %v2466, %v2462
        %v2468 = vadd.f32 %v2467, %v2463
        %2469 = vadd.xlane.f32.xlu0 %v2468
        %v2470 = vpop.xlane.xlu0 %2469
        %v2471 = vrcp.pop 768.0
        %v2472 = vmul.f32 %v2470, %v2471
        %v2473 = vsub.f32 %v2458, %v2472
        %v2474 = vsub.f32 %v2459, %v2472
        %v2475 = vsub.f32 %v2460, %v2472
        %v2476 = vsub.f32 %v2461, %v2472
        %v2477 = vsub.f32 %v2462, %v2472
        %v2478 = vsub.f32 %v2463, %v2472
        %v2479 = vmul.f32 %v2473, %v2473
        %v2480 = vmul.f32 %v2474, %v2474
        %v2481 = vmul.f32 %v2475, %v2475
        %v2482 = vmul.f32 %v2476, %v2476
        %v2483 = vmul.f32 %v2477, %v2477
        %v2484 = vmul.f32 %v2478, %v2478
        %v2485 = vadd.f32 %v2479, %v2480
        %v2486 = vadd.f32 %v2485, %v2481
        %v2487 = vadd.f32 %v2486, %v2482
        %v2488 = vadd.f32 %v2487, %v2483
        %v2489 = vadd.f32 %v2488, %v2484
        %2490 = vadd.xlane.f32.xlu0 %v2489
        %v2491 = vpop.xlane.xlu0 %2490
        %v2492 = vmul.f32 %v2491, %v2471
        %v2493 = vadd.f32 %v2492, 1e-12
        %v2494 = vrsqrt.pop %v2493
        %v2495 = vmul.f32 %v2473, %v2494
        %v2496 = vmul.f32 %v2474, %v2494
        %v2497 = vmul.f32 %v2475, %v2494
        %v2498 = vmul.f32 %v2476, %v2494
        %v2499 = vmul.f32 %v2477, %v2494
        %v2500 = vmul.f32 %v2478, %v2494
        %v2501 = vld [vmem:[#allocation8] sm:$0x3f]
        %v2503 = vlaneseq
        %v2504 = vshrl.u32 %v2503, 7
        %v2505 = vsub.s32 0, %v2504
        %v2506 = vrot.slane %v2501, %v2505
        %v2507 = vlaneseq
        %v2508 = vshrl.u32 %v2507, 7
        %v2509 = vsub.s32 1, %v2508
        %v2510 = vrot.slane %v2501, %v2509
        %v2511 = vlaneseq
        %v2512 = vshrl.u32 %v2511, 7
        %v2513 = vsub.s32 2, %v2512
        %v2514 = vrot.slane %v2501, %v2513
        %v2515 = vlaneseq
        %v2516 = vshrl.u32 %v2515, 7
        %v2517 = vsub.s32 3, %v2516
        %v2518 = vrot.slane %v2501, %v2517
        %v2519 = vlaneseq
        %v2520 = vshrl.u32 %v2519, 7
        %v2521 = vsub.s32 4, %v2520
        %v2522 = vrot.slane %v2501, %v2521
        %v2523 = vlaneseq
        %v2524 = vshrl.u32 %v2523, 7
        %v2525 = vsub.s32 5, %v2524
        %v2526 = vrot.slane %v2501, %v2525
        %v2533 = vmul.f32 %v2495, %v2506
        %v2534 = vmul.f32 %v2496, %v2510
        %v2535 = vmul.f32 %v2497, %v2514
        %v2536 = vmul.f32 %v2498, %v2518
        %v2537 = vmul.f32 %v2499, %v2522
        %v2538 = vmul.f32 %v2500, %v2526
        %v2539 = vld [vmem:[#allocation10] sm:$0x3f]
        %v2541 = vlaneseq
        %v2542 = vshrl.u32 %v2541, 7
        %v2543 = vsub.s32 0, %v2542
        %v2544 = vrot.slane %v2539, %v2543
        %v2545 = vlaneseq
        %v2546 = vshrl.u32 %v2545, 7
        %v2547 = vsub.s32 1, %v2546
        %v2548 = vrot.slane %v2539, %v2547
        %v2549 = vlaneseq
        %v2550 = vshrl.u32 %v2549, 7
        %v2551 = vsub.s32 2, %v2550
        %v2552 = vrot.slane %v2539, %v2551
        %v2553 = vlaneseq
        %v2554 = vshrl.u32 %v2553, 7
        %v2555 = vsub.s32 3, %v2554
        %v2556 = vrot.slane %v2539, %v2555
        %v2557 = vlaneseq
        %v2558 = vshrl.u32 %v2557, 7
        %v2559 = vsub.s32 4, %v2558
        %v2560 = vrot.slane %v2539, %v2559
        %v2561 = vlaneseq
        %v2562 = vshrl.u32 %v2561, 7
        %v2563 = vsub.s32 5, %v2562
        %v2564 = vrot.slane %v2539, %v2563
        %v2571 = vadd.f32 %v2533, %v2544
        %v2572 = vadd.f32 %v2534, %v2548
        %v2573 = vadd.f32 %v2535, %v2552
        %v2574 = vadd.f32 %v2536, %v2556
        %v2575 = vadd.f32 %v2537, %v2560
        %v2576 = vadd.f32 %v2538, %v2564
        %2577 = vst [vmem:[%s292] sm:$0xff] %v2571
        %2578 = vst [vmem:[%s292 + $0x8] sm:$0xff] %v2572
        %2579 = vst [vmem:[%s292 + $0x10] sm:$0xff] %v2573
        %2580 = vst [vmem:[%s292 + $0x18] sm:$0xff] %v2574
        %2581 = vst [vmem:[%s292 + $0x20] sm:$0xff] %v2575
        %2582 = vst [vmem:[%s292 + $0x28] sm:$0xff] %v2576
        %s2583 = sand.u32 %s142, 1
        %s2584 = scalar_lea.sflag [#allocation4], %s2583
        %s2585 = sand.u32 %s142, 1
        %s2586 = smul.addr %s2585, 48
        %s2587 = scalar_lea.vmem [#allocation11], %s2586
        // Predicated region
        $region61: #{tpu_custom_call.1} parent=39 // pred_check
          %p2588 = pneg %p152
        $region62: #{tpu_custom_call.1} parent=39 // pred_check_branch
          %2590 = sbr.rel (%p2588) target = $region64
        $region63: #{tpu_custom_call.1} parent=39 // pred_region
          %s2592 = ssub.s32 768, 768
          %2593 = vsyncadd %s2584, %s2592
          %s2594 = smul.addr %s24, 6
          %s2595 = smul.addr %s2594, 128
          %s2596 = scalar_lea.hbm %s5, %s2595
          %s2598 = sshll.u32 %s2587, 4
          %s2599 = int_to_ptr.vmem [resolvable:$true] %s2598
          %2601 = dma.vmem_to_hbm [thread:$0]  %s2599, 768, %s2596, %s2584
        $region64: #{tpu_custom_call.1} parent=39 // pred_fallthru
          _
      $region40: #{tpu_custom_call.1} parent=5 // pred_fallthru
        _
      %p2602 = scmp.le.s32.totalorder 2, %s19
      // Predicated region
      $region65: #{tpu_custom_call.1} parent=5 // pred_check
        %p2603 = pneg %p2602
      $region66: #{tpu_custom_call.1} parent=5 // pred_check_branch
        %2605 = sbr.rel (%p2603) target = $region68
      $region67: #{tpu_custom_call.1} parent=5 // pred_region
        %s2606 = ssub.s32 %s19, 2
        // Predicated region
        $region69: #{tpu_custom_call.1} parent=67 // pred_check
          %p2607 = pneg %p158
        $region70: #{tpu_custom_call.1} parent=67 // pred_check_branch
          %2609 = sbr.rel (%p2607) target = $region72
        $region71: #{tpu_custom_call.1} parent=67 // pred_region
          %s2610 = sand.u32 %s143, 1
          %s2611 = scalar_lea.sflag [#allocation4], %s2610
          %s2612 = sand.u32 %s143, 1
          %s2613 = smul.addr %s2612, 48
          %s2614 = scalar_lea.vmem [#allocation11], %s2613
          %2615 = dma.done %s2611, 768
        $region72: #{tpu_custom_call.1} parent=67 // pred_fallthru
          _
      $region68: #{tpu_custom_call.1} parent=5 // pred_fallthru
        _
    $region6: #{tpu_custom_call.1} parent=1 // loop_footer
      %s23 = sadd.s32 1, %s19
    $region7: #{tpu_custom_call.1} parent=1 // loop_footer_branch
      %18 = sbr.rel target = $region3
    $region8: #{tpu_custom_call.1} parent=1 // loop_exit
      _
    %2616 = vsyncpa [#allocation3], 1
    %s2617 = scalar_lea.sflag [#allocation3], 1
    %2618 = vsyncpa %s2617, 1
    %2619 = vsyncpa [#allocation6], 1
    %2620 = vsyncpa [#allocation9], 1
    %2621 = vsyncpa [#allocation4], 1
    %s2622 = scalar_lea.sflag [#allocation4], 1
    %2623 = vsyncpa %s2622, 1

</llo_original>
